<compile_context>
chip_gen: v5e
topology: v5e:2x2
jax: 0.10.0
libtpu: 0.0.40
codegen_flags: <defaults>
</compile_context>

<pallas_src>
import functools
import math

import jax
import jax.numpy as jnp
from jax.experimental import pallas as pl
from jax.experimental.pallas import tpu as pltpu

EPS = 1e-8
_HIGHEST = jax.lax.Precision.HIGHEST


def _vmem_capacity_bytes():
    """Physical VMEM of the current chip; conservative (v7x) fallback."""
    try:
        return int(pltpu.get_tpu_info().vmem_capacity_bytes)
    except Exception:
        return 64 * 1024 * 1024


def _dain_full_kernel(x_ref, sel_ref, selt_ref, wm_t_ref, ws_t_ref, wg_t_ref,
                      bg_ref, o_ref, *, T):
    """One batch-tile of DAIN 'full' mode on the lane-dense flattened layout.

    x_ref    : (TB, T*F) input tile (f32 or bf16), feature index = lane % F
    sel_ref  : (T*F, F) f32 0/1 selector:  (x @ sel)[b, f]  = sum_t x[b, t, f]
    selt_ref : (F, T*F) f32 0/1 selector:  (v @ selt)[b, tF+f] = v[b, f]
    wm_t_ref : (F, F) f32  mean_layer.weight.T
    ws_t_ref : (F, F) f32  scaling_layer.weight.T
    wg_t_ref : (F, F) f32  gating_layer.weight.T
    bg_ref   : (1, F) f32  gating_layer.bias
    o_ref    : (TB, T*F) output tile (same dtype as x)
    """
    x = x_ref[...].astype(jnp.float32)            # (TB, TF) lane-dense
    sel = sel_ref[...]                            # (TF, F)
    selt = selt_ref[...]                          # (F, TF)

    dot = functools.partial(jnp.dot, precision=_HIGHEST,
                            preferred_element_type=jnp.float32)

    # ---- single stats pass over T (exact sums via 0/1 MXU matmuls) ----
    avg = dot(x, sel) * (1.0 / T)                 # (TB, F)  mean over T
    avg_full = dot(avg, selt)                     # (TB, TF) broadcast over T
    d = x - avg_full                              # centered (full tile)
    ssq = dot(d * d, sel)                         # (TB, F)  centered sum of squares
    # unbiased std (ddof=1); NaN for T == 1, matching torch.std
    inv_tm1 = (1.0 / (T - 1)) if T > 1 else float("nan")
    std = jnp.sqrt(ssq * inv_tm1)                 # std(x) == std(x - adaptive_avg)

    # ---- tiny (TB,F)@(F,F) stats matmuls (MXU, negligible cost) ----
    adaptive_avg = dot(avg, wm_t_ref[...])        # (TB, F)
    adaptive_std = dot(std, ws_t_ref[...])        # (TB, F)
    inv_scale = 1.0 / (adaptive_std + EPS)

    # mean over T of the normalized tensor, without re-reading the big tile:
    avg2 = (avg - adaptive_avg) * inv_scale
    gate = jax.nn.sigmoid(dot(avg2, wg_t_ref[...]) + bg_ref[...])   # (TB, F)

    # ---- single fused elementwise output pass ----
    #   out = (x - adaptive_avg) * scale
    #       = d * scale_bcast - ((adaptive_avg - avg) * scale)_bcast
    scale = gate * inv_scale                                         # (TB, F)
    scale_full = dot(scale, selt)                                    # (TB, TF)
    offs_full = dot((adaptive_avg - avg) * scale, selt)              # (TB, TF)
    o_ref[...] = (d * scale_full - offs_full).astype(o_ref.dtype)


def dain_full(x, w_mean, w_scale, w_gate, b_gate, *, block_b=None):
    """DAIN 'full' forward. x: (B, T, F); weights in PyTorch (out, in) convention."""
    B, T, F = x.shape
    TF = T * F
    out_dtype = x.dtype          # bf16 in -> bf16 out (halves HBM traffic); f32 stays f32

    # Flatten (T, F) onto the lane axis: free for a contiguous HBM array and makes
    # every HBM<->VMEM tile lane-dense even when F < 128 (e.g. F = 32 here).
    x2d = x.reshape(B, TF)

    # 0/1 selector matrices (exact under any matmul precision, ride the idle MXU):
    #   sel  (TF, F): sums the T copies of each feature
    #   selt (F, TF): broadcasts a per-feature vector back across T
    # NOTE: for models with F already a multiple of 128 the natural (B, T, F)
    # layout is lane-dense and these selectors would be unnecessary.
    f_idx = jnp.arange(TF, dtype=jnp.int32) % F
    sel = (f_idx[:, None] == jnp.arange(F, dtype=jnp.int32)[None, :]).astype(jnp.float32)
    selt = sel.T

    wm_t = w_mean.T.astype(jnp.float32)
    ws_t = w_scale.T.astype(jnp.float32)
    wg_t = w_gate.T.astype(jnp.float32)
    bg = b_gate.reshape(1, F).astype(jnp.float32)

    # ---- generation-aware tile sizing ----
    vmem_cap = _vmem_capacity_bytes()
    if vmem_cap >= 100 * 1024 * 1024:      # v5e / v6e: 128 MiB physical VMEM
        tile_target = 8 * 1024 * 1024
    else:                                   # v7x: 64 MiB physical VMEM
        tile_target = 4 * 1024 * 1024

    row_bytes_in = TF * x2d.dtype.itemsize
    if block_b is None:
        if B <= 8:
            # Tiny batch (demo): one full-extent block.  Keeps the (8,128)
            # block-shape tiling rule; pipelining is irrelevant at this size.
            block_b = B
        else:
            rows_budget = max(1, tile_target // max(1, row_bytes_in))
            steps_cap = -(-B // 8)          # aim for >= ~8 grid steps
            block_b = max(8, (min(rows_budget, steps_cap) // 8) * 8)
            block_b = min(block_b, B)
    grid = (pl.cdiv(B, block_b),)

    # Per-step VMEM footprint: double-buffered in + out tiles, ~4 full-tile f32
    # temporaries (centered, squared, two broadcasts), selectors and weights.
    tile_f32 = block_b * TF * 4
    footprint = (2 * block_b * row_bytes_in
                 + 2 * block_b * TF * jnp.dtype(out_dtype).itemsize
                 + 4 * tile_f32
                 + 2 * TF * F * 4 + 4 * F * F * 4)
    vmem_limit = int(min(vmem_cap * 3 // 4,
                         max(32 * 1024 * 1024, footprint + (8 << 20))))

    # Advisory cost: this call is HBM-bandwidth-bound.
    cost = pl.CostEstimate(
        flops=int(4 * B * TF + 10 * B * TF * F + 6 * B * F * F),
        transcendentals=int(2 * B * F),
        bytes_accessed=int(x2d.size * x2d.dtype.itemsize
                           + B * TF * jnp.dtype(out_dtype).itemsize
                           + (2 * TF * F + 3 * F * F + F) * 4),
    )

    const_spec = lambda shape: pl.BlockSpec(shape, lambda b: (0,) * len(shape))

    out2d = pl.pallas_call(
        functools.partial(_dain_full_kernel, T=T),
        out_shape=jax.ShapeDtypeStruct((B, TF), out_dtype),
        grid=grid,
        in_specs=[
            pl.BlockSpec((block_b, TF), lambda b: (b, 0)),   # x tile (lane-dense)
            const_spec((TF, F)),                             # sel   (VMEM-resident)
            const_spec((F, TF)),                             # selt
            const_spec((F, F)),                              # mean_layer.W^T
            const_spec((F, F)),                              # scaling_layer.W^T
            const_spec((F, F)),                              # gating_layer.W^T
            const_spec((1, F)),                              # gating_layer.bias
        ],
        out_specs=pl.BlockSpec((block_b, TF), lambda b: (b, 0)),
        compiler_params=pltpu.CompilerParams(
            dimension_semantics=("parallel",),               # shard batch tiles across TCs
            vmem_limit_bytes=vmem_limit,
        ),
        cost_estimate=cost,
    )(x2d, sel, selt, wm_t, ws_t, wg_t, bg)

    return out2d.reshape(B, T, F)


def dain_full_ref(x, w_mean, w_scale, w_gate, b_gate):
    """Pure-JAX reference mirroring the PyTorch module ('full' mode)."""
    dot = functools.partial(jnp.dot, precision=_HIGHEST)
    x = x.astype(jnp.float32)
    avg = jnp.mean(x, axis=1)
    x = x - dot(avg, w_mean.T)[:, None, :]
    std = jnp.std(x, axis=1, ddof=1)
    x = x / (dot(std, w_scale.T)[:, None, :] + EPS)
    avg2 = jnp.mean(x, axis=1)
    gate = jax.nn.sigmoid(dot(avg2, w_gate.T) + b_gate)
    return x * gate[:, None, :]


if __name__ == "__main__":
    B, T, F = 2, 8, 32
    key = jax.random.PRNGKey(0)
    kx, kw, kb = jax.random.split(key, 3)

    x = jax.random.normal(kx, (B, T, F), dtype=jnp.float32) * 2.0 + 0.5

    # mean_layer / scaling_layer: identity weights (as in the module's __init__)
    w_mean = jnp.eye(F, dtype=jnp.float32)
    w_scale = jnp.eye(F, dtype=jnp.float32)
    # gating_layer: deterministic "random" init (PyTorch-style uniform bound)
    bound = 1.0 / math.sqrt(F)
    w_gate = jax.random.uniform(kw, (F, F), jnp.float32, -bound, bound)
    b_gate = jax.random.uniform(kb, (F,), jnp.float32, -bound, bound)

    run = jax.jit(dain_full)
    out = jax.block_until_ready(run(x, w_mean, w_scale, w_gate, b_gate))

    ref = dain_full_ref(x, w_mean, w_scale, w_gate, b_gate)
    assert out.shape == (B, T, F) and out.dtype == x.dtype
    assert jnp.allclose(out, ref, atol=1e-5, rtol=1e-5), "mismatch vs reference"

    print("KERNEL_OK")
</pallas_src>

<mosaic_0001>
module attributes {stable_mosaic.version = 11 : i64} {
  func.func @_dain_full_kernel(%arg0: i32, %arg1: memref<2x256xf32, #tpu.memory_space<vmem>>, %arg2: memref<256x32xf32, #tpu.memory_space<vmem>>, %arg3: memref<32x256xf32, #tpu.memory_space<vmem>>, %arg4: memref<32x32xf32, #tpu.memory_space<vmem>>, %arg5: memref<32x32xf32, #tpu.memory_space<vmem>>, %arg6: memref<32x32xf32, #tpu.memory_space<vmem>>, %arg7: memref<1x32xf32, #tpu.memory_space<vmem>>, %arg8: memref<2x256xf32, #tpu.memory_space<vmem>>) attributes {dimension_semantics = [#tpu.dimension_semantics<parallel>], iteration_bounds = array<i64: 1>, scalar_prefetch = 0 : i64, scratch_operands = 0 : i64, tpu.core_type = #tpu.core_type<tc>, window_params = [{transform_indices = @transform_0, window_bounds = array<i64: 2, 256>}, {pipeline_mode = #tpu.pipeline_mode<synchronous>, transform_indices = @transform_1, window_bounds = array<i64: 256, 32>}, {pipeline_mode = #tpu.pipeline_mode<synchronous>, transform_indices = @transform_2, window_bounds = array<i64: 32, 256>}, {pipeline_mode = #tpu.pipeline_mode<synchronous>, transform_indices = @transform_3, window_bounds = array<i64: 32, 32>}, {pipeline_mode = #tpu.pipeline_mode<synchronous>, transform_indices = @transform_4, window_bounds = array<i64: 32, 32>}, {pipeline_mode = #tpu.pipeline_mode<synchronous>, transform_indices = @transform_5, window_bounds = array<i64: 32, 32>}, {pipeline_mode = #tpu.pipeline_mode<synchronous>, transform_indices = @transform_6, window_bounds = array<i64: 1, 32>}, {transform_indices = @transform_7, window_bounds = array<i64: 2, 256>}]} {
    %c0 = arith.constant 0 : index
    %c0_0 = arith.constant 0 : index
    %0 = vector.load %arg1[%c0, %c0_0] : memref<2x256xf32, #tpu.memory_space<vmem>>, vector<2x256xf32>
    %c0_1 = arith.constant 0 : index
    %c0_2 = arith.constant 0 : index
    %1 = vector.load %arg2[%c0_1, %c0_2] : memref<256x32xf32, #tpu.memory_space<vmem>>, vector<256x32xf32>
    %c0_3 = arith.constant 0 : index
    %c0_4 = arith.constant 0 : index
    %2 = vector.load %arg3[%c0_3, %c0_4] : memref<32x256xf32, #tpu.memory_space<vmem>>, vector<32x256xf32>
    %cst = arith.constant dense<0.000000e+00> : vector<2x32xf32>
    %3 = tpu.matmul %0, %1, %cst {dimension_numbers = #tpu.dot_dimension_numbers<[1], [0], [0], [1], [0, 0, 1, 1], [], []>, precision = #tpu.contract_precision<fp32>} : vector<2x256xf32>, vector<256x32xf32>, vector<2x32xf32> -> vector<2x32xf32>
    %cst_5 = arith.constant 1.250000e-01 : f32
    %4 = vector.broadcast %cst_5 : f32 to vector<2x32xf32>
    %5 = arith.mulf %3, %4 : vector<2x32xf32>
    %cst_6 = arith.constant dense<0.000000e+00> : vector<2x256xf32>
    %6 = tpu.matmul %5, %2, %cst_6 {dimension_numbers = #tpu.dot_dimension_numbers<[1], [0], [0], [1], [0, 0, 1, 1], [], []>, precision = #tpu.contract_precision<fp32>} : vector<2x32xf32>, vector<32x256xf32>, vector<2x256xf32> -> vector<2x256xf32>
    %7 = arith.subf %0, %6 : vector<2x256xf32>
    %8 = arith.mulf %7, %7 : vector<2x256xf32>
    %cst_7 = arith.constant dense<0.000000e+00> : vector<2x32xf32>
    %9 = tpu.matmul %8, %1, %cst_7 {dimension_numbers = #tpu.dot_dimension_numbers<[1], [0], [0], [1], [0, 0, 1, 1], [], []>, precision = #tpu.contract_precision<fp32>} : vector<2x256xf32>, vector<256x32xf32>, vector<2x32xf32> -> vector<2x32xf32>
    %cst_8 = arith.constant 0.142857149 : f32
    %10 = vector.broadcast %cst_8 : f32 to vector<2x32xf32>
    %11 = arith.mulf %9, %10 : vector<2x32xf32>
    %12 = math.sqrt %11 : vector<2x32xf32>
    %c0_9 = arith.constant 0 : index
    %c0_10 = arith.constant 0 : index
    %13 = vector.load %arg4[%c0_9, %c0_10] : memref<32x32xf32, #tpu.memory_space<vmem>>, vector<32x32xf32>
    %cst_11 = arith.constant dense<0.000000e+00> : vector<2x32xf32>
    %14 = tpu.matmul %5, %13, %cst_11 {dimension_numbers = #tpu.dot_dimension_numbers<[1], [0], [0], [1], [0, 0, 1, 1], [], []>, precision = #tpu.contract_precision<fp32>} : vector<2x32xf32>, vector<32x32xf32>, vector<2x32xf32> -> vector<2x32xf32>
    %c0_12 = arith.constant 0 : index
    %c0_13 = arith.constant 0 : index
    %15 = vector.load %arg5[%c0_12, %c0_13] : memref<32x32xf32, #tpu.memory_space<vmem>>, vector<32x32xf32>
    %cst_14 = arith.constant dense<0.000000e+00> : vector<2x32xf32>
    %16 = tpu.matmul %12, %15, %cst_14 {dimension_numbers = #tpu.dot_dimension_numbers<[1], [0], [0], [1], [0, 0, 1, 1], [], []>, precision = #tpu.contract_precision<fp32>} : vector<2x32xf32>, vector<32x32xf32>, vector<2x32xf32> -> vector<2x32xf32>
    %cst_15 = arith.constant 9.99999993E-9 : f32
    %17 = vector.broadcast %cst_15 : f32 to vector<2x32xf32>
    %18 = arith.addf %16, %17 : vector<2x32xf32>
    %cst_16 = arith.constant 1.000000e+00 : f32
    %19 = vector.broadcast %cst_16 : f32 to vector<2x32xf32>
    %20 = arith.divf %19, %18 : vector<2x32xf32>
    %21 = arith.subf %5, %14 : vector<2x32xf32>
    %22 = arith.mulf %21, %20 : vector<2x32xf32>
    %c0_17 = arith.constant 0 : index
    %c0_18 = arith.constant 0 : index
    %23 = vector.load %arg6[%c0_17, %c0_18] : memref<32x32xf32, #tpu.memory_space<vmem>>, vector<32x32xf32>
    %cst_19 = arith.constant dense<0.000000e+00> : vector<2x32xf32>
    %24 = tpu.matmul %22, %23, %cst_19 {dimension_numbers = #tpu.dot_dimension_numbers<[1], [0], [0], [1], [0, 0, 1, 1], [], []>, precision = #tpu.contract_precision<fp32>} : vector<2x32xf32>, vector<32x32xf32>, vector<2x32xf32> -> vector<2x32xf32>
    %c0_20 = arith.constant 0 : index
    %c0_21 = arith.constant 0 : index
    %25 = vector.load %arg7[%c0_20, %c0_21] : memref<1x32xf32, #tpu.memory_space<vmem>>, vector<1x32xf32>
    %26 = vector.broadcast %25 : vector<1x32xf32> to vector<2x32xf32>
    %27 = arith.addf %24, %26 : vector<2x32xf32>
    %28 = arith.negf %27 : vector<2x32xf32>
    %29 = math.exp %28 : vector<2x32xf32>
    %cst_22 = arith.constant 1.000000e+00 : f32
    %30 = vector.broadcast %cst_22 : f32 to vector<2x32xf32>
    %31 = arith.addf %30, %29 : vector<2x32xf32>
    %32 = arith.divf %30, %31 : vector<2x32xf32>
    %33 = arith.mulf %32, %20 : vector<2x32xf32>
    %cst_23 = arith.constant dense<0.000000e+00> : vector<2x256xf32>
    %34 = tpu.matmul %33, %2, %cst_23 {dimension_numbers = #tpu.dot_dimension_numbers<[1], [0], [0], [1], [0, 0, 1, 1], [], []>, precision = #tpu.contract_precision<fp32>} : vector<2x32xf32>, vector<32x256xf32>, vector<2x256xf32> -> vector<2x256xf32>
    %35 = arith.subf %14, %5 : vector<2x32xf32>
    %36 = arith.mulf %35, %33 : vector<2x32xf32>
    %cst_24 = arith.constant dense<0.000000e+00> : vector<2x256xf32>
    %37 = tpu.matmul %36, %2, %cst_24 {dimension_numbers = #tpu.dot_dimension_numbers<[1], [0], [0], [1], [0, 0, 1, 1], [], []>, precision = #tpu.contract_precision<fp32>} : vector<2x32xf32>, vector<32x256xf32>, vector<2x256xf32> -> vector<2x256xf32>
    %38 = arith.mulf %7, %34 : vector<2x256xf32>
    %39 = arith.subf %38, %37 : vector<2x256xf32>
    %c0_25 = arith.constant 0 : index
    %c0_26 = arith.constant 0 : index
    %40 = vector.load %arg8[%c0_25, %c0_26] : memref<2x256xf32, #tpu.memory_space<vmem>>, vector<2x256xf32>
    tpu.vector_store %arg8[%c0_25, %c0_26], %39 {strides = array<i32>} : memref<2x256xf32, #tpu.memory_space<vmem>>, vector<2x256xf32>,
    return
  }
  func.func @transform_0(%arg0: i32) -> (i32, i32) {
    %c0_i32 = arith.constant 0 : i32
    %c0_i32_0 = arith.constant 0 : i32
    return %arg0, %c0_i32 : i32, i32
  }
  func.func @transform_1(%arg0: i32) -> (i32, i32) {
    %c0_i32 = arith.constant 0 : i32
    %c0_i32_0 = arith.constant 0 : i32
    %c0_i32_1 = arith.constant 0 : i32
    return %c0_i32, %c0_i32_0 : i32, i32
  }
  func.func @transform_2(%arg0: i32) -> (i32, i32) {
    %c0_i32 = arith.constant 0 : i32
    %c0_i32_0 = arith.constant 0 : i32
    %c0_i32_1 = arith.constant 0 : i32
    return %c0_i32, %c0_i32_0 : i32, i32
  }
  func.func @transform_3(%arg0: i32) -> (i32, i32) {
    %c0_i32 = arith.constant 0 : i32
    %c0_i32_0 = arith.constant 0 : i32
    %c0_i32_1 = arith.constant 0 : i32
    return %c0_i32, %c0_i32_0 : i32, i32
  }
  func.func @transform_4(%arg0: i32) -> (i32, i32) {
    %c0_i32 = arith.constant 0 : i32
    %c0_i32_0 = arith.constant 0 : i32
    %c0_i32_1 = arith.constant 0 : i32
    return %c0_i32, %c0_i32_0 : i32, i32
  }
  func.func @transform_5(%arg0: i32) -> (i32, i32) {
    %c0_i32 = arith.constant 0 : i32
    %c0_i32_0 = arith.constant 0 : i32
    %c0_i32_1 = arith.constant 0 : i32
    return %c0_i32, %c0_i32_0 : i32, i32
  }
  func.func @transform_6(%arg0: i32) -> (i32, i32) {
    %c0_i32 = arith.constant 0 : i32
    %c0_i32_0 = arith.constant 0 : i32
    %c0_i32_1 = arith.constant 0 : i32
    return %c0_i32, %c0_i32_0 : i32, i32
  }
  func.func @transform_7(%arg0: i32) -> (i32, i32) {
    %c0_i32 = arith.constant 0 : i32
    %c0_i32_0 = arith.constant 0 : i32
    return %arg0, %c0_i32 : i32, i32
  }
}

</mosaic_0001>

<llo_original>
// kernel: dain_full.1
$region0: #{dain_full.1}
  #allocation0 [shape = 'u32[]', space=smem, size = 0x4, offset = 0x4, fixed_abs, tag = 'smem constant byte address 0x4 - core index']
  #allocation1 [shape = 'u32[72,128]{1,0:T(1,128)}', space=vmem, size = 0x9000, scoped, tag = 'internal scratch']
  %s0 = inlined_call_operand.vmem [shape: f32[2,256], index: 0, kind: input, shape index: {}]
  %s1 = inlined_call_operand.vmem [shape: f32[256,32], index: 1, kind: input, shape index: {}]
  %s2 = inlined_call_operand.vmem [shape: f32[32,256], index: 2, kind: input, shape index: {}]
  %s3 = inlined_call_operand.vmem [shape: f32[32,32], index: 3, kind: input, shape index: {}]
  %s4 = inlined_call_operand.vmem [shape: f32[32,32], index: 4, kind: input, shape index: {}]
  %s5 = inlined_call_operand.vmem [shape: f32[32,32], index: 5, kind: input, shape index: {}]
  %s6 = inlined_call_operand.vmem [shape: f32[1,32], index: 6, kind: input, shape index: {}]
  %s7 = inlined_call_operand.vmem [shape: f32[2,256], index: 7, kind: output, shape index: {}]
  %s8 = sld [smem:[#allocation0]]
  $region38: #{dain_full.1} parent=0
    _
  %s10 = ssub.s32 1, %s8
  %s11 = scalar_select 0, %s10, %s8
  // Predicated region
  $region2: #{dain_full.1} parent=0 // pred_check
    _
  $region3: #{dain_full.1} parent=0 // pred_check_branch
    %13 = sbr.rel (0) target = $region5
  $region4: #{dain_full.1} parent=0 // pred_region
    _
  $region5: #{dain_full.1} parent=0 // pred_fallthru
    _
  // Predicated region
  $region6: #{dain_full.1} parent=0 // pred_check
    _
  $region7: #{dain_full.1} parent=0 // pred_check_branch
    %15 = sbr.rel (0) target = $region9
  $region8: #{dain_full.1} parent=0 // pred_region
    _
  $region9: #{dain_full.1} parent=0 // pred_fallthru
    _
  // Predicated region
  $region10: #{dain_full.1} parent=0 // pred_check
    _
  $region11: #{dain_full.1} parent=0 // pred_check_branch
    %17 = sbr.rel (0) target = $region13
  $region12: #{dain_full.1} parent=0 // pred_region
    _
  $region13: #{dain_full.1} parent=0 // pred_fallthru
    _
  // Predicated region
  $region14: #{dain_full.1} parent=0 // pred_check
    _
  $region15: #{dain_full.1} parent=0 // pred_check_branch
    %19 = sbr.rel (0) target = $region17
  $region16: #{dain_full.1} parent=0 // pred_region
    _
  $region17: #{dain_full.1} parent=0 // pred_fallthru
    _
  // Predicated region
  $region18: #{dain_full.1} parent=0 // pred_check
    _
  $region19: #{dain_full.1} parent=0 // pred_check_branch
    %21 = sbr.rel (0) target = $region21
  $region20: #{dain_full.1} parent=0 // pred_region
    _
  $region21: #{dain_full.1} parent=0 // pred_fallthru
    _
  // Predicated region
  $region22: #{dain_full.1} parent=0 // pred_check
    _
  $region23: #{dain_full.1} parent=0 // pred_check_branch
    %23 = sbr.rel (0) target = $region25
  $region24: #{dain_full.1} parent=0 // pred_region
    _
  $region25: #{dain_full.1} parent=0 // pred_fallthru
    _
  // Predicated region
  $region26: #{dain_full.1} parent=0 // pred_check
    _
  $region27: #{dain_full.1} parent=0 // pred_check_branch
    %25 = sbr.rel (0) target = $region29
  $region28: #{dain_full.1} parent=0 // pred_region
    _
  $region29: #{dain_full.1} parent=0 // pred_fallthru
    _
  %v26 = vld [vmem:[%s0] sm:$0xf]
  %v27 = vld [vmem:[%s1] sm:$0xff]
  %v28 = vld [vmem:[%s1 + $0x8] sm:$0xff]
  %v29 = vld [vmem:[%s1 + $0x10] sm:$0xff]
  %v30 = vld [vmem:[%s1 + $0x18] sm:$0xff]
  %v31 = vld [vmem:[%s1 + $0x20] sm:$0xff]
  %v32 = vld [vmem:[%s1 + $0x28] sm:$0xff]
  %v33 = vld [vmem:[%s1 + $0x30] sm:$0xff]
  %v34 = vld [vmem:[%s1 + $0x38] sm:$0xff]
  %v35 = vld [vmem:[%s1 + $0x40] sm:$0xff]
  %v36 = vld [vmem:[%s1 + $0x48] sm:$0xff]
  %v37 = vld [vmem:[%s1 + $0x50] sm:$0xff]
  %v38 = vld [vmem:[%s1 + $0x58] sm:$0xff]
  %v39 = vld [vmem:[%s1 + $0x60] sm:$0xff]
  %v40 = vld [vmem:[%s1 + $0x68] sm:$0xff]
  %v41 = vld [vmem:[%s1 + $0x70] sm:$0xff]
  %v42 = vld [vmem:[%s1 + $0x78] sm:$0xff]
  %v43 = vld [vmem:[%s1 + $0x80] sm:$0xff]
  %v44 = vld [vmem:[%s1 + $0x88] sm:$0xff]
  %v45 = vld [vmem:[%s1 + $0x90] sm:$0xff]
  %v46 = vld [vmem:[%s1 + $0x98] sm:$0xff]
  %v47 = vld [vmem:[%s1 + $0xa0] sm:$0xff]
  %v48 = vld [vmem:[%s1 + $0xa8] sm:$0xff]
  %v49 = vld [vmem:[%s1 + $0xb0] sm:$0xff]
  %v50 = vld [vmem:[%s1 + $0xb8] sm:$0xff]
  %v51 = vld [vmem:[%s1 + $0xc0] sm:$0xff]
  %v52 = vld [vmem:[%s1 + $0xc8] sm:$0xff]
  %v53 = vld [vmem:[%s1 + $0xd0] sm:$0xff]
  %v54 = vld [vmem:[%s1 + $0xd8] sm:$0xff]
  %v55 = vld [vmem:[%s1 + $0xe0] sm:$0xff]
  %v56 = vld [vmem:[%s1 + $0xe8] sm:$0xff]
  %v57 = vld [vmem:[%s1 + $0xf0] sm:$0xff]
  %v58 = vld [vmem:[%s1 + $0xf8] sm:$0xff]
  %v59 = vld [vmem:[%s2] sm:$0xff]
  %v60 = vld [vmem:[%s2 + $0x8] sm:$0xff]
  %v61 = vld [vmem:[%s2 + $0x10] sm:$0xff]
  %v62 = vld [vmem:[%s2 + $0x18] sm:$0xff]
  %v63 = vld [vmem:[%s2 + $0x20] sm:$0xff]
  %v64 = vld [vmem:[%s2 + $0x28] sm:$0xff]
  %v65 = vld [vmem:[%s2 + $0x30] sm:$0xff]
  %v66 = vld [vmem:[%s2 + $0x38] sm:$0xff]
  %68 = vst [vmem:[#allocation1] ss:$4 sm:$0xff] %v26
  %v69 = vld.sshfl [vmem:[#allocation1] sm:$0xff pattern:$0x73625140]
  %v70 = vld.sshfl [vmem:[#allocation1 + $0x8] sm:$0xff pattern:$0x73625140]
  %v73 = vand.u32 %v42, 4294901760
  %74 = vmatpush.msra.mxu0 %v73
  %v75 = vand.u32 %v41, 4294901760
  %76 = vmatpush.msra.mxu0 %v75
  %v77 = vand.u32 %v40, 4294901760
  %78 = vmatpush.msra.mxu0 %v77
  %v79 = vand.u32 %v39, 4294901760
  %80 = vmatpush.msra.mxu0 %v79
  %v81 = vand.u32 %v38, 4294901760
  %82 = vmatpush.msra.mxu0 %v81
  %v83 = vand.u32 %v37, 4294901760
  %84 = vmatpush.msra.mxu0 %v83
  %v85 = vand.u32 %v36, 4294901760
  %86 = vmatpush.msra.mxu0 %v85
  %v87 = vand.u32 %v35, 4294901760
  %88 = vmatpush.msra.mxu0 %v87
  %v89 = vand.u32 %v34, 4294901760
  %90 = vmatpush.msra.mxu0 %v89
  %v91 = vand.u32 %v33, 4294901760
  %92 = vmatpush.msra.mxu0 %v91
  %v93 = vand.u32 %v32, 4294901760
  %94 = vmatpush.msra.mxu0 %v93
  %v95 = vand.u32 %v31, 4294901760
  %96 = vmatpush.msra.mxu0 %v95
  %v97 = vand.u32 %v30, 4294901760
  %98 = vmatpush.msra.mxu0 %v97
  %v99 = vand.u32 %v29, 4294901760
  %100 = vmatpush.msra.mxu0 %v99
  %v101 = vand.u32 %v28, 4294901760
  %102 = vmatpush.msra.mxu0 %v101
  %v103 = vand.u32 %v27, 4294901760
  %104 = vmatpush.msra.mxu0 %v103
  %v105 = vand.u32 %v69, 4294901760
  %v106 = vsub.f32 %v69, %v105
  %v107 = vand.u32 %v106, 4294901760
  %v108 = vsub.f32 %v106, %v107
  %v109 = vand.u32 %v108, 4294901760
  %110 = vmatmul.f32.gmra.mxu0 %v109
  %v111 = vpop.f32.mrf.mxu0
  %v112 = vadd.f32 0.0, %v111
  %113 = vdwg.mxu0
  %v114 = vand.u32 %v42, 4294901760
  %v115 = vsub.f32 %v42, %v114
  %v116 = vand.u32 %v115, 4294901760
  %v117 = vsub.f32 %v115, %v116
  %v118 = vand.u32 %v117, 4294901760
  %119 = vmatpush.msra.mxu0 %v118
  %v120 = vand.u32 %v41, 4294901760
  %v121 = vsub.f32 %v41, %v120
  %v122 = vand.u32 %v121, 4294901760
  %v123 = vsub.f32 %v121, %v122
  %v124 = vand.u32 %v123, 4294901760
  %125 = vmatpush.msra.mxu0 %v124
  %v126 = vand.u32 %v40, 4294901760
  %v127 = vsub.f32 %v40, %v126
  %v128 = vand.u32 %v127, 4294901760
  %v129 = vsub.f32 %v127, %v128
  %v130 = vand.u32 %v129, 4294901760
  %131 = vmatpush.msra.mxu0 %v130
  %v132 = vand.u32 %v39, 4294901760
  %v133 = vsub.f32 %v39, %v132
  %v134 = vand.u32 %v133, 4294901760
  %v135 = vsub.f32 %v133, %v134
  %v136 = vand.u32 %v135, 4294901760
  %137 = vmatpush.msra.mxu0 %v136
  %v138 = vand.u32 %v38, 4294901760
  %v139 = vsub.f32 %v38, %v138
  %v140 = vand.u32 %v139, 4294901760
  %v141 = vsub.f32 %v139, %v140
  %v142 = vand.u32 %v141, 4294901760
  %143 = vmatpush.msra.mxu0 %v142
  %v144 = vand.u32 %v37, 4294901760
  %v145 = vsub.f32 %v37, %v144
  %v146 = vand.u32 %v145, 4294901760
  %v147 = vsub.f32 %v145, %v146
  %v148 = vand.u32 %v147, 4294901760
  %149 = vmatpush.msra.mxu0 %v148
  %v150 = vand.u32 %v36, 4294901760
  %v151 = vsub.f32 %v36, %v150
  %v152 = vand.u32 %v151, 4294901760
  %v153 = vsub.f32 %v151, %v152
  %v154 = vand.u32 %v153, 4294901760
  %155 = vmatpush.msra.mxu0 %v154
  %v156 = vand.u32 %v35, 4294901760
  %v157 = vsub.f32 %v35, %v156
  %v158 = vand.u32 %v157, 4294901760
  %v159 = vsub.f32 %v157, %v158
  %v160 = vand.u32 %v159, 4294901760
  %161 = vmatpush.msra.mxu0 %v160
  %v162 = vand.u32 %v34, 4294901760
  %v163 = vsub.f32 %v34, %v162
  %v164 = vand.u32 %v163, 4294901760
  %v165 = vsub.f32 %v163, %v164
  %v166 = vand.u32 %v165, 4294901760
  %167 = vmatpush.msra.mxu0 %v166
  %v168 = vand.u32 %v33, 4294901760
  %v169 = vsub.f32 %v33, %v168
  %v170 = vand.u32 %v169, 4294901760
  %v171 = vsub.f32 %v169, %v170
  %v172 = vand.u32 %v171, 4294901760
  %173 = vmatpush.msra.mxu0 %v172
  %v174 = vand.u32 %v32, 4294901760
  %v175 = vsub.f32 %v32, %v174
  %v176 = vand.u32 %v175, 4294901760
  %v177 = vsub.f32 %v175, %v176
  %v178 = vand.u32 %v177, 4294901760
  %179 = vmatpush.msra.mxu0 %v178
  %v180 = vand.u32 %v31, 4294901760
  %v181 = vsub.f32 %v31, %v180
  %v182 = vand.u32 %v181, 4294901760
  %v183 = vsub.f32 %v181, %v182
  %v184 = vand.u32 %v183, 4294901760
  %185 = vmatpush.msra.mxu0 %v184
  %v186 = vand.u32 %v30, 4294901760
  %v187 = vsub.f32 %v30, %v186
  %v188 = vand.u32 %v187, 4294901760
  %v189 = vsub.f32 %v187, %v188
  %v190 = vand.u32 %v189, 4294901760
  %191 = vmatpush.msra.mxu0 %v190
  %v192 = vand.u32 %v29, 4294901760
  %v193 = vsub.f32 %v29, %v192
  %v194 = vand.u32 %v193, 4294901760
  %v195 = vsub.f32 %v193, %v194
  %v196 = vand.u32 %v195, 4294901760
  %197 = vmatpush.msra.mxu0 %v196
  %v198 = vand.u32 %v28, 4294901760
  %v199 = vsub.f32 %v28, %v198
  %v200 = vand.u32 %v199, 4294901760
  %v201 = vsub.f32 %v199, %v200
  %v202 = vand.u32 %v201, 4294901760
  %203 = vmatpush.msra.mxu0 %v202
  %v204 = vand.u32 %v27, 4294901760
  %v205 = vsub.f32 %v27, %v204
  %v206 = vand.u32 %v205, 4294901760
  %v207 = vsub.f32 %v205, %v206
  %v208 = vand.u32 %v207, 4294901760
  %209 = vmatpush.msra.mxu0 %v208
  %v210 = vand.u32 %v69, 4294901760
  %211 = vmatmul.f32.gmra.mxu0 %v210
  %v212 = vpop.f32.mrf.mxu0
  %v213 = vadd.f32 %v112, %v212
  %214 = vdwg.mxu0
  %v215 = vand.u32 %v42, 4294901760
  %v216 = vsub.f32 %v42, %v215
  %217 = vmatpush.msra.mxu0 %v216
  %v218 = vand.u32 %v41, 4294901760
  %v219 = vsub.f32 %v41, %v218
  %220 = vmatpush.msra.mxu0 %v219
  %v221 = vand.u32 %v40, 4294901760
  %v222 = vsub.f32 %v40, %v221
  %223 = vmatpush.msra.mxu0 %v222
  %v224 = vand.u32 %v39, 4294901760
  %v225 = vsub.f32 %v39, %v224
  %226 = vmatpush.msra.mxu0 %v225
  %v227 = vand.u32 %v38, 4294901760
  %v228 = vsub.f32 %v38, %v227
  %229 = vmatpush.msra.mxu0 %v228
  %v230 = vand.u32 %v37, 4294901760
  %v231 = vsub.f32 %v37, %v230
  %232 = vmatpush.msra.mxu0 %v231
  %v233 = vand.u32 %v36, 4294901760
  %v234 = vsub.f32 %v36, %v233
  %235 = vmatpush.msra.mxu0 %v234
  %v236 = vand.u32 %v35, 4294901760
  %v237 = vsub.f32 %v35, %v236
  %238 = vmatpush.msra.mxu0 %v237
  %v239 = vand.u32 %v34, 4294901760
  %v240 = vsub.f32 %v34, %v239
  %241 = vmatpush.msra.mxu0 %v240
  %v242 = vand.u32 %v33, 4294901760
  %v243 = vsub.f32 %v33, %v242
  %244 = vmatpush.msra.mxu0 %v243
  %v245 = vand.u32 %v32, 4294901760
  %v246 = vsub.f32 %v32, %v245
  %247 = vmatpush.msra.mxu0 %v246
  %v248 = vand.u32 %v31, 4294901760
  %v249 = vsub.f32 %v31, %v248
  %250 = vmatpush.msra.mxu0 %v249
  %v251 = vand.u32 %v30, 4294901760
  %v252 = vsub.f32 %v30, %v251
  %253 = vmatpush.msra.mxu0 %v252
  %v254 = vand.u32 %v29, 4294901760
  %v255 = vsub.f32 %v29, %v254
  %256 = vmatpush.msra.mxu0 %v255
  %v257 = vand.u32 %v28, 4294901760
  %v258 = vsub.f32 %v28, %v257
  %259 = vmatpush.msra.mxu0 %v258
  %v260 = vand.u32 %v27, 4294901760
  %v261 = vsub.f32 %v27, %v260
  %262 = vmatpush.msra.mxu0 %v261
  %v263 = vand.u32 %v69, 4294901760
  %v264 = vsub.f32 %v69, %v263
  %265 = vmatmul.f32.gmra.mxu0 %v264
  %v266 = vpop.f32.mrf.mxu0
  %v267 = vadd.f32 %v213, %v266
  %268 = vdwg.mxu0
  %v269 = vand.u32 %v42, 4294901760
  %270 = vmatpush.msra.mxu0 %v269
  %v271 = vand.u32 %v41, 4294901760
  %272 = vmatpush.msra.mxu0 %v271
  %v273 = vand.u32 %v40, 4294901760
  %274 = vmatpush.msra.mxu0 %v273
  %v275 = vand.u32 %v39, 4294901760
  %276 = vmatpush.msra.mxu0 %v275
  %v277 = vand.u32 %v38, 4294901760
  %278 = vmatpush.msra.mxu0 %v277
  %v279 = vand.u32 %v37, 4294901760
  %280 = vmatpush.msra.mxu0 %v279
  %v281 = vand.u32 %v36, 4294901760
  %282 = vmatpush.msra.mxu0 %v281
  %v283 = vand.u32 %v35, 4294901760
  %284 = vmatpush.msra.mxu0 %v283
  %v285 = vand.u32 %v34, 4294901760
  %286 = vmatpush.msra.mxu0 %v285
  %v287 = vand.u32 %v33, 4294901760
  %288 = vmatpush.msra.mxu0 %v287
  %v289 = vand.u32 %v32, 4294901760
  %290 = vmatpush.msra.mxu0 %v289
  %v291 = vand.u32 %v31, 4294901760
  %292 = vmatpush.msra.mxu0 %v291
  %v293 = vand.u32 %v30, 4294901760
  %294 = vmatpush.msra.mxu0 %v293
  %v295 = vand.u32 %v29, 4294901760
  %296 = vmatpush.msra.mxu0 %v295
  %v297 = vand.u32 %v28, 4294901760
  %298 = vmatpush.msra.mxu0 %v297
  %v299 = vand.u32 %v27, 4294901760
  %300 = vmatpush.msra.mxu0 %v299
  %v301 = vand.u32 %v69, 4294901760
  %v302 = vsub.f32 %v69, %v301
  %v303 = vand.u32 %v302, 4294901760
  %304 = vmatmul.f32.gmra.mxu0 %v303
  %v305 = vpop.f32.mrf.mxu0
  %v306 = vadd.f32 %v267, %v305
  %307 = vdwg.mxu0
  %v308 = vand.u32 %v42, 4294901760
  %v309 = vsub.f32 %v42, %v308
  %v310 = vand.u32 %v309, 4294901760
  %311 = vmatpush.msra.mxu0 %v310
  %v312 = vand.u32 %v41, 4294901760
  %v313 = vsub.f32 %v41, %v312
  %v314 = vand.u32 %v313, 4294901760
  %315 = vmatpush.msra.mxu0 %v314
  %v316 = vand.u32 %v40, 4294901760
  %v317 = vsub.f32 %v40, %v316
  %v318 = vand.u32 %v317, 4294901760
  %319 = vmatpush.msra.mxu0 %v318
  %v320 = vand.u32 %v39, 4294901760
  %v321 = vsub.f32 %v39, %v320
  %v322 = vand.u32 %v321, 4294901760
  %323 = vmatpush.msra.mxu0 %v322
  %v324 = vand.u32 %v38, 4294901760
  %v325 = vsub.f32 %v38, %v324
  %v326 = vand.u32 %v325, 4294901760
  %327 = vmatpush.msra.mxu0 %v326
  %v328 = vand.u32 %v37, 4294901760
  %v329 = vsub.f32 %v37, %v328
  %v330 = vand.u32 %v329, 4294901760
  %331 = vmatpush.msra.mxu0 %v330
  %v332 = vand.u32 %v36, 4294901760
  %v333 = vsub.f32 %v36, %v332
  %v334 = vand.u32 %v333, 4294901760
  %335 = vmatpush.msra.mxu0 %v334
  %v336 = vand.u32 %v35, 4294901760
  %v337 = vsub.f32 %v35, %v336
  %v338 = vand.u32 %v337, 4294901760
  %339 = vmatpush.msra.mxu0 %v338
  %v340 = vand.u32 %v34, 4294901760
  %v341 = vsub.f32 %v34, %v340
  %v342 = vand.u32 %v341, 4294901760
  %343 = vmatpush.msra.mxu0 %v342
  %v344 = vand.u32 %v33, 4294901760
  %v345 = vsub.f32 %v33, %v344
  %v346 = vand.u32 %v345, 4294901760
  %347 = vmatpush.msra.mxu0 %v346
  %v348 = vand.u32 %v32, 4294901760
  %v349 = vsub.f32 %v32, %v348
  %v350 = vand.u32 %v349, 4294901760
  %351 = vmatpush.msra.mxu0 %v350
  %v352 = vand.u32 %v31, 4294901760
  %v353 = vsub.f32 %v31, %v352
  %v354 = vand.u32 %v353, 4294901760
  %355 = vmatpush.msra.mxu0 %v354
  %v356 = vand.u32 %v30, 4294901760
  %v357 = vsub.f32 %v30, %v356
  %v358 = vand.u32 %v357, 4294901760
  %359 = vmatpush.msra.mxu0 %v358
  %v360 = vand.u32 %v29, 4294901760
  %v361 = vsub.f32 %v29, %v360
  %v362 = vand.u32 %v361, 4294901760
  %363 = vmatpush.msra.mxu0 %v362
  %v364 = vand.u32 %v28, 4294901760
  %v365 = vsub.f32 %v28, %v364
  %v366 = vand.u32 %v365, 4294901760
  %367 = vmatpush.msra.mxu0 %v366
  %v368 = vand.u32 %v27, 4294901760
  %v369 = vsub.f32 %v27, %v368
  %v370 = vand.u32 %v369, 4294901760
  %371 = vmatpush.msra.mxu0 %v370
  %v372 = vand.u32 %v69, 4294901760
  %373 = vmatmul.f32.gmra.mxu0 %v372
  %v374 = vpop.f32.mrf.mxu0
  %v375 = vadd.f32 %v306, %v374
  %376 = vdwg.mxu0
  %v377 = vand.u32 %v42, 4294901760
  %378 = vmatpush.msra.mxu0 %v377
  %v379 = vand.u32 %v41, 4294901760
  %380 = vmatpush.msra.mxu0 %v379
  %v381 = vand.u32 %v40, 4294901760
  %382 = vmatpush.msra.mxu0 %v381
  %v383 = vand.u32 %v39, 4294901760
  %384 = vmatpush.msra.mxu0 %v383
  %v385 = vand.u32 %v38, 4294901760
  %386 = vmatpush.msra.mxu0 %v385
  %v387 = vand.u32 %v37, 4294901760
  %388 = vmatpush.msra.mxu0 %v387
  %v389 = vand.u32 %v36, 4294901760
  %390 = vmatpush.msra.mxu0 %v389
  %v391 = vand.u32 %v35, 4294901760
  %392 = vmatpush.msra.mxu0 %v391
  %v393 = vand.u32 %v34, 4294901760
  %394 = vmatpush.msra.mxu0 %v393
  %v395 = vand.u32 %v33, 4294901760
  %396 = vmatpush.msra.mxu0 %v395
  %v397 = vand.u32 %v32, 4294901760
  %398 = vmatpush.msra.mxu0 %v397
  %v399 = vand.u32 %v31, 4294901760
  %400 = vmatpush.msra.mxu0 %v399
  %v401 = vand.u32 %v30, 4294901760
  %402 = vmatpush.msra.mxu0 %v401
  %v403 = vand.u32 %v29, 4294901760
  %404 = vmatpush.msra.mxu0 %v403
  %v405 = vand.u32 %v28, 4294901760
  %406 = vmatpush.msra.mxu0 %v405
  %v407 = vand.u32 %v27, 4294901760
  %408 = vmatpush.msra.mxu0 %v407
  %v409 = vand.u32 %v69, 4294901760
  %410 = vmatmul.f32.gmra.mxu0 %v409
  %v411 = vpop.f32.mrf.mxu0
  %v412 = vadd.f32 %v375, %v411
  %413 = vdwg.mxu0
  %v414 = vand.u32 %v58, 4294901760
  %415 = vmatpush.msra.mxu0 %v414
  %v416 = vand.u32 %v57, 4294901760
  %417 = vmatpush.msra.mxu0 %v416
  %v418 = vand.u32 %v56, 4294901760
  %419 = vmatpush.msra.mxu0 %v418
  %v420 = vand.u32 %v55, 4294901760
  %421 = vmatpush.msra.mxu0 %v420
  %v422 = vand.u32 %v54, 4294901760
  %423 = vmatpush.msra.mxu0 %v422
  %v424 = vand.u32 %v53, 4294901760
  %425 = vmatpush.msra.mxu0 %v424
  %v426 = vand.u32 %v52, 4294901760
  %427 = vmatpush.msra.mxu0 %v426
  %v428 = vand.u32 %v51, 4294901760
  %429 = vmatpush.msra.mxu0 %v428
  %v430 = vand.u32 %v50, 4294901760
  %431 = vmatpush.msra.mxu0 %v430
  %v432 = vand.u32 %v49, 4294901760
  %433 = vmatpush.msra.mxu0 %v432
  %v434 = vand.u32 %v48, 4294901760
  %435 = vmatpush.msra.mxu0 %v434
  %v436 = vand.u32 %v47, 4294901760
  %437 = vmatpush.msra.mxu0 %v436
  %v438 = vand.u32 %v46, 4294901760
  %439 = vmatpush.msra.mxu0 %v438
  %v440 = vand.u32 %v45, 4294901760
  %441 = vmatpush.msra.mxu0 %v440
  %v442 = vand.u32 %v44, 4294901760
  %443 = vmatpush.msra.mxu0 %v442
  %v444 = vand.u32 %v43, 4294901760
  %445 = vmatpush.msra.mxu0 %v444
  %v446 = vand.u32 %v70, 4294901760
  %v447 = vsub.f32 %v70, %v446
  %v448 = vand.u32 %v447, 4294901760
  %v449 = vsub.f32 %v447, %v448
  %v450 = vand.u32 %v449, 4294901760
  %451 = vmatmul.f32.gmra.mxu0 %v450
  %v452 = vpop.f32.mrf.mxu0
  %v453 = vadd.f32 %v412, %v452
  %454 = vdwg.mxu0
  %v455 = vand.u32 %v58, 4294901760
  %v456 = vsub.f32 %v58, %v455
  %v457 = vand.u32 %v456, 4294901760
  %v458 = vsub.f32 %v456, %v457
  %v459 = vand.u32 %v458, 4294901760
  %460 = vmatpush.msra.mxu0 %v459
  %v461 = vand.u32 %v57, 4294901760
  %v462 = vsub.f32 %v57, %v461
  %v463 = vand.u32 %v462, 4294901760
  %v464 = vsub.f32 %v462, %v463
  %v465 = vand.u32 %v464, 4294901760
  %466 = vmatpush.msra.mxu0 %v465
  %v467 = vand.u32 %v56, 4294901760
  %v468 = vsub.f32 %v56, %v467
  %v469 = vand.u32 %v468, 4294901760
  %v470 = vsub.f32 %v468, %v469
  %v471 = vand.u32 %v470, 4294901760
  %472 = vmatpush.msra.mxu0 %v471
  %v473 = vand.u32 %v55, 4294901760
  %v474 = vsub.f32 %v55, %v473
  %v475 = vand.u32 %v474, 4294901760
  %v476 = vsub.f32 %v474, %v475
  %v477 = vand.u32 %v476, 4294901760
  %478 = vmatpush.msra.mxu0 %v477
  %v479 = vand.u32 %v54, 4294901760
  %v480 = vsub.f32 %v54, %v479
  %v481 = vand.u32 %v480, 4294901760
  %v482 = vsub.f32 %v480, %v481
  %v483 = vand.u32 %v482, 4294901760
  %484 = vmatpush.msra.mxu0 %v483
  %v485 = vand.u32 %v53, 4294901760
  %v486 = vsub.f32 %v53, %v485
  %v487 = vand.u32 %v486, 4294901760
  %v488 = vsub.f32 %v486, %v487
  %v489 = vand.u32 %v488, 4294901760
  %490 = vmatpush.msra.mxu0 %v489
  %v491 = vand.u32 %v52, 4294901760
  %v492 = vsub.f32 %v52, %v491
  %v493 = vand.u32 %v492, 4294901760
  %v494 = vsub.f32 %v492, %v493
  %v495 = vand.u32 %v494, 4294901760
  %496 = vmatpush.msra.mxu0 %v495
  %v497 = vand.u32 %v51, 4294901760
  %v498 = vsub.f32 %v51, %v497
  %v499 = vand.u32 %v498, 4294901760
  %v500 = vsub.f32 %v498, %v499
  %v501 = vand.u32 %v500, 4294901760
  %502 = vmatpush.msra.mxu0 %v501
  %v503 = vand.u32 %v50, 4294901760
  %v504 = vsub.f32 %v50, %v503
  %v505 = vand.u32 %v504, 4294901760
  %v506 = vsub.f32 %v504, %v505
  %v507 = vand.u32 %v506, 4294901760
  %508 = vmatpush.msra.mxu0 %v507
  %v509 = vand.u32 %v49, 4294901760
  %v510 = vsub.f32 %v49, %v509
  %v511 = vand.u32 %v510, 4294901760
  %v512 = vsub.f32 %v510, %v511
  %v513 = vand.u32 %v512, 4294901760
  %514 = vmatpush.msra.mxu0 %v513
  %v515 = vand.u32 %v48, 4294901760
  %v516 = vsub.f32 %v48, %v515
  %v517 = vand.u32 %v516, 4294901760
  %v518 = vsub.f32 %v516, %v517
  %v519 = vand.u32 %v518, 4294901760
  %520 = vmatpush.msra.mxu0 %v519
  %v521 = vand.u32 %v47, 4294901760
  %v522 = vsub.f32 %v47, %v521
  %v523 = vand.u32 %v522, 4294901760
  %v524 = vsub.f32 %v522, %v523
  %v525 = vand.u32 %v524, 4294901760
  %526 = vmatpush.msra.mxu0 %v525
  %v527 = vand.u32 %v46, 4294901760
  %v528 = vsub.f32 %v46, %v527
  %v529 = vand.u32 %v528, 4294901760
  %v530 = vsub.f32 %v528, %v529
  %v531 = vand.u32 %v530, 4294901760
  %532 = vmatpush.msra.mxu0 %v531
  %v533 = vand.u32 %v45, 4294901760
  %v534 = vsub.f32 %v45, %v533
  %v535 = vand.u32 %v534, 4294901760
  %v536 = vsub.f32 %v534, %v535
  %v537 = vand.u32 %v536, 4294901760
  %538 = vmatpush.msra.mxu0 %v537
  %v539 = vand.u32 %v44, 4294901760
  %v540 = vsub.f32 %v44, %v539
  %v541 = vand.u32 %v540, 4294901760
  %v542 = vsub.f32 %v540, %v541
  %v543 = vand.u32 %v542, 4294901760
  %544 = vmatpush.msra.mxu0 %v543
  %v545 = vand.u32 %v43, 4294901760
  %v546 = vsub.f32 %v43, %v545
  %v547 = vand.u32 %v546, 4294901760
  %v548 = vsub.f32 %v546, %v547
  %v549 = vand.u32 %v548, 4294901760
  %550 = vmatpush.msra.mxu0 %v549
  %v551 = vand.u32 %v70, 4294901760
  %552 = vmatmul.f32.gmra.mxu0 %v551
  %v553 = vpop.f32.mrf.mxu0
  %v554 = vadd.f32 %v453, %v553
  %555 = vdwg.mxu0
  %v556 = vand.u32 %v58, 4294901760
  %v557 = vsub.f32 %v58, %v556
  %558 = vmatpush.msra.mxu0 %v557
  %v559 = vand.u32 %v57, 4294901760
  %v560 = vsub.f32 %v57, %v559
  %561 = vmatpush.msra.mxu0 %v560
  %v562 = vand.u32 %v56, 4294901760
  %v563 = vsub.f32 %v56, %v562
  %564 = vmatpush.msra.mxu0 %v563
  %v565 = vand.u32 %v55, 4294901760
  %v566 = vsub.f32 %v55, %v565
  %567 = vmatpush.msra.mxu0 %v566
  %v568 = vand.u32 %v54, 4294901760
  %v569 = vsub.f32 %v54, %v568
  %570 = vmatpush.msra.mxu0 %v569
  %v571 = vand.u32 %v53, 4294901760
  %v572 = vsub.f32 %v53, %v571
  %573 = vmatpush.msra.mxu0 %v572
  %v574 = vand.u32 %v52, 4294901760
  %v575 = vsub.f32 %v52, %v574
  %576 = vmatpush.msra.mxu0 %v575
  %v577 = vand.u32 %v51, 4294901760
  %v578 = vsub.f32 %v51, %v577
  %579 = vmatpush.msra.mxu0 %v578
  %v580 = vand.u32 %v50, 4294901760
  %v581 = vsub.f32 %v50, %v580
  %582 = vmatpush.msra.mxu0 %v581
  %v583 = vand.u32 %v49, 4294901760
  %v584 = vsub.f32 %v49, %v583
  %585 = vmatpush.msra.mxu0 %v584
  %v586 = vand.u32 %v48, 4294901760
  %v587 = vsub.f32 %v48, %v586
  %588 = vmatpush.msra.mxu0 %v587
  %v589 = vand.u32 %v47, 4294901760
  %v590 = vsub.f32 %v47, %v589
  %591 = vmatpush.msra.mxu0 %v590
  %v592 = vand.u32 %v46, 4294901760
  %v593 = vsub.f32 %v46, %v592
  %594 = vmatpush.msra.mxu0 %v593
  %v595 = vand.u32 %v45, 4294901760
  %v596 = vsub.f32 %v45, %v595
  %597 = vmatpush.msra.mxu0 %v596
  %v598 = vand.u32 %v44, 4294901760
  %v599 = vsub.f32 %v44, %v598
  %600 = vmatpush.msra.mxu0 %v599
  %v601 = vand.u32 %v43, 4294901760
  %v602 = vsub.f32 %v43, %v601
  %603 = vmatpush.msra.mxu0 %v602
  %v604 = vand.u32 %v70, 4294901760
  %v605 = vsub.f32 %v70, %v604
  %606 = vmatmul.f32.gmra.mxu0 %v605
  %v607 = vpop.f32.mrf.mxu0
  %v608 = vadd.f32 %v554, %v607
  %609 = vdwg.mxu0
  %v610 = vand.u32 %v58, 4294901760
  %611 = vmatpush.msra.mxu0 %v610
  %v612 = vand.u32 %v57, 4294901760
  %613 = vmatpush.msra.mxu0 %v612
  %v614 = vand.u32 %v56, 4294901760
  %615 = vmatpush.msra.mxu0 %v614
  %v616 = vand.u32 %v55, 4294901760
  %617 = vmatpush.msra.mxu0 %v616
  %v618 = vand.u32 %v54, 4294901760
  %619 = vmatpush.msra.mxu0 %v618
  %v620 = vand.u32 %v53, 4294901760
  %621 = vmatpush.msra.mxu0 %v620
  %v622 = vand.u32 %v52, 4294901760
  %623 = vmatpush.msra.mxu0 %v622
  %v624 = vand.u32 %v51, 4294901760
  %625 = vmatpush.msra.mxu0 %v624
  %v626 = vand.u32 %v50, 4294901760
  %627 = vmatpush.msra.mxu0 %v626
  %v628 = vand.u32 %v49, 4294901760
  %629 = vmatpush.msra.mxu0 %v628
  %v630 = vand.u32 %v48, 4294901760
  %631 = vmatpush.msra.mxu0 %v630
  %v632 = vand.u32 %v47, 4294901760
  %633 = vmatpush.msra.mxu0 %v632
  %v634 = vand.u32 %v46, 4294901760
  %635 = vmatpush.msra.mxu0 %v634
  %v636 = vand.u32 %v45, 4294901760
  %637 = vmatpush.msra.mxu0 %v636
  %v638 = vand.u32 %v44, 4294901760
  %639 = vmatpush.msra.mxu0 %v638
  %v640 = vand.u32 %v43, 4294901760
  %641 = vmatpush.msra.mxu0 %v640
  %v642 = vand.u32 %v70, 4294901760
  %v643 = vsub.f32 %v70, %v642
  %v644 = vand.u32 %v643, 4294901760
  %645 = vmatmul.f32.gmra.mxu0 %v644
  %v646 = vpop.f32.mrf.mxu0
  %v647 = vadd.f32 %v608, %v646
  %648 = vdwg.mxu0
  %v649 = vand.u32 %v58, 4294901760
  %v650 = vsub.f32 %v58, %v649
  %v651 = vand.u32 %v650, 4294901760
  %652 = vmatpush.msra.mxu0 %v651
  %v653 = vand.u32 %v57, 4294901760
  %v654 = vsub.f32 %v57, %v653
  %v655 = vand.u32 %v654, 4294901760
  %656 = vmatpush.msra.mxu0 %v655
  %v657 = vand.u32 %v56, 4294901760
  %v658 = vsub.f32 %v56, %v657
  %v659 = vand.u32 %v658, 4294901760
  %660 = vmatpush.msra.mxu0 %v659
  %v661 = vand.u32 %v55, 4294901760
  %v662 = vsub.f32 %v55, %v661
  %v663 = vand.u32 %v662, 4294901760
  %664 = vmatpush.msra.mxu0 %v663
  %v665 = vand.u32 %v54, 4294901760
  %v666 = vsub.f32 %v54, %v665
  %v667 = vand.u32 %v666, 4294901760
  %668 = vmatpush.msra.mxu0 %v667
  %v669 = vand.u32 %v53, 4294901760
  %v670 = vsub.f32 %v53, %v669
  %v671 = vand.u32 %v670, 4294901760
  %672 = vmatpush.msra.mxu0 %v671
  %v673 = vand.u32 %v52, 4294901760
  %v674 = vsub.f32 %v52, %v673
  %v675 = vand.u32 %v674, 4294901760
  %676 = vmatpush.msra.mxu0 %v675
  %v677 = vand.u32 %v51, 4294901760
  %v678 = vsub.f32 %v51, %v677
  %v679 = vand.u32 %v678, 4294901760
  %680 = vmatpush.msra.mxu0 %v679
  %v681 = vand.u32 %v50, 4294901760
  %v682 = vsub.f32 %v50, %v681
  %v683 = vand.u32 %v682, 4294901760
  %684 = vmatpush.msra.mxu0 %v683
  %v685 = vand.u32 %v49, 4294901760
  %v686 = vsub.f32 %v49, %v685
  %v687 = vand.u32 %v686, 4294901760
  %688 = vmatpush.msra.mxu0 %v687
  %v689 = vand.u32 %v48, 4294901760
  %v690 = vsub.f32 %v48, %v689
  %v691 = vand.u32 %v690, 4294901760
  %692 = vmatpush.msra.mxu0 %v691
  %v693 = vand.u32 %v47, 4294901760
  %v694 = vsub.f32 %v47, %v693
  %v695 = vand.u32 %v694, 4294901760
  %696 = vmatpush.msra.mxu0 %v695
  %v697 = vand.u32 %v46, 4294901760
  %v698 = vsub.f32 %v46, %v697
  %v699 = vand.u32 %v698, 4294901760
  %700 = vmatpush.msra.mxu0 %v699
  %v701 = vand.u32 %v45, 4294901760
  %v702 = vsub.f32 %v45, %v701
  %v703 = vand.u32 %v702, 4294901760
  %704 = vmatpush.msra.mxu0 %v703
  %v705 = vand.u32 %v44, 4294901760
  %v706 = vsub.f32 %v44, %v705
  %v707 = vand.u32 %v706, 4294901760
  %708 = vmatpush.msra.mxu0 %v707
  %v709 = vand.u32 %v43, 4294901760
  %v710 = vsub.f32 %v43, %v709
  %v711 = vand.u32 %v710, 4294901760
  %712 = vmatpush.msra.mxu0 %v711
  %v713 = vand.u32 %v70, 4294901760
  %714 = vmatmul.f32.gmra.mxu0 %v713
  %v715 = vpop.f32.mrf.mxu0
  %v716 = vadd.f32 %v647, %v715
  %717 = vdwg.mxu0
  %v718 = vand.u32 %v58, 4294901760
  %719 = vmatpush.msra.mxu0 %v718
  %v720 = vand.u32 %v57, 4294901760
  %721 = vmatpush.msra.mxu0 %v720
  %v722 = vand.u32 %v56, 4294901760
  %723 = vmatpush.msra.mxu0 %v722
  %v724 = vand.u32 %v55, 4294901760
  %725 = vmatpush.msra.mxu0 %v724
  %v726 = vand.u32 %v54, 4294901760
  %727 = vmatpush.msra.mxu0 %v726
  %v728 = vand.u32 %v53, 4294901760
  %729 = vmatpush.msra.mxu0 %v728
  %v730 = vand.u32 %v52, 4294901760
  %731 = vmatpush.msra.mxu0 %v730
  %v732 = vand.u32 %v51, 4294901760
  %733 = vmatpush.msra.mxu0 %v732
  %v734 = vand.u32 %v50, 4294901760
  %735 = vmatpush.msra.mxu0 %v734
  %v736 = vand.u32 %v49, 4294901760
  %737 = vmatpush.msra.mxu0 %v736
  %v738 = vand.u32 %v48, 4294901760
  %739 = vmatpush.msra.mxu0 %v738
  %v740 = vand.u32 %v47, 4294901760
  %741 = vmatpush.msra.mxu0 %v740
  %v742 = vand.u32 %v46, 4294901760
  %743 = vmatpush.msra.mxu0 %v742
  %v744 = vand.u32 %v45, 4294901760
  %745 = vmatpush.msra.mxu0 %v744
  %v746 = vand.u32 %v44, 4294901760
  %747 = vmatpush.msra.mxu0 %v746
  %v748 = vand.u32 %v43, 4294901760
  %749 = vmatpush.msra.mxu0 %v748
  %v750 = vand.u32 %v70, 4294901760
  %751 = vmatmul.f32.gmra.mxu0 %v750
  %v752 = vpop.f32.mrf.mxu0
  %v753 = vadd.f32 %v716, %v752
  %754 = vdwg.mxu0
  %v755 = vmul.f32 %v753, 0.125
  %vm756 = vcmask 261120
  %v758 = vsel %vm756, %v755, 0
  %760 = vmatpush.msra.mxu0 0.0
  %761 = vmatpush.msra.mxu0 0.0
  %762 = vmatpush.msra.mxu0 0.0
  %763 = vmatpush.msra.mxu0 0.0
  %764 = vmatpush.msra.mxu0 0.0
  %765 = vmatpush.msra.mxu0 0.0
  %766 = vmatpush.msra.mxu0 0.0
  %767 = vmatpush.msra.mxu0 0.0
  %768 = vmatpush.msra.mxu0 0.0
  %769 = vmatpush.msra.mxu0 0.0
  %770 = vmatpush.msra.mxu0 0.0
  %771 = vmatpush.msra.mxu0 0.0
  %v772 = vand.u32 %v65, 4294901760
  %773 = vmatpush.msra.mxu0 %v772
  %v774 = vand.u32 %v63, 4294901760
  %775 = vmatpush.msra.mxu0 %v774
  %v776 = vand.u32 %v61, 4294901760
  %777 = vmatpush.msra.mxu0 %v776
  %v778 = vand.u32 %v59, 4294901760
  %779 = vmatpush.msra.mxu0 %v778
  %v780 = vand.u32 %v758, 4294901760
  %v781 = vsub.f32 %v758, %v780
  %v782 = vand.u32 %v781, 4294901760
  %v783 = vsub.f32 %v781, %v782
  %v784 = vand.u32 %v783, 4294901760
  %785 = vmatmul.f32.gmra.mxu0 %v784
  %v786 = vpop.f32.mrf.mxu0
  %v787 = vadd.f32 0.0, %v786
  %788 = vdwg.mxu0
  %789 = vmatpush.msra.mxu0 0.0
  %790 = vmatpush.msra.mxu0 0.0
  %791 = vmatpush.msra.mxu0 0.0
  %792 = vmatpush.msra.mxu0 0.0
  %793 = vmatpush.msra.mxu0 0.0
  %794 = vmatpush.msra.mxu0 0.0
  %795 = vmatpush.msra.mxu0 0.0
  %796 = vmatpush.msra.mxu0 0.0
  %797 = vmatpush.msra.mxu0 0.0
  %798 = vmatpush.msra.mxu0 0.0
  %799 = vmatpush.msra.mxu0 0.0
  %800 = vmatpush.msra.mxu0 0.0
  %v801 = vand.u32 %v65, 4294901760
  %v802 = vsub.f32 %v65, %v801
  %v803 = vand.u32 %v802, 4294901760
  %v804 = vsub.f32 %v802, %v803
  %v805 = vand.u32 %v804, 4294901760
  %806 = vmatpush.msra.mxu0 %v805
  %v807 = vand.u32 %v63, 4294901760
  %v808 = vsub.f32 %v63, %v807
  %v809 = vand.u32 %v808, 4294901760
  %v810 = vsub.f32 %v808, %v809
  %v811 = vand.u32 %v810, 4294901760
  %812 = vmatpush.msra.mxu0 %v811
  %v813 = vand.u32 %v61, 4294901760
  %v814 = vsub.f32 %v61, %v813
  %v815 = vand.u32 %v814, 4294901760
  %v816 = vsub.f32 %v814, %v815
  %v817 = vand.u32 %v816, 4294901760
  %818 = vmatpush.msra.mxu0 %v817
  %v819 = vand.u32 %v59, 4294901760
  %v820 = vsub.f32 %v59, %v819
  %v821 = vand.u32 %v820, 4294901760
  %v822 = vsub.f32 %v820, %v821
  %v823 = vand.u32 %v822, 4294901760
  %824 = vmatpush.msra.mxu0 %v823
  %v825 = vand.u32 %v758, 4294901760
  %826 = vmatmul.f32.gmra.mxu0 %v825
  %v827 = vpop.f32.mrf.mxu0
  %v828 = vadd.f32 %v787, %v827
  %829 = vdwg.mxu0
  %830 = vmatpush.msra.mxu0 0.0
  %831 = vmatpush.msra.mxu0 0.0
  %832 = vmatpush.msra.mxu0 0.0
  %833 = vmatpush.msra.mxu0 0.0
  %834 = vmatpush.msra.mxu0 0.0
  %835 = vmatpush.msra.mxu0 0.0
  %836 = vmatpush.msra.mxu0 0.0
  %837 = vmatpush.msra.mxu0 0.0
  %838 = vmatpush.msra.mxu0 0.0
  %839 = vmatpush.msra.mxu0 0.0
  %840 = vmatpush.msra.mxu0 0.0
  %841 = vmatpush.msra.mxu0 0.0
  %v842 = vand.u32 %v65, 4294901760
  %v843 = vsub.f32 %v65, %v842
  %844 = vmatpush.msra.mxu0 %v843
  %v845 = vand.u32 %v63, 4294901760
  %v846 = vsub.f32 %v63, %v845
  %847 = vmatpush.msra.mxu0 %v846
  %v848 = vand.u32 %v61, 4294901760
  %v849 = vsub.f32 %v61, %v848
  %850 = vmatpush.msra.mxu0 %v849
  %v851 = vand.u32 %v59, 4294901760
  %v852 = vsub.f32 %v59, %v851
  %853 = vmatpush.msra.mxu0 %v852
  %v854 = vand.u32 %v758, 4294901760
  %v855 = vsub.f32 %v758, %v854
  %856 = vmatmul.f32.gmra.mxu0 %v855
  %v857 = vpop.f32.mrf.mxu0
  %v858 = vadd.f32 %v828, %v857
  %859 = vdwg.mxu0
  %860 = vmatpush.msra.mxu0 0.0
  %861 = vmatpush.msra.mxu0 0.0
  %862 = vmatpush.msra.mxu0 0.0
  %863 = vmatpush.msra.mxu0 0.0
  %864 = vmatpush.msra.mxu0 0.0
  %865 = vmatpush.msra.mxu0 0.0
  %866 = vmatpush.msra.mxu0 0.0
  %867 = vmatpush.msra.mxu0 0.0
  %868 = vmatpush.msra.mxu0 0.0
  %869 = vmatpush.msra.mxu0 0.0
  %870 = vmatpush.msra.mxu0 0.0
  %871 = vmatpush.msra.mxu0 0.0
  %v872 = vand.u32 %v65, 4294901760
  %873 = vmatpush.msra.mxu0 %v872
  %v874 = vand.u32 %v63, 4294901760
  %875 = vmatpush.msra.mxu0 %v874
  %v876 = vand.u32 %v61, 4294901760
  %877 = vmatpush.msra.mxu0 %v876
  %v878 = vand.u32 %v59, 4294901760
  %879 = vmatpush.msra.mxu0 %v878
  %v880 = vand.u32 %v758, 4294901760
  %v881 = vsub.f32 %v758, %v880
  %v882 = vand.u32 %v881, 4294901760
  %883 = vmatmul.f32.gmra.mxu0 %v882
  %v884 = vpop.f32.mrf.mxu0
  %v885 = vadd.f32 %v858, %v884
  %886 = vdwg.mxu0
  %887 = vmatpush.msra.mxu0 0.0
  %888 = vmatpush.msra.mxu0 0.0
  %889 = vmatpush.msra.mxu0 0.0
  %890 = vmatpush.msra.mxu0 0.0
  %891 = vmatpush.msra.mxu0 0.0
  %892 = vmatpush.msra.mxu0 0.0
  %893 = vmatpush.msra.mxu0 0.0
  %894 = vmatpush.msra.mxu0 0.0
  %895 = vmatpush.msra.mxu0 0.0
  %896 = vmatpush.msra.mxu0 0.0
  %897 = vmatpush.msra.mxu0 0.0
  %898 = vmatpush.msra.mxu0 0.0
  %v899 = vand.u32 %v65, 4294901760
  %v900 = vsub.f32 %v65, %v899
  %v901 = vand.u32 %v900, 4294901760
  %902 = vmatpush.msra.mxu0 %v901
  %v903 = vand.u32 %v63, 4294901760
  %v904 = vsub.f32 %v63, %v903
  %v905 = vand.u32 %v904, 4294901760
  %906 = vmatpush.msra.mxu0 %v905
  %v907 = vand.u32 %v61, 4294901760
  %v908 = vsub.f32 %v61, %v907
  %v909 = vand.u32 %v908, 4294901760
  %910 = vmatpush.msra.mxu0 %v909
  %v911 = vand.u32 %v59, 4294901760
  %v912 = vsub.f32 %v59, %v911
  %v913 = vand.u32 %v912, 4294901760
  %914 = vmatpush.msra.mxu0 %v913
  %v915 = vand.u32 %v758, 4294901760
  %916 = vmatmul.f32.gmra.mxu0 %v915
  %v917 = vpop.f32.mrf.mxu0
  %v918 = vadd.f32 %v885, %v917
  %919 = vdwg.mxu0
  %920 = vmatpush.msra.mxu0 0.0
  %921 = vmatpush.msra.mxu0 0.0
  %922 = vmatpush.msra.mxu0 0.0
  %923 = vmatpush.msra.mxu0 0.0
  %924 = vmatpush.msra.mxu0 0.0
  %925 = vmatpush.msra.mxu0 0.0
  %926 = vmatpush.msra.mxu0 0.0
  %927 = vmatpush.msra.mxu0 0.0
  %928 = vmatpush.msra.mxu0 0.0
  %929 = vmatpush.msra.mxu0 0.0
  %930 = vmatpush.msra.mxu0 0.0
  %931 = vmatpush.msra.mxu0 0.0
  %v932 = vand.u32 %v65, 4294901760
  %933 = vmatpush.msra.mxu0 %v932
  %v934 = vand.u32 %v63, 4294901760
  %935 = vmatpush.msra.mxu0 %v934
  %v936 = vand.u32 %v61, 4294901760
  %937 = vmatpush.msra.mxu0 %v936
  %v938 = vand.u32 %v59, 4294901760
  %939 = vmatpush.msra.mxu0 %v938
  %v940 = vand.u32 %v758, 4294901760
  %941 = vmatmul.f32.gmra.mxu0 %v940
  %v942 = vpop.f32.mrf.mxu0
  %v943 = vadd.f32 %v918, %v942
  %944 = vdwg.mxu0
  %945 = vmatpush.msra.mxu0 0.0
  %946 = vmatpush.msra.mxu0 0.0
  %947 = vmatpush.msra.mxu0 0.0
  %948 = vmatpush.msra.mxu0 0.0
  %949 = vmatpush.msra.mxu0 0.0
  %950 = vmatpush.msra.mxu0 0.0
  %951 = vmatpush.msra.mxu0 0.0
  %952 = vmatpush.msra.mxu0 0.0
  %953 = vmatpush.msra.mxu0 0.0
  %954 = vmatpush.msra.mxu0 0.0
  %955 = vmatpush.msra.mxu0 0.0
  %956 = vmatpush.msra.mxu0 0.0
  %v957 = vand.u32 %v66, 4294901760
  %958 = vmatpush.msra.mxu0 %v957
  %v959 = vand.u32 %v64, 4294901760
  %960 = vmatpush.msra.mxu0 %v959
  %v961 = vand.u32 %v62, 4294901760
  %962 = vmatpush.msra.mxu0 %v961
  %v963 = vand.u32 %v60, 4294901760
  %964 = vmatpush.msra.mxu0 %v963
  %v965 = vand.u32 %v758, 4294901760
  %v966 = vsub.f32 %v758, %v965
  %v967 = vand.u32 %v966, 4294901760
  %v968 = vsub.f32 %v966, %v967
  %v969 = vand.u32 %v968, 4294901760
  %970 = vmatmul.f32.gmra.mxu0 %v969
  %v971 = vpop.f32.mrf.mxu0
  %v972 = vadd.f32 0.0, %v971
  %973 = vdwg.mxu0
  %974 = vmatpush.msra.mxu0 0.0
  %975 = vmatpush.msra.mxu0 0.0
  %976 = vmatpush.msra.mxu0 0.0
  %977 = vmatpush.msra.mxu0 0.0
  %978 = vmatpush.msra.mxu0 0.0
  %979 = vmatpush.msra.mxu0 0.0
  %980 = vmatpush.msra.mxu0 0.0
  %981 = vmatpush.msra.mxu0 0.0
  %982 = vmatpush.msra.mxu0 0.0
  %983 = vmatpush.msra.mxu0 0.0
  %984 = vmatpush.msra.mxu0 0.0
  %985 = vmatpush.msra.mxu0 0.0
  %v986 = vand.u32 %v66, 4294901760
  %v987 = vsub.f32 %v66, %v986
  %v988 = vand.u32 %v987, 4294901760
  %v989 = vsub.f32 %v987, %v988
  %v990 = vand.u32 %v989, 4294901760
  %991 = vmatpush.msra.mxu0 %v990
  %v992 = vand.u32 %v64, 4294901760
  %v993 = vsub.f32 %v64, %v992
  %v994 = vand.u32 %v993, 4294901760
  %v995 = vsub.f32 %v993, %v994
  %v996 = vand.u32 %v995, 4294901760
  %997 = vmatpush.msra.mxu0 %v996
  %v998 = vand.u32 %v62, 4294901760
  %v999 = vsub.f32 %v62, %v998
  %v1000 = vand.u32 %v999, 4294901760
  %v1001 = vsub.f32 %v999, %v1000
  %v1002 = vand.u32 %v1001, 4294901760
  %1003 = vmatpush.msra.mxu0 %v1002
  %v1004 = vand.u32 %v60, 4294901760
  %v1005 = vsub.f32 %v60, %v1004
  %v1006 = vand.u32 %v1005, 4294901760
  %v1007 = vsub.f32 %v1005, %v1006
  %v1008 = vand.u32 %v1007, 4294901760
  %1009 = vmatpush.msra.mxu0 %v1008
  %v1010 = vand.u32 %v758, 4294901760
  %1011 = vmatmul.f32.gmra.mxu0 %v1010
  %v1012 = vpop.f32.mrf.mxu0
  %v1013 = vadd.f32 %v972, %v1012
  %1014 = vdwg.mxu0
  %1015 = vmatpush.msra.mxu0 0.0
  %1016 = vmatpush.msra.mxu0 0.0
  %1017 = vmatpush.msra.mxu0 0.0
  %1018 = vmatpush.msra.mxu0 0.0
  %1019 = vmatpush.msra.mxu0 0.0
  %1020 = vmatpush.msra.mxu0 0.0
  %1021 = vmatpush.msra.mxu0 0.0
  %1022 = vmatpush.msra.mxu0 0.0
  %1023 = vmatpush.msra.mxu0 0.0
  %1024 = vmatpush.msra.mxu0 0.0
  %1025 = vmatpush.msra.mxu0 0.0
  %1026 = vmatpush.msra.mxu0 0.0
  %v1027 = vand.u32 %v66, 4294901760
  %v1028 = vsub.f32 %v66, %v1027
  %1029 = vmatpush.msra.mxu0 %v1028
  %v1030 = vand.u32 %v64, 4294901760
  %v1031 = vsub.f32 %v64, %v1030
  %1032 = vmatpush.msra.mxu0 %v1031
  %v1033 = vand.u32 %v62, 4294901760
  %v1034 = vsub.f32 %v62, %v1033
  %1035 = vmatpush.msra.mxu0 %v1034
  %v1036 = vand.u32 %v60, 4294901760
  %v1037 = vsub.f32 %v60, %v1036
  %1038 = vmatpush.msra.mxu0 %v1037
  %v1039 = vand.u32 %v758, 4294901760
  %v1040 = vsub.f32 %v758, %v1039
  %1041 = vmatmul.f32.gmra.mxu0 %v1040
  %v1042 = vpop.f32.mrf.mxu0
  %v1043 = vadd.f32 %v1013, %v1042
  %1044 = vdwg.mxu0
  %1045 = vmatpush.msra.mxu0 0.0
  %1046 = vmatpush.msra.mxu0 0.0
  %1047 = vmatpush.msra.mxu0 0.0
  %1048 = vmatpush.msra.mxu0 0.0
  %1049 = vmatpush.msra.mxu0 0.0
  %1050 = vmatpush.msra.mxu0 0.0
  %1051 = vmatpush.msra.mxu0 0.0
  %1052 = vmatpush.msra.mxu0 0.0
  %1053 = vmatpush.msra.mxu0 0.0
  %1054 = vmatpush.msra.mxu0 0.0
  %1055 = vmatpush.msra.mxu0 0.0
  %1056 = vmatpush.msra.mxu0 0.0
  %v1057 = vand.u32 %v66, 4294901760
  %1058 = vmatpush.msra.mxu0 %v1057
  %v1059 = vand.u32 %v64, 4294901760
  %1060 = vmatpush.msra.mxu0 %v1059
  %v1061 = vand.u32 %v62, 4294901760
  %1062 = vmatpush.msra.mxu0 %v1061
  %v1063 = vand.u32 %v60, 4294901760
  %1064 = vmatpush.msra.mxu0 %v1063
  %v1065 = vand.u32 %v758, 4294901760
  %v1066 = vsub.f32 %v758, %v1065
  %v1067 = vand.u32 %v1066, 4294901760
  %1068 = vmatmul.f32.gmra.mxu0 %v1067
  %v1069 = vpop.f32.mrf.mxu0
  %v1070 = vadd.f32 %v1043, %v1069
  %1071 = vdwg.mxu0
  %1072 = vmatpush.msra.mxu0 0.0
  %1073 = vmatpush.msra.mxu0 0.0
  %1074 = vmatpush.msra.mxu0 0.0
  %1075 = vmatpush.msra.mxu0 0.0
  %1076 = vmatpush.msra.mxu0 0.0
  %1077 = vmatpush.msra.mxu0 0.0
  %1078 = vmatpush.msra.mxu0 0.0
  %1079 = vmatpush.msra.mxu0 0.0
  %1080 = vmatpush.msra.mxu0 0.0
  %1081 = vmatpush.msra.mxu0 0.0
  %1082 = vmatpush.msra.mxu0 0.0
  %1083 = vmatpush.msra.mxu0 0.0
  %v1084 = vand.u32 %v66, 4294901760
  %v1085 = vsub.f32 %v66, %v1084
  %v1086 = vand.u32 %v1085, 4294901760
  %1087 = vmatpush.msra.mxu0 %v1086
  %v1088 = vand.u32 %v64, 4294901760
  %v1089 = vsub.f32 %v64, %v1088
  %v1090 = vand.u32 %v1089, 4294901760
  %1091 = vmatpush.msra.mxu0 %v1090
  %v1092 = vand.u32 %v62, 4294901760
  %v1093 = vsub.f32 %v62, %v1092
  %v1094 = vand.u32 %v1093, 4294901760
  %1095 = vmatpush.msra.mxu0 %v1094
  %v1096 = vand.u32 %v60, 4294901760
  %v1097 = vsub.f32 %v60, %v1096
  %v1098 = vand.u32 %v1097, 4294901760
  %1099 = vmatpush.msra.mxu0 %v1098
  %v1100 = vand.u32 %v758, 4294901760
  %1101 = vmatmul.f32.gmra.mxu0 %v1100
  %v1102 = vpop.f32.mrf.mxu0
  %v1103 = vadd.f32 %v1070, %v1102
  %1104 = vdwg.mxu0
  %1105 = vmatpush.msra.mxu0 0.0
  %1106 = vmatpush.msra.mxu0 0.0
  %1107 = vmatpush.msra.mxu0 0.0
  %1108 = vmatpush.msra.mxu0 0.0
  %1109 = vmatpush.msra.mxu0 0.0
  %1110 = vmatpush.msra.mxu0 0.0
  %1111 = vmatpush.msra.mxu0 0.0
  %1112 = vmatpush.msra.mxu0 0.0
  %1113 = vmatpush.msra.mxu0 0.0
  %1114 = vmatpush.msra.mxu0 0.0
  %1115 = vmatpush.msra.mxu0 0.0
  %1116 = vmatpush.msra.mxu0 0.0
  %v1117 = vand.u32 %v66, 4294901760
  %1118 = vmatpush.msra.mxu0 %v1117
  %v1119 = vand.u32 %v64, 4294901760
  %1120 = vmatpush.msra.mxu0 %v1119
  %v1121 = vand.u32 %v62, 4294901760
  %1122 = vmatpush.msra.mxu0 %v1121
  %v1123 = vand.u32 %v60, 4294901760
  %1124 = vmatpush.msra.mxu0 %v1123
  %v1125 = vand.u32 %v758, 4294901760
  %1126 = vmatmul.f32.gmra.mxu0 %v1125
  %v1127 = vpop.f32.mrf.mxu0
  %v1128 = vadd.f32 %v1103, %v1127
  %1129 = vdwg.mxu0
  %v1132 = vrot.slane %v1128, 6
  %vm1133 = vcmask 1041408
  %v1134 = vsel %vm1133, %v943, %v1132
  %v1136 = vsub.f32 %v26, %v1134
  %v1137 = vmul.f32 %v1136, %v1136
  %1139 = vst [vmem:[#allocation1] ss:$4 sm:$0xff] %v1137
  %v1140 = vld.sshfl [vmem:[#allocation1] sm:$0xff pattern:$0x73625140]
  %v1141 = vld.sshfl [vmem:[#allocation1 + $0x8] sm:$0xff pattern:$0x73625140]
  %v1144 = vand.u32 %v42, 4294901760
  %1145 = vmatpush.msra.mxu0 %v1144
  %v1146 = vand.u32 %v41, 4294901760
  %1147 = vmatpush.msra.mxu0 %v1146
  %v1148 = vand.u32 %v40, 4294901760
  %1149 = vmatpush.msra.mxu0 %v1148
  %v1150 = vand.u32 %v39, 4294901760
  %1151 = vmatpush.msra.mxu0 %v1150
  %v1152 = vand.u32 %v38, 4294901760
  %1153 = vmatpush.msra.mxu0 %v1152
  %v1154 = vand.u32 %v37, 4294901760
  %1155 = vmatpush.msra.mxu0 %v1154
  %v1156 = vand.u32 %v36, 4294901760
  %1157 = vmatpush.msra.mxu0 %v1156
  %v1158 = vand.u32 %v35, 4294901760
  %1159 = vmatpush.msra.mxu0 %v1158
  %v1160 = vand.u32 %v34, 4294901760
  %1161 = vmatpush.msra.mxu0 %v1160
  %v1162 = vand.u32 %v33, 4294901760
  %1163 = vmatpush.msra.mxu0 %v1162
  %v1164 = vand.u32 %v32, 4294901760
  %1165 = vmatpush.msra.mxu0 %v1164
  %v1166 = vand.u32 %v31, 4294901760
  %1167 = vmatpush.msra.mxu0 %v1166
  %v1168 = vand.u32 %v30, 4294901760
  %1169 = vmatpush.msra.mxu0 %v1168
  %v1170 = vand.u32 %v29, 4294901760
  %1171 = vmatpush.msra.mxu0 %v1170
  %v1172 = vand.u32 %v28, 4294901760
  %1173 = vmatpush.msra.mxu0 %v1172
  %v1174 = vand.u32 %v27, 4294901760
  %1175 = vmatpush.msra.mxu0 %v1174
  %v1176 = vand.u32 %v1140, 4294901760
  %v1177 = vsub.f32 %v1140, %v1176
  %v1178 = vand.u32 %v1177, 4294901760
  %v1179 = vsub.f32 %v1177, %v1178
  %v1180 = vand.u32 %v1179, 4294901760
  %1181 = vmatmul.f32.gmra.mxu0 %v1180
  %v1182 = vpop.f32.mrf.mxu0
  %v1183 = vadd.f32 0.0, %v1182
  %1184 = vdwg.mxu0
  %v1185 = vand.u32 %v42, 4294901760
  %v1186 = vsub.f32 %v42, %v1185
  %v1187 = vand.u32 %v1186, 4294901760
  %v1188 = vsub.f32 %v1186, %v1187
  %v1189 = vand.u32 %v1188, 4294901760
  %1190 = vmatpush.msra.mxu0 %v1189
  %v1191 = vand.u32 %v41, 4294901760
  %v1192 = vsub.f32 %v41, %v1191
  %v1193 = vand.u32 %v1192, 4294901760
  %v1194 = vsub.f32 %v1192, %v1193
  %v1195 = vand.u32 %v1194, 4294901760
  %1196 = vmatpush.msra.mxu0 %v1195
  %v1197 = vand.u32 %v40, 4294901760
  %v1198 = vsub.f32 %v40, %v1197
  %v1199 = vand.u32 %v1198, 4294901760
  %v1200 = vsub.f32 %v1198, %v1199
  %v1201 = vand.u32 %v1200, 4294901760
  %1202 = vmatpush.msra.mxu0 %v1201
  %v1203 = vand.u32 %v39, 4294901760
  %v1204 = vsub.f32 %v39, %v1203
  %v1205 = vand.u32 %v1204, 4294901760
  %v1206 = vsub.f32 %v1204, %v1205
  %v1207 = vand.u32 %v1206, 4294901760
  %1208 = vmatpush.msra.mxu0 %v1207
  %v1209 = vand.u32 %v38, 4294901760
  %v1210 = vsub.f32 %v38, %v1209
  %v1211 = vand.u32 %v1210, 4294901760
  %v1212 = vsub.f32 %v1210, %v1211
  %v1213 = vand.u32 %v1212, 4294901760
  %1214 = vmatpush.msra.mxu0 %v1213
  %v1215 = vand.u32 %v37, 4294901760
  %v1216 = vsub.f32 %v37, %v1215
  %v1217 = vand.u32 %v1216, 4294901760
  %v1218 = vsub.f32 %v1216, %v1217
  %v1219 = vand.u32 %v1218, 4294901760
  %1220 = vmatpush.msra.mxu0 %v1219
  %v1221 = vand.u32 %v36, 4294901760
  %v1222 = vsub.f32 %v36, %v1221
  %v1223 = vand.u32 %v1222, 4294901760
  %v1224 = vsub.f32 %v1222, %v1223
  %v1225 = vand.u32 %v1224, 4294901760
  %1226 = vmatpush.msra.mxu0 %v1225
  %v1227 = vand.u32 %v35, 4294901760
  %v1228 = vsub.f32 %v35, %v1227
  %v1229 = vand.u32 %v1228, 4294901760
  %v1230 = vsub.f32 %v1228, %v1229
  %v1231 = vand.u32 %v1230, 4294901760
  %1232 = vmatpush.msra.mxu0 %v1231
  %v1233 = vand.u32 %v34, 4294901760
  %v1234 = vsub.f32 %v34, %v1233
  %v1235 = vand.u32 %v1234, 4294901760
  %v1236 = vsub.f32 %v1234, %v1235
  %v1237 = vand.u32 %v1236, 4294901760
  %1238 = vmatpush.msra.mxu0 %v1237
  %v1239 = vand.u32 %v33, 4294901760
  %v1240 = vsub.f32 %v33, %v1239
  %v1241 = vand.u32 %v1240, 4294901760
  %v1242 = vsub.f32 %v1240, %v1241
  %v1243 = vand.u32 %v1242, 4294901760
  %1244 = vmatpush.msra.mxu0 %v1243
  %v1245 = vand.u32 %v32, 4294901760
  %v1246 = vsub.f32 %v32, %v1245
  %v1247 = vand.u32 %v1246, 4294901760
  %v1248 = vsub.f32 %v1246, %v1247
  %v1249 = vand.u32 %v1248, 4294901760
  %1250 = vmatpush.msra.mxu0 %v1249
  %v1251 = vand.u32 %v31, 4294901760
  %v1252 = vsub.f32 %v31, %v1251
  %v1253 = vand.u32 %v1252, 4294901760
  %v1254 = vsub.f32 %v1252, %v1253
  %v1255 = vand.u32 %v1254, 4294901760
  %1256 = vmatpush.msra.mxu0 %v1255
  %v1257 = vand.u32 %v30, 4294901760
  %v1258 = vsub.f32 %v30, %v1257
  %v1259 = vand.u32 %v1258, 4294901760
  %v1260 = vsub.f32 %v1258, %v1259
  %v1261 = vand.u32 %v1260, 4294901760
  %1262 = vmatpush.msra.mxu0 %v1261
  %v1263 = vand.u32 %v29, 4294901760
  %v1264 = vsub.f32 %v29, %v1263
  %v1265 = vand.u32 %v1264, 4294901760
  %v1266 = vsub.f32 %v1264, %v1265
  %v1267 = vand.u32 %v1266, 4294901760
  %1268 = vmatpush.msra.mxu0 %v1267
  %v1269 = vand.u32 %v28, 4294901760
  %v1270 = vsub.f32 %v28, %v1269
  %v1271 = vand.u32 %v1270, 4294901760
  %v1272 = vsub.f32 %v1270, %v1271
  %v1273 = vand.u32 %v1272, 4294901760
  %1274 = vmatpush.msra.mxu0 %v1273
  %v1275 = vand.u32 %v27, 4294901760
  %v1276 = vsub.f32 %v27, %v1275
  %v1277 = vand.u32 %v1276, 4294901760
  %v1278 = vsub.f32 %v1276, %v1277
  %v1279 = vand.u32 %v1278, 4294901760
  %1280 = vmatpush.msra.mxu0 %v1279
  %v1281 = vand.u32 %v1140, 4294901760
  %1282 = vmatmul.f32.gmra.mxu0 %v1281
  %v1283 = vpop.f32.mrf.mxu0
  %v1284 = vadd.f32 %v1183, %v1283
  %1285 = vdwg.mxu0
  %v1286 = vand.u32 %v42, 4294901760
  %v1287 = vsub.f32 %v42, %v1286
  %1288 = vmatpush.msra.mxu0 %v1287
  %v1289 = vand.u32 %v41, 4294901760
  %v1290 = vsub.f32 %v41, %v1289
  %1291 = vmatpush.msra.mxu0 %v1290
  %v1292 = vand.u32 %v40, 4294901760
  %v1293 = vsub.f32 %v40, %v1292
  %1294 = vmatpush.msra.mxu0 %v1293
  %v1295 = vand.u32 %v39, 4294901760
  %v1296 = vsub.f32 %v39, %v1295
  %1297 = vmatpush.msra.mxu0 %v1296
  %v1298 = vand.u32 %v38, 4294901760
  %v1299 = vsub.f32 %v38, %v1298
  %1300 = vmatpush.msra.mxu0 %v1299
  %v1301 = vand.u32 %v37, 4294901760
  %v1302 = vsub.f32 %v37, %v1301
  %1303 = vmatpush.msra.mxu0 %v1302
  %v1304 = vand.u32 %v36, 4294901760
  %v1305 = vsub.f32 %v36, %v1304
  %1306 = vmatpush.msra.mxu0 %v1305
  %v1307 = vand.u32 %v35, 4294901760
  %v1308 = vsub.f32 %v35, %v1307
  %1309 = vmatpush.msra.mxu0 %v1308
  %v1310 = vand.u32 %v34, 4294901760
  %v1311 = vsub.f32 %v34, %v1310
  %1312 = vmatpush.msra.mxu0 %v1311
  %v1313 = vand.u32 %v33, 4294901760
  %v1314 = vsub.f32 %v33, %v1313
  %1315 = vmatpush.msra.mxu0 %v1314
  %v1316 = vand.u32 %v32, 4294901760
  %v1317 = vsub.f32 %v32, %v1316
  %1318 = vmatpush.msra.mxu0 %v1317
  %v1319 = vand.u32 %v31, 4294901760
  %v1320 = vsub.f32 %v31, %v1319
  %1321 = vmatpush.msra.mxu0 %v1320
  %v1322 = vand.u32 %v30, 4294901760
  %v1323 = vsub.f32 %v30, %v1322
  %1324 = vmatpush.msra.mxu0 %v1323
  %v1325 = vand.u32 %v29, 4294901760
  %v1326 = vsub.f32 %v29, %v1325
  %1327 = vmatpush.msra.mxu0 %v1326
  %v1328 = vand.u32 %v28, 4294901760
  %v1329 = vsub.f32 %v28, %v1328
  %1330 = vmatpush.msra.mxu0 %v1329
  %v1331 = vand.u32 %v27, 4294901760
  %v1332 = vsub.f32 %v27, %v1331
  %1333 = vmatpush.msra.mxu0 %v1332
  %v1334 = vand.u32 %v1140, 4294901760
  %v1335 = vsub.f32 %v1140, %v1334
  %1336 = vmatmul.f32.gmra.mxu0 %v1335
  %v1337 = vpop.f32.mrf.mxu0
  %v1338 = vadd.f32 %v1284, %v1337
  %1339 = vdwg.mxu0
  %v1340 = vand.u32 %v42, 4294901760
  %1341 = vmatpush.msra.mxu0 %v1340
  %v1342 = vand.u32 %v41, 4294901760
  %1343 = vmatpush.msra.mxu0 %v1342
  %v1344 = vand.u32 %v40, 4294901760
  %1345 = vmatpush.msra.mxu0 %v1344
  %v1346 = vand.u32 %v39, 4294901760
  %1347 = vmatpush.msra.mxu0 %v1346
  %v1348 = vand.u32 %v38, 4294901760
  %1349 = vmatpush.msra.mxu0 %v1348
  %v1350 = vand.u32 %v37, 4294901760
  %1351 = vmatpush.msra.mxu0 %v1350
  %v1352 = vand.u32 %v36, 4294901760
  %1353 = vmatpush.msra.mxu0 %v1352
  %v1354 = vand.u32 %v35, 4294901760
  %1355 = vmatpush.msra.mxu0 %v1354
  %v1356 = vand.u32 %v34, 4294901760
  %1357 = vmatpush.msra.mxu0 %v1356
  %v1358 = vand.u32 %v33, 4294901760
  %1359 = vmatpush.msra.mxu0 %v1358
  %v1360 = vand.u32 %v32, 4294901760
  %1361 = vmatpush.msra.mxu0 %v1360
  %v1362 = vand.u32 %v31, 4294901760
  %1363 = vmatpush.msra.mxu0 %v1362
  %v1364 = vand.u32 %v30, 4294901760
  %1365 = vmatpush.msra.mxu0 %v1364
  %v1366 = vand.u32 %v29, 4294901760
  %1367 = vmatpush.msra.mxu0 %v1366
  %v1368 = vand.u32 %v28, 4294901760
  %1369 = vmatpush.msra.mxu0 %v1368
  %v1370 = vand.u32 %v27, 4294901760
  %1371 = vmatpush.msra.mxu0 %v1370
  %v1372 = vand.u32 %v1140, 4294901760
  %v1373 = vsub.f32 %v1140, %v1372
  %v1374 = vand.u32 %v1373, 4294901760
  %1375 = vmatmul.f32.gmra.mxu0 %v1374
  %v1376 = vpop.f32.mrf.mxu0
  %v1377 = vadd.f32 %v1338, %v1376
  %1378 = vdwg.mxu0
  %v1379 = vand.u32 %v42, 4294901760
  %v1380 = vsub.f32 %v42, %v1379
  %v1381 = vand.u32 %v1380, 4294901760
  %1382 = vmatpush.msra.mxu0 %v1381
  %v1383 = vand.u32 %v41, 4294901760
  %v1384 = vsub.f32 %v41, %v1383
  %v1385 = vand.u32 %v1384, 4294901760
  %1386 = vmatpush.msra.mxu0 %v1385
  %v1387 = vand.u32 %v40, 4294901760
  %v1388 = vsub.f32 %v40, %v1387
  %v1389 = vand.u32 %v1388, 4294901760
  %1390 = vmatpush.msra.mxu0 %v1389
  %v1391 = vand.u32 %v39, 4294901760
  %v1392 = vsub.f32 %v39, %v1391
  %v1393 = vand.u32 %v1392, 4294901760
  %1394 = vmatpush.msra.mxu0 %v1393
  %v1395 = vand.u32 %v38, 4294901760
  %v1396 = vsub.f32 %v38, %v1395
  %v1397 = vand.u32 %v1396, 4294901760
  %1398 = vmatpush.msra.mxu0 %v1397
  %v1399 = vand.u32 %v37, 4294901760
  %v1400 = vsub.f32 %v37, %v1399
  %v1401 = vand.u32 %v1400, 4294901760
  %1402 = vmatpush.msra.mxu0 %v1401
  %v1403 = vand.u32 %v36, 4294901760
  %v1404 = vsub.f32 %v36, %v1403
  %v1405 = vand.u32 %v1404, 4294901760
  %1406 = vmatpush.msra.mxu0 %v1405
  %v1407 = vand.u32 %v35, 4294901760
  %v1408 = vsub.f32 %v35, %v1407
  %v1409 = vand.u32 %v1408, 4294901760
  %1410 = vmatpush.msra.mxu0 %v1409
  %v1411 = vand.u32 %v34, 4294901760
  %v1412 = vsub.f32 %v34, %v1411
  %v1413 = vand.u32 %v1412, 4294901760
  %1414 = vmatpush.msra.mxu0 %v1413
  %v1415 = vand.u32 %v33, 4294901760
  %v1416 = vsub.f32 %v33, %v1415
  %v1417 = vand.u32 %v1416, 4294901760
  %1418 = vmatpush.msra.mxu0 %v1417
  %v1419 = vand.u32 %v32, 4294901760
  %v1420 = vsub.f32 %v32, %v1419
  %v1421 = vand.u32 %v1420, 4294901760
  %1422 = vmatpush.msra.mxu0 %v1421
  %v1423 = vand.u32 %v31, 4294901760
  %v1424 = vsub.f32 %v31, %v1423
  %v1425 = vand.u32 %v1424, 4294901760
  %1426 = vmatpush.msra.mxu0 %v1425
  %v1427 = vand.u32 %v30, 4294901760
  %v1428 = vsub.f32 %v30, %v1427
  %v1429 = vand.u32 %v1428, 4294901760
  %1430 = vmatpush.msra.mxu0 %v1429
  %v1431 = vand.u32 %v29, 4294901760
  %v1432 = vsub.f32 %v29, %v1431
  %v1433 = vand.u32 %v1432, 4294901760
  %1434 = vmatpush.msra.mxu0 %v1433
  %v1435 = vand.u32 %v28, 4294901760
  %v1436 = vsub.f32 %v28, %v1435
  %v1437 = vand.u32 %v1436, 4294901760
  %1438 = vmatpush.msra.mxu0 %v1437
  %v1439 = vand.u32 %v27, 4294901760
  %v1440 = vsub.f32 %v27, %v1439
  %v1441 = vand.u32 %v1440, 4294901760
  %1442 = vmatpush.msra.mxu0 %v1441
  %v1443 = vand.u32 %v1140, 4294901760
  %1444 = vmatmul.f32.gmra.mxu0 %v1443
  %v1445 = vpop.f32.mrf.mxu0
  %v1446 = vadd.f32 %v1377, %v1445
  %1447 = vdwg.mxu0
  %v1448 = vand.u32 %v42, 4294901760
  %1449 = vmatpush.msra.mxu0 %v1448
  %v1450 = vand.u32 %v41, 4294901760
  %1451 = vmatpush.msra.mxu0 %v1450
  %v1452 = vand.u32 %v40, 4294901760
  %1453 = vmatpush.msra.mxu0 %v1452
  %v1454 = vand.u32 %v39, 4294901760
  %1455 = vmatpush.msra.mxu0 %v1454
  %v1456 = vand.u32 %v38, 4294901760
  %1457 = vmatpush.msra.mxu0 %v1456
  %v1458 = vand.u32 %v37, 4294901760
  %1459 = vmatpush.msra.mxu0 %v1458
  %v1460 = vand.u32 %v36, 4294901760
  %1461 = vmatpush.msra.mxu0 %v1460
  %v1462 = vand.u32 %v35, 4294901760
  %1463 = vmatpush.msra.mxu0 %v1462
  %v1464 = vand.u32 %v34, 4294901760
  %1465 = vmatpush.msra.mxu0 %v1464
  %v1466 = vand.u32 %v33, 4294901760
  %1467 = vmatpush.msra.mxu0 %v1466
  %v1468 = vand.u32 %v32, 4294901760
  %1469 = vmatpush.msra.mxu0 %v1468
  %v1470 = vand.u32 %v31, 4294901760
  %1471 = vmatpush.msra.mxu0 %v1470
  %v1472 = vand.u32 %v30, 4294901760
  %1473 = vmatpush.msra.mxu0 %v1472
  %v1474 = vand.u32 %v29, 4294901760
  %1475 = vmatpush.msra.mxu0 %v1474
  %v1476 = vand.u32 %v28, 4294901760
  %1477 = vmatpush.msra.mxu0 %v1476
  %v1478 = vand.u32 %v27, 4294901760
  %1479 = vmatpush.msra.mxu0 %v1478
  %v1480 = vand.u32 %v1140, 4294901760
  %1481 = vmatmul.f32.gmra.mxu0 %v1480
  %v1482 = vpop.f32.mrf.mxu0
  %v1483 = vadd.f32 %v1446, %v1482
  %1484 = vdwg.mxu0
  %v1485 = vand.u32 %v58, 4294901760
  %1486 = vmatpush.msra.mxu0 %v1485
  %v1487 = vand.u32 %v57, 4294901760
  %1488 = vmatpush.msra.mxu0 %v1487
  %v1489 = vand.u32 %v56, 4294901760
  %1490 = vmatpush.msra.mxu0 %v1489
  %v1491 = vand.u32 %v55, 4294901760
  %1492 = vmatpush.msra.mxu0 %v1491
  %v1493 = vand.u32 %v54, 4294901760
  %1494 = vmatpush.msra.mxu0 %v1493
  %v1495 = vand.u32 %v53, 4294901760
  %1496 = vmatpush.msra.mxu0 %v1495
  %v1497 = vand.u32 %v52, 4294901760
  %1498 = vmatpush.msra.mxu0 %v1497
  %v1499 = vand.u32 %v51, 4294901760
  %1500 = vmatpush.msra.mxu0 %v1499
  %v1501 = vand.u32 %v50, 4294901760
  %1502 = vmatpush.msra.mxu0 %v1501
  %v1503 = vand.u32 %v49, 4294901760
  %1504 = vmatpush.msra.mxu0 %v1503
  %v1505 = vand.u32 %v48, 4294901760
  %1506 = vmatpush.msra.mxu0 %v1505
  %v1507 = vand.u32 %v47, 4294901760
  %1508 = vmatpush.msra.mxu0 %v1507
  %v1509 = vand.u32 %v46, 4294901760
  %1510 = vmatpush.msra.mxu0 %v1509
  %v1511 = vand.u32 %v45, 4294901760
  %1512 = vmatpush.msra.mxu0 %v1511
  %v1513 = vand.u32 %v44, 4294901760
  %1514 = vmatpush.msra.mxu0 %v1513
  %v1515 = vand.u32 %v43, 4294901760
  %1516 = vmatpush.msra.mxu0 %v1515
  %v1517 = vand.u32 %v1141, 4294901760
  %v1518 = vsub.f32 %v1141, %v1517
  %v1519 = vand.u32 %v1518, 4294901760
  %v1520 = vsub.f32 %v1518, %v1519
  %v1521 = vand.u32 %v1520, 4294901760
  %1522 = vmatmul.f32.gmra.mxu0 %v1521
  %v1523 = vpop.f32.mrf.mxu0
  %v1524 = vadd.f32 %v1483, %v1523
  %1525 = vdwg.mxu0
  %v1526 = vand.u32 %v58, 4294901760
  %v1527 = vsub.f32 %v58, %v1526
  %v1528 = vand.u32 %v1527, 4294901760
  %v1529 = vsub.f32 %v1527, %v1528
  %v1530 = vand.u32 %v1529, 4294901760
  %1531 = vmatpush.msra.mxu0 %v1530
  %v1532 = vand.u32 %v57, 4294901760
  %v1533 = vsub.f32 %v57, %v1532
  %v1534 = vand.u32 %v1533, 4294901760
  %v1535 = vsub.f32 %v1533, %v1534
  %v1536 = vand.u32 %v1535, 4294901760
  %1537 = vmatpush.msra.mxu0 %v1536
  %v1538 = vand.u32 %v56, 4294901760
  %v1539 = vsub.f32 %v56, %v1538
  %v1540 = vand.u32 %v1539, 4294901760
  %v1541 = vsub.f32 %v1539, %v1540
  %v1542 = vand.u32 %v1541, 4294901760
  %1543 = vmatpush.msra.mxu0 %v1542
  %v1544 = vand.u32 %v55, 4294901760
  %v1545 = vsub.f32 %v55, %v1544
  %v1546 = vand.u32 %v1545, 4294901760
  %v1547 = vsub.f32 %v1545, %v1546
  %v1548 = vand.u32 %v1547, 4294901760
  %1549 = vmatpush.msra.mxu0 %v1548
  %v1550 = vand.u32 %v54, 4294901760
  %v1551 = vsub.f32 %v54, %v1550
  %v1552 = vand.u32 %v1551, 4294901760
  %v1553 = vsub.f32 %v1551, %v1552
  %v1554 = vand.u32 %v1553, 4294901760
  %1555 = vmatpush.msra.mxu0 %v1554
  %v1556 = vand.u32 %v53, 4294901760
  %v1557 = vsub.f32 %v53, %v1556
  %v1558 = vand.u32 %v1557, 4294901760
  %v1559 = vsub.f32 %v1557, %v1558
  %v1560 = vand.u32 %v1559, 4294901760
  %1561 = vmatpush.msra.mxu0 %v1560
  %v1562 = vand.u32 %v52, 4294901760
  %v1563 = vsub.f32 %v52, %v1562
  %v1564 = vand.u32 %v1563, 4294901760
  %v1565 = vsub.f32 %v1563, %v1564
  %v1566 = vand.u32 %v1565, 4294901760
  %1567 = vmatpush.msra.mxu0 %v1566
  %v1568 = vand.u32 %v51, 4294901760
  %v1569 = vsub.f32 %v51, %v1568
  %v1570 = vand.u32 %v1569, 4294901760
  %v1571 = vsub.f32 %v1569, %v1570
  %v1572 = vand.u32 %v1571, 4294901760
  %1573 = vmatpush.msra.mxu0 %v1572
  %v1574 = vand.u32 %v50, 4294901760
  %v1575 = vsub.f32 %v50, %v1574
  %v1576 = vand.u32 %v1575, 4294901760
  %v1577 = vsub.f32 %v1575, %v1576
  %v1578 = vand.u32 %v1577, 4294901760
  %1579 = vmatpush.msra.mxu0 %v1578
  %v1580 = vand.u32 %v49, 4294901760
  %v1581 = vsub.f32 %v49, %v1580
  %v1582 = vand.u32 %v1581, 4294901760
  %v1583 = vsub.f32 %v1581, %v1582
  %v1584 = vand.u32 %v1583, 4294901760
  %1585 = vmatpush.msra.mxu0 %v1584
  %v1586 = vand.u32 %v48, 4294901760
  %v1587 = vsub.f32 %v48, %v1586
  %v1588 = vand.u32 %v1587, 4294901760
  %v1589 = vsub.f32 %v1587, %v1588
  %v1590 = vand.u32 %v1589, 4294901760
  %1591 = vmatpush.msra.mxu0 %v1590
  %v1592 = vand.u32 %v47, 4294901760
  %v1593 = vsub.f32 %v47, %v1592
  %v1594 = vand.u32 %v1593, 4294901760
  %v1595 = vsub.f32 %v1593, %v1594
  %v1596 = vand.u32 %v1595, 4294901760
  %1597 = vmatpush.msra.mxu0 %v1596
  %v1598 = vand.u32 %v46, 4294901760
  %v1599 = vsub.f32 %v46, %v1598
  %v1600 = vand.u32 %v1599, 4294901760
  %v1601 = vsub.f32 %v1599, %v1600
  %v1602 = vand.u32 %v1601, 4294901760
  %1603 = vmatpush.msra.mxu0 %v1602
  %v1604 = vand.u32 %v45, 4294901760
  %v1605 = vsub.f32 %v45, %v1604
  %v1606 = vand.u32 %v1605, 4294901760
  %v1607 = vsub.f32 %v1605, %v1606
  %v1608 = vand.u32 %v1607, 4294901760
  %1609 = vmatpush.msra.mxu0 %v1608
  %v1610 = vand.u32 %v44, 4294901760
  %v1611 = vsub.f32 %v44, %v1610
  %v1612 = vand.u32 %v1611, 4294901760
  %v1613 = vsub.f32 %v1611, %v1612
  %v1614 = vand.u32 %v1613, 4294901760
  %1615 = vmatpush.msra.mxu0 %v1614
  %v1616 = vand.u32 %v43, 4294901760
  %v1617 = vsub.f32 %v43, %v1616
  %v1618 = vand.u32 %v1617, 4294901760
  %v1619 = vsub.f32 %v1617, %v1618
  %v1620 = vand.u32 %v1619, 4294901760
  %1621 = vmatpush.msra.mxu0 %v1620
  %v1622 = vand.u32 %v1141, 4294901760
  %1623 = vmatmul.f32.gmra.mxu0 %v1622
  %v1624 = vpop.f32.mrf.mxu0
  %v1625 = vadd.f32 %v1524, %v1624
  %1626 = vdwg.mxu0
  %v1627 = vand.u32 %v58, 4294901760
  %v1628 = vsub.f32 %v58, %v1627
  %1629 = vmatpush.msra.mxu0 %v1628
  %v1630 = vand.u32 %v57, 4294901760
  %v1631 = vsub.f32 %v57, %v1630
  %1632 = vmatpush.msra.mxu0 %v1631
  %v1633 = vand.u32 %v56, 4294901760
  %v1634 = vsub.f32 %v56, %v1633
  %1635 = vmatpush.msra.mxu0 %v1634
  %v1636 = vand.u32 %v55, 4294901760
  %v1637 = vsub.f32 %v55, %v1636
  %1638 = vmatpush.msra.mxu0 %v1637
  %v1639 = vand.u32 %v54, 4294901760
  %v1640 = vsub.f32 %v54, %v1639
  %1641 = vmatpush.msra.mxu0 %v1640
  %v1642 = vand.u32 %v53, 4294901760
  %v1643 = vsub.f32 %v53, %v1642
  %1644 = vmatpush.msra.mxu0 %v1643
  %v1645 = vand.u32 %v52, 4294901760
  %v1646 = vsub.f32 %v52, %v1645
  %1647 = vmatpush.msra.mxu0 %v1646
  %v1648 = vand.u32 %v51, 4294901760
  %v1649 = vsub.f32 %v51, %v1648
  %1650 = vmatpush.msra.mxu0 %v1649
  %v1651 = vand.u32 %v50, 4294901760
  %v1652 = vsub.f32 %v50, %v1651
  %1653 = vmatpush.msra.mxu0 %v1652
  %v1654 = vand.u32 %v49, 4294901760
  %v1655 = vsub.f32 %v49, %v1654
  %1656 = vmatpush.msra.mxu0 %v1655
  %v1657 = vand.u32 %v48, 4294901760
  %v1658 = vsub.f32 %v48, %v1657
  %1659 = vmatpush.msra.mxu0 %v1658
  %v1660 = vand.u32 %v47, 4294901760
  %v1661 = vsub.f32 %v47, %v1660
  %1662 = vmatpush.msra.mxu0 %v1661
  %v1663 = vand.u32 %v46, 4294901760
  %v1664 = vsub.f32 %v46, %v1663
  %1665 = vmatpush.msra.mxu0 %v1664
  %v1666 = vand.u32 %v45, 4294901760
  %v1667 = vsub.f32 %v45, %v1666
  %1668 = vmatpush.msra.mxu0 %v1667
  %v1669 = vand.u32 %v44, 4294901760
  %v1670 = vsub.f32 %v44, %v1669
  %1671 = vmatpush.msra.mxu0 %v1670
  %v1672 = vand.u32 %v43, 4294901760
  %v1673 = vsub.f32 %v43, %v1672
  %1674 = vmatpush.msra.mxu0 %v1673
  %v1675 = vand.u32 %v1141, 4294901760
  %v1676 = vsub.f32 %v1141, %v1675
  %1677 = vmatmul.f32.gmra.mxu0 %v1676
  %v1678 = vpop.f32.mrf.mxu0
  %v1679 = vadd.f32 %v1625, %v1678
  %1680 = vdwg.mxu0
  %v1681 = vand.u32 %v58, 4294901760
  %1682 = vmatpush.msra.mxu0 %v1681
  %v1683 = vand.u32 %v57, 4294901760
  %1684 = vmatpush.msra.mxu0 %v1683
  %v1685 = vand.u32 %v56, 4294901760
  %1686 = vmatpush.msra.mxu0 %v1685
  %v1687 = vand.u32 %v55, 4294901760
  %1688 = vmatpush.msra.mxu0 %v1687
  %v1689 = vand.u32 %v54, 4294901760
  %1690 = vmatpush.msra.mxu0 %v1689
  %v1691 = vand.u32 %v53, 4294901760
  %1692 = vmatpush.msra.mxu0 %v1691
  %v1693 = vand.u32 %v52, 4294901760
  %1694 = vmatpush.msra.mxu0 %v1693
  %v1695 = vand.u32 %v51, 4294901760
  %1696 = vmatpush.msra.mxu0 %v1695
  %v1697 = vand.u32 %v50, 4294901760
  %1698 = vmatpush.msra.mxu0 %v1697
  %v1699 = vand.u32 %v49, 4294901760
  %1700 = vmatpush.msra.mxu0 %v1699
  %v1701 = vand.u32 %v48, 4294901760
  %1702 = vmatpush.msra.mxu0 %v1701
  %v1703 = vand.u32 %v47, 4294901760
  %1704 = vmatpush.msra.mxu0 %v1703
  %v1705 = vand.u32 %v46, 4294901760
  %1706 = vmatpush.msra.mxu0 %v1705
  %v1707 = vand.u32 %v45, 4294901760
  %1708 = vmatpush.msra.mxu0 %v1707
  %v1709 = vand.u32 %v44, 4294901760
  %1710 = vmatpush.msra.mxu0 %v1709
  %v1711 = vand.u32 %v43, 4294901760
  %1712 = vmatpush.msra.mxu0 %v1711
  %v1713 = vand.u32 %v1141, 4294901760
  %v1714 = vsub.f32 %v1141, %v1713
  %v1715 = vand.u32 %v1714, 4294901760
  %1716 = vmatmul.f32.gmra.mxu0 %v1715
  %v1717 = vpop.f32.mrf.mxu0
  %v1718 = vadd.f32 %v1679, %v1717
  %1719 = vdwg.mxu0
  %v1720 = vand.u32 %v58, 4294901760
  %v1721 = vsub.f32 %v58, %v1720
  %v1722 = vand.u32 %v1721, 4294901760
  %1723 = vmatpush.msra.mxu0 %v1722
  %v1724 = vand.u32 %v57, 4294901760
  %v1725 = vsub.f32 %v57, %v1724
  %v1726 = vand.u32 %v1725, 4294901760
  %1727 = vmatpush.msra.mxu0 %v1726
  %v1728 = vand.u32 %v56, 4294901760
  %v1729 = vsub.f32 %v56, %v1728
  %v1730 = vand.u32 %v1729, 4294901760
  %1731 = vmatpush.msra.mxu0 %v1730
  %v1732 = vand.u32 %v55, 4294901760
  %v1733 = vsub.f32 %v55, %v1732
  %v1734 = vand.u32 %v1733, 4294901760
  %1735 = vmatpush.msra.mxu0 %v1734
  %v1736 = vand.u32 %v54, 4294901760
  %v1737 = vsub.f32 %v54, %v1736
  %v1738 = vand.u32 %v1737, 4294901760
  %1739 = vmatpush.msra.mxu0 %v1738
  %v1740 = vand.u32 %v53, 4294901760
  %v1741 = vsub.f32 %v53, %v1740
  %v1742 = vand.u32 %v1741, 4294901760
  %1743 = vmatpush.msra.mxu0 %v1742
  %v1744 = vand.u32 %v52, 4294901760
  %v1745 = vsub.f32 %v52, %v1744
  %v1746 = vand.u32 %v1745, 4294901760
  %1747 = vmatpush.msra.mxu0 %v1746
  %v1748 = vand.u32 %v51, 4294901760
  %v1749 = vsub.f32 %v51, %v1748
  %v1750 = vand.u32 %v1749, 4294901760
  %1751 = vmatpush.msra.mxu0 %v1750
  %v1752 = vand.u32 %v50, 4294901760
  %v1753 = vsub.f32 %v50, %v1752
  %v1754 = vand.u32 %v1753, 4294901760
  %1755 = vmatpush.msra.mxu0 %v1754
  %v1756 = vand.u32 %v49, 4294901760
  %v1757 = vsub.f32 %v49, %v1756
  %v1758 = vand.u32 %v1757, 4294901760
  %1759 = vmatpush.msra.mxu0 %v1758
  %v1760 = vand.u32 %v48, 4294901760
  %v1761 = vsub.f32 %v48, %v1760
  %v1762 = vand.u32 %v1761, 4294901760
  %1763 = vmatpush.msra.mxu0 %v1762
  %v1764 = vand.u32 %v47, 4294901760
  %v1765 = vsub.f32 %v47, %v1764
  %v1766 = vand.u32 %v1765, 4294901760
  %1767 = vmatpush.msra.mxu0 %v1766
  %v1768 = vand.u32 %v46, 4294901760
  %v1769 = vsub.f32 %v46, %v1768
  %v1770 = vand.u32 %v1769, 4294901760
  %1771 = vmatpush.msra.mxu0 %v1770
  %v1772 = vand.u32 %v45, 4294901760
  %v1773 = vsub.f32 %v45, %v1772
  %v1774 = vand.u32 %v1773, 4294901760
  %1775 = vmatpush.msra.mxu0 %v1774
  %v1776 = vand.u32 %v44, 4294901760
  %v1777 = vsub.f32 %v44, %v1776
  %v1778 = vand.u32 %v1777, 4294901760
  %1779 = vmatpush.msra.mxu0 %v1778
  %v1780 = vand.u32 %v43, 4294901760
  %v1781 = vsub.f32 %v43, %v1780
  %v1782 = vand.u32 %v1781, 4294901760
  %1783 = vmatpush.msra.mxu0 %v1782
  %v1784 = vand.u32 %v1141, 4294901760
  %1785 = vmatmul.f32.gmra.mxu0 %v1784
  %v1786 = vpop.f32.mrf.mxu0
  %v1787 = vadd.f32 %v1718, %v1786
  %1788 = vdwg.mxu0
  %v1789 = vand.u32 %v58, 4294901760
  %1790 = vmatpush.msra.mxu0 %v1789
  %v1791 = vand.u32 %v57, 4294901760
  %1792 = vmatpush.msra.mxu0 %v1791
  %v1793 = vand.u32 %v56, 4294901760
  %1794 = vmatpush.msra.mxu0 %v1793
  %v1795 = vand.u32 %v55, 4294901760
  %1796 = vmatpush.msra.mxu0 %v1795
  %v1797 = vand.u32 %v54, 4294901760
  %1798 = vmatpush.msra.mxu0 %v1797
  %v1799 = vand.u32 %v53, 4294901760
  %1800 = vmatpush.msra.mxu0 %v1799
  %v1801 = vand.u32 %v52, 4294901760
  %1802 = vmatpush.msra.mxu0 %v1801
  %v1803 = vand.u32 %v51, 4294901760
  %1804 = vmatpush.msra.mxu0 %v1803
  %v1805 = vand.u32 %v50, 4294901760
  %1806 = vmatpush.msra.mxu0 %v1805
  %v1807 = vand.u32 %v49, 4294901760
  %1808 = vmatpush.msra.mxu0 %v1807
  %v1809 = vand.u32 %v48, 4294901760
  %1810 = vmatpush.msra.mxu0 %v1809
  %v1811 = vand.u32 %v47, 4294901760
  %1812 = vmatpush.msra.mxu0 %v1811
  %v1813 = vand.u32 %v46, 4294901760
  %1814 = vmatpush.msra.mxu0 %v1813
  %v1815 = vand.u32 %v45, 4294901760
  %1816 = vmatpush.msra.mxu0 %v1815
  %v1817 = vand.u32 %v44, 4294901760
  %1818 = vmatpush.msra.mxu0 %v1817
  %v1819 = vand.u32 %v43, 4294901760
  %1820 = vmatpush.msra.mxu0 %v1819
  %v1821 = vand.u32 %v1141, 4294901760
  %1822 = vmatmul.f32.gmra.mxu0 %v1821
  %v1823 = vpop.f32.mrf.mxu0
  %v1824 = vadd.f32 %v1787, %v1823
  %1825 = vdwg.mxu0
  %v1826 = vmul.f32 %v1824, 0.14285715
  %v1827 = vrsqrt.pop %v1826
  %v1828 = vmul.f32 %v1827, %v1826
  %v1829 = vmul.f32 %v1828, %v1827
  %v1830 = vmul.f32 0.5, %v1829
  %v1831 = vsub.f32 1.5, %v1830
  %v1832 = vmul.f32 %v1827, %v1831
  %v1833 = vmul.f32 %v1826, %v1832
  %vm1834 = vcmp.eq.f32.partialorder %v1826, inf
  %v1835 = vsel %vm1834, %v1826, %v1833
  %vm1836 = vcmp.eq.f32.partialorder %v1826, 0.0
  %v1837 = vand.u32 %v1826, 2147483648
  %v1838 = vsel %vm1836, %v1837, %v1835
  %v1839 = vld [vmem:[%s3] sm:$0xff]
  %v1840 = vld [vmem:[%s3 + $0x8] sm:$0xff]
  %v1841 = vld [vmem:[%s3 + $0x10] sm:$0xff]
  %v1842 = vld [vmem:[%s3 + $0x18] sm:$0xff]
  %1843 = vmatpush.msra.mxu0 0.0
  %1844 = vmatpush.msra.mxu0 0.0
  %1845 = vmatpush.msra.mxu0 0.0
  %1846 = vmatpush.msra.mxu0 0.0
  %1847 = vmatpush.msra.mxu0 0.0
  %1848 = vmatpush.msra.mxu0 0.0
  %1849 = vmatpush.msra.mxu0 0.0
  %1850 = vmatpush.msra.mxu0 0.0
  %1851 = vmatpush.msra.mxu0 0.0
  %1852 = vmatpush.msra.mxu0 0.0
  %1853 = vmatpush.msra.mxu0 0.0
  %1854 = vmatpush.msra.mxu0 0.0
  %v1855 = vand.u32 %v1842, 4294901760
  %1856 = vmatpush.msra.mxu0 %v1855
  %v1857 = vand.u32 %v1841, 4294901760
  %1858 = vmatpush.msra.mxu0 %v1857
  %v1859 = vand.u32 %v1840, 4294901760
  %1860 = vmatpush.msra.mxu0 %v1859
  %v1861 = vand.u32 %v1839, 4294901760
  %1862 = vmatpush.msra.mxu0 %v1861
  %v1863 = vand.u32 %v758, 4294901760
  %v1864 = vsub.f32 %v758, %v1863
  %v1865 = vand.u32 %v1864, 4294901760
  %v1866 = vsub.f32 %v1864, %v1865
  %v1867 = vand.u32 %v1866, 4294901760
  %1868 = vmatmul.f32.gmra.mxu0 %v1867
  %v1869 = vpop.f32.mrf.mxu0
  %v1870 = vadd.f32 0.0, %v1869
  %1871 = vdwg.mxu0
  %1872 = vmatpush.msra.mxu0 0.0
  %1873 = vmatpush.msra.mxu0 0.0
  %1874 = vmatpush.msra.mxu0 0.0
  %1875 = vmatpush.msra.mxu0 0.0
  %1876 = vmatpush.msra.mxu0 0.0
  %1877 = vmatpush.msra.mxu0 0.0
  %1878 = vmatpush.msra.mxu0 0.0
  %1879 = vmatpush.msra.mxu0 0.0
  %1880 = vmatpush.msra.mxu0 0.0
  %1881 = vmatpush.msra.mxu0 0.0
  %1882 = vmatpush.msra.mxu0 0.0
  %1883 = vmatpush.msra.mxu0 0.0
  %v1884 = vand.u32 %v1842, 4294901760
  %v1885 = vsub.f32 %v1842, %v1884
  %v1886 = vand.u32 %v1885, 4294901760
  %v1887 = vsub.f32 %v1885, %v1886
  %v1888 = vand.u32 %v1887, 4294901760
  %1889 = vmatpush.msra.mxu0 %v1888
  %v1890 = vand.u32 %v1841, 4294901760
  %v1891 = vsub.f32 %v1841, %v1890
  %v1892 = vand.u32 %v1891, 4294901760
  %v1893 = vsub.f32 %v1891, %v1892
  %v1894 = vand.u32 %v1893, 4294901760
  %1895 = vmatpush.msra.mxu0 %v1894
  %v1896 = vand.u32 %v1840, 4294901760
  %v1897 = vsub.f32 %v1840, %v1896
  %v1898 = vand.u32 %v1897, 4294901760
  %v1899 = vsub.f32 %v1897, %v1898
  %v1900 = vand.u32 %v1899, 4294901760
  %1901 = vmatpush.msra.mxu0 %v1900
  %v1902 = vand.u32 %v1839, 4294901760
  %v1903 = vsub.f32 %v1839, %v1902
  %v1904 = vand.u32 %v1903, 4294901760
  %v1905 = vsub.f32 %v1903, %v1904
  %v1906 = vand.u32 %v1905, 4294901760
  %1907 = vmatpush.msra.mxu0 %v1906
  %v1908 = vand.u32 %v758, 4294901760
  %1909 = vmatmul.f32.gmra.mxu0 %v1908
  %v1910 = vpop.f32.mrf.mxu0
  %v1911 = vadd.f32 %v1870, %v1910
  %1912 = vdwg.mxu0
  %1913 = vmatpush.msra.mxu0 0.0
  %1914 = vmatpush.msra.mxu0 0.0
  %1915 = vmatpush.msra.mxu0 0.0
  %1916 = vmatpush.msra.mxu0 0.0
  %1917 = vmatpush.msra.mxu0 0.0
  %1918 = vmatpush.msra.mxu0 0.0
  %1919 = vmatpush.msra.mxu0 0.0
  %1920 = vmatpush.msra.mxu0 0.0
  %1921 = vmatpush.msra.mxu0 0.0
  %1922 = vmatpush.msra.mxu0 0.0
  %1923 = vmatpush.msra.mxu0 0.0
  %1924 = vmatpush.msra.mxu0 0.0
  %v1925 = vand.u32 %v1842, 4294901760
  %v1926 = vsub.f32 %v1842, %v1925
  %1927 = vmatpush.msra.mxu0 %v1926
  %v1928 = vand.u32 %v1841, 4294901760
  %v1929 = vsub.f32 %v1841, %v1928
  %1930 = vmatpush.msra.mxu0 %v1929
  %v1931 = vand.u32 %v1840, 4294901760
  %v1932 = vsub.f32 %v1840, %v1931
  %1933 = vmatpush.msra.mxu0 %v1932
  %v1934 = vand.u32 %v1839, 4294901760
  %v1935 = vsub.f32 %v1839, %v1934
  %1936 = vmatpush.msra.mxu0 %v1935
  %v1937 = vand.u32 %v758, 4294901760
  %v1938 = vsub.f32 %v758, %v1937
  %1939 = vmatmul.f32.gmra.mxu0 %v1938
  %v1940 = vpop.f32.mrf.mxu0
  %v1941 = vadd.f32 %v1911, %v1940
  %1942 = vdwg.mxu0
  %1943 = vmatpush.msra.mxu0 0.0
  %1944 = vmatpush.msra.mxu0 0.0
  %1945 = vmatpush.msra.mxu0 0.0
  %1946 = vmatpush.msra.mxu0 0.0
  %1947 = vmatpush.msra.mxu0 0.0
  %1948 = vmatpush.msra.mxu0 0.0
  %1949 = vmatpush.msra.mxu0 0.0
  %1950 = vmatpush.msra.mxu0 0.0
  %1951 = vmatpush.msra.mxu0 0.0
  %1952 = vmatpush.msra.mxu0 0.0
  %1953 = vmatpush.msra.mxu0 0.0
  %1954 = vmatpush.msra.mxu0 0.0
  %v1955 = vand.u32 %v1842, 4294901760
  %1956 = vmatpush.msra.mxu0 %v1955
  %v1957 = vand.u32 %v1841, 4294901760
  %1958 = vmatpush.msra.mxu0 %v1957
  %v1959 = vand.u32 %v1840, 4294901760
  %1960 = vmatpush.msra.mxu0 %v1959
  %v1961 = vand.u32 %v1839, 4294901760
  %1962 = vmatpush.msra.mxu0 %v1961
  %v1963 = vand.u32 %v758, 4294901760
  %v1964 = vsub.f32 %v758, %v1963
  %v1965 = vand.u32 %v1964, 4294901760
  %1966 = vmatmul.f32.gmra.mxu0 %v1965
  %v1967 = vpop.f32.mrf.mxu0
  %v1968 = vadd.f32 %v1941, %v1967
  %1969 = vdwg.mxu0
  %1970 = vmatpush.msra.mxu0 0.0
  %1971 = vmatpush.msra.mxu0 0.0
  %1972 = vmatpush.msra.mxu0 0.0
  %1973 = vmatpush.msra.mxu0 0.0
  %1974 = vmatpush.msra.mxu0 0.0
  %1975 = vmatpush.msra.mxu0 0.0
  %1976 = vmatpush.msra.mxu0 0.0
  %1977 = vmatpush.msra.mxu0 0.0
  %1978 = vmatpush.msra.mxu0 0.0
  %1979 = vmatpush.msra.mxu0 0.0
  %1980 = vmatpush.msra.mxu0 0.0
  %1981 = vmatpush.msra.mxu0 0.0
  %v1982 = vand.u32 %v1842, 4294901760
  %v1983 = vsub.f32 %v1842, %v1982
  %v1984 = vand.u32 %v1983, 4294901760
  %1985 = vmatpush.msra.mxu0 %v1984
  %v1986 = vand.u32 %v1841, 4294901760
  %v1987 = vsub.f32 %v1841, %v1986
  %v1988 = vand.u32 %v1987, 4294901760
  %1989 = vmatpush.msra.mxu0 %v1988
  %v1990 = vand.u32 %v1840, 4294901760
  %v1991 = vsub.f32 %v1840, %v1990
  %v1992 = vand.u32 %v1991, 4294901760
  %1993 = vmatpush.msra.mxu0 %v1992
  %v1994 = vand.u32 %v1839, 4294901760
  %v1995 = vsub.f32 %v1839, %v1994
  %v1996 = vand.u32 %v1995, 4294901760
  %1997 = vmatpush.msra.mxu0 %v1996
  %v1998 = vand.u32 %v758, 4294901760
  %1999 = vmatmul.f32.gmra.mxu0 %v1998
  %v2000 = vpop.f32.mrf.mxu0
  %v2001 = vadd.f32 %v1968, %v2000
  %2002 = vdwg.mxu0
  %2003 = vmatpush.msra.mxu0 0.0
  %2004 = vmatpush.msra.mxu0 0.0
  %2005 = vmatpush.msra.mxu0 0.0
  %2006 = vmatpush.msra.mxu0 0.0
  %2007 = vmatpush.msra.mxu0 0.0
  %2008 = vmatpush.msra.mxu0 0.0
  %2009 = vmatpush.msra.mxu0 0.0
  %2010 = vmatpush.msra.mxu0 0.0
  %2011 = vmatpush.msra.mxu0 0.0
  %2012 = vmatpush.msra.mxu0 0.0
  %2013 = vmatpush.msra.mxu0 0.0
  %2014 = vmatpush.msra.mxu0 0.0
  %v2015 = vand.u32 %v1842, 4294901760
  %2016 = vmatpush.msra.mxu0 %v2015
  %v2017 = vand.u32 %v1841, 4294901760
  %2018 = vmatpush.msra.mxu0 %v2017
  %v2019 = vand.u32 %v1840, 4294901760
  %2020 = vmatpush.msra.mxu0 %v2019
  %v2021 = vand.u32 %v1839, 4294901760
  %2022 = vmatpush.msra.mxu0 %v2021
  %v2023 = vand.u32 %v758, 4294901760
  %2024 = vmatmul.f32.gmra.mxu0 %v2023
  %v2025 = vpop.f32.mrf.mxu0
  %v2026 = vadd.f32 %v2001, %v2025
  %2027 = vdwg.mxu0
  %v2028 = vld [vmem:[%s4] sm:$0xff]
  %v2029 = vld [vmem:[%s4 + $0x8] sm:$0xff]
  %v2030 = vld [vmem:[%s4 + $0x10] sm:$0xff]
  %v2031 = vld [vmem:[%s4 + $0x18] sm:$0xff]
  %v2033 = vsel %vm756, %v1838, 0
  %2035 = vmatpush.msra.mxu0 0.0
  %2036 = vmatpush.msra.mxu0 0.0
  %2037 = vmatpush.msra.mxu0 0.0
  %2038 = vmatpush.msra.mxu0 0.0
  %2039 = vmatpush.msra.mxu0 0.0
  %2040 = vmatpush.msra.mxu0 0.0
  %2041 = vmatpush.msra.mxu0 0.0
  %2042 = vmatpush.msra.mxu0 0.0
  %2043 = vmatpush.msra.mxu0 0.0
  %2044 = vmatpush.msra.mxu0 0.0
  %2045 = vmatpush.msra.mxu0 0.0
  %2046 = vmatpush.msra.mxu0 0.0
  %v2047 = vand.u32 %v2031, 4294901760
  %2048 = vmatpush.msra.mxu0 %v2047
  %v2049 = vand.u32 %v2030, 4294901760
  %2050 = vmatpush.msra.mxu0 %v2049
  %v2051 = vand.u32 %v2029, 4294901760
  %2052 = vmatpush.msra.mxu0 %v2051
  %v2053 = vand.u32 %v2028, 4294901760
  %2054 = vmatpush.msra.mxu0 %v2053
  %v2055 = vand.u32 %v2033, 4294901760
  %v2056 = vsub.f32 %v2033, %v2055
  %v2057 = vand.u32 %v2056, 4294901760
  %v2058 = vsub.f32 %v2056, %v2057
  %v2059 = vand.u32 %v2058, 4294901760
  %2060 = vmatmul.f32.gmra.mxu0 %v2059
  %v2061 = vpop.f32.mrf.mxu0
  %v2062 = vadd.f32 1e-08, %v2061
  %2063 = vdwg.mxu0
  %2064 = vmatpush.msra.mxu0 0.0
  %2065 = vmatpush.msra.mxu0 0.0
  %2066 = vmatpush.msra.mxu0 0.0
  %2067 = vmatpush.msra.mxu0 0.0
  %2068 = vmatpush.msra.mxu0 0.0
  %2069 = vmatpush.msra.mxu0 0.0
  %2070 = vmatpush.msra.mxu0 0.0
  %2071 = vmatpush.msra.mxu0 0.0
  %2072 = vmatpush.msra.mxu0 0.0
  %2073 = vmatpush.msra.mxu0 0.0
  %2074 = vmatpush.msra.mxu0 0.0
  %2075 = vmatpush.msra.mxu0 0.0
  %v2076 = vand.u32 %v2031, 4294901760
  %v2077 = vsub.f32 %v2031, %v2076
  %v2078 = vand.u32 %v2077, 4294901760
  %v2079 = vsub.f32 %v2077, %v2078
  %v2080 = vand.u32 %v2079, 4294901760
  %2081 = vmatpush.msra.mxu0 %v2080
  %v2082 = vand.u32 %v2030, 4294901760
  %v2083 = vsub.f32 %v2030, %v2082
  %v2084 = vand.u32 %v2083, 4294901760
  %v2085 = vsub.f32 %v2083, %v2084
  %v2086 = vand.u32 %v2085, 4294901760
  %2087 = vmatpush.msra.mxu0 %v2086
  %v2088 = vand.u32 %v2029, 4294901760
  %v2089 = vsub.f32 %v2029, %v2088
  %v2090 = vand.u32 %v2089, 4294901760
  %v2091 = vsub.f32 %v2089, %v2090
  %v2092 = vand.u32 %v2091, 4294901760
  %2093 = vmatpush.msra.mxu0 %v2092
  %v2094 = vand.u32 %v2028, 4294901760
  %v2095 = vsub.f32 %v2028, %v2094
  %v2096 = vand.u32 %v2095, 4294901760
  %v2097 = vsub.f32 %v2095, %v2096
  %v2098 = vand.u32 %v2097, 4294901760
  %2099 = vmatpush.msra.mxu0 %v2098
  %v2100 = vand.u32 %v2033, 4294901760
  %2101 = vmatmul.f32.gmra.mxu0 %v2100
  %v2102 = vpop.f32.mrf.mxu0
  %v2103 = vadd.f32 %v2062, %v2102
  %2104 = vdwg.mxu0
  %2105 = vmatpush.msra.mxu0 0.0
  %2106 = vmatpush.msra.mxu0 0.0
  %2107 = vmatpush.msra.mxu0 0.0
  %2108 = vmatpush.msra.mxu0 0.0
  %2109 = vmatpush.msra.mxu0 0.0
  %2110 = vmatpush.msra.mxu0 0.0
  %2111 = vmatpush.msra.mxu0 0.0
  %2112 = vmatpush.msra.mxu0 0.0
  %2113 = vmatpush.msra.mxu0 0.0
  %2114 = vmatpush.msra.mxu0 0.0
  %2115 = vmatpush.msra.mxu0 0.0
  %2116 = vmatpush.msra.mxu0 0.0
  %v2117 = vand.u32 %v2031, 4294901760
  %v2118 = vsub.f32 %v2031, %v2117
  %2119 = vmatpush.msra.mxu0 %v2118
  %v2120 = vand.u32 %v2030, 4294901760
  %v2121 = vsub.f32 %v2030, %v2120
  %2122 = vmatpush.msra.mxu0 %v2121
  %v2123 = vand.u32 %v2029, 4294901760
  %v2124 = vsub.f32 %v2029, %v2123
  %2125 = vmatpush.msra.mxu0 %v2124
  %v2126 = vand.u32 %v2028, 4294901760
  %v2127 = vsub.f32 %v2028, %v2126
  %2128 = vmatpush.msra.mxu0 %v2127
  %v2129 = vand.u32 %v2033, 4294901760
  %v2130 = vsub.f32 %v2033, %v2129
  %2131 = vmatmul.f32.gmra.mxu0 %v2130
  %v2132 = vpop.f32.mrf.mxu0
  %v2133 = vadd.f32 %v2103, %v2132
  %2134 = vdwg.mxu0
  %2135 = vmatpush.msra.mxu0 0.0
  %2136 = vmatpush.msra.mxu0 0.0
  %2137 = vmatpush.msra.mxu0 0.0
  %2138 = vmatpush.msra.mxu0 0.0
  %2139 = vmatpush.msra.mxu0 0.0
  %2140 = vmatpush.msra.mxu0 0.0
  %2141 = vmatpush.msra.mxu0 0.0
  %2142 = vmatpush.msra.mxu0 0.0
  %2143 = vmatpush.msra.mxu0 0.0
  %2144 = vmatpush.msra.mxu0 0.0
  %2145 = vmatpush.msra.mxu0 0.0
  %2146 = vmatpush.msra.mxu0 0.0
  %v2147 = vand.u32 %v2031, 4294901760
  %2148 = vmatpush.msra.mxu0 %v2147
  %v2149 = vand.u32 %v2030, 4294901760
  %2150 = vmatpush.msra.mxu0 %v2149
  %v2151 = vand.u32 %v2029, 4294901760
  %2152 = vmatpush.msra.mxu0 %v2151
  %v2153 = vand.u32 %v2028, 4294901760
  %2154 = vmatpush.msra.mxu0 %v2153
  %v2155 = vand.u32 %v2033, 4294901760
  %v2156 = vsub.f32 %v2033, %v2155
  %v2157 = vand.u32 %v2156, 4294901760
  %2158 = vmatmul.f32.gmra.mxu0 %v2157
  %v2159 = vpop.f32.mrf.mxu0
  %v2160 = vadd.f32 %v2133, %v2159
  %2161 = vdwg.mxu0
  %2162 = vmatpush.msra.mxu0 0.0
  %2163 = vmatpush.msra.mxu0 0.0
  %2164 = vmatpush.msra.mxu0 0.0
  %2165 = vmatpush.msra.mxu0 0.0
  %2166 = vmatpush.msra.mxu0 0.0
  %2167 = vmatpush.msra.mxu0 0.0
  %2168 = vmatpush.msra.mxu0 0.0
  %2169 = vmatpush.msra.mxu0 0.0
  %2170 = vmatpush.msra.mxu0 0.0
  %2171 = vmatpush.msra.mxu0 0.0
  %2172 = vmatpush.msra.mxu0 0.0
  %2173 = vmatpush.msra.mxu0 0.0
  %v2174 = vand.u32 %v2031, 4294901760
  %v2175 = vsub.f32 %v2031, %v2174
  %v2176 = vand.u32 %v2175, 4294901760
  %2177 = vmatpush.msra.mxu0 %v2176
  %v2178 = vand.u32 %v2030, 4294901760
  %v2179 = vsub.f32 %v2030, %v2178
  %v2180 = vand.u32 %v2179, 4294901760
  %2181 = vmatpush.msra.mxu0 %v2180
  %v2182 = vand.u32 %v2029, 4294901760
  %v2183 = vsub.f32 %v2029, %v2182
  %v2184 = vand.u32 %v2183, 4294901760
  %2185 = vmatpush.msra.mxu0 %v2184
  %v2186 = vand.u32 %v2028, 4294901760
  %v2187 = vsub.f32 %v2028, %v2186
  %v2188 = vand.u32 %v2187, 4294901760
  %2189 = vmatpush.msra.mxu0 %v2188
  %v2190 = vand.u32 %v2033, 4294901760
  %2191 = vmatmul.f32.gmra.mxu0 %v2190
  %v2192 = vpop.f32.mrf.mxu0
  %v2193 = vadd.f32 %v2160, %v2192
  %2194 = vdwg.mxu0
  %2195 = vmatpush.msra.mxu0 0.0
  %2196 = vmatpush.msra.mxu0 0.0
  %2197 = vmatpush.msra.mxu0 0.0
  %2198 = vmatpush.msra.mxu0 0.0
  %2199 = vmatpush.msra.mxu0 0.0
  %2200 = vmatpush.msra.mxu0 0.0
  %2201 = vmatpush.msra.mxu0 0.0
  %2202 = vmatpush.msra.mxu0 0.0
  %2203 = vmatpush.msra.mxu0 0.0
  %2204 = vmatpush.msra.mxu0 0.0
  %2205 = vmatpush.msra.mxu0 0.0
  %2206 = vmatpush.msra.mxu0 0.0
  %v2207 = vand.u32 %v2031, 4294901760
  %2208 = vmatpush.msra.mxu0 %v2207
  %v2209 = vand.u32 %v2030, 4294901760
  %2210 = vmatpush.msra.mxu0 %v2209
  %v2211 = vand.u32 %v2029, 4294901760
  %2212 = vmatpush.msra.mxu0 %v2211
  %v2213 = vand.u32 %v2028, 4294901760
  %2214 = vmatpush.msra.mxu0 %v2213
  %v2215 = vand.u32 %v2033, 4294901760
  %2216 = vmatmul.f32.gmra.mxu0 %v2215
  %v2217 = vpop.f32.mrf.mxu0
  %v2218 = vadd.f32 %v2193, %v2217
  %2219 = vdwg.mxu0
  %v2220 = vrcp.pop %v2218
  %v2221 = vmul.f32 %v2218, %v2220
  %v2222 = vsub.f32 1.0, %v2221
  %v2223 = vmul.f32 %v2220, %v2222
  %v2224 = vadd.f32 %v2220, %v2223
  %vm2225 = vweird.f32 %v2218
  %vm2226 = vweird.f32 %v2220
  %vm2227 = vmor %vm2225, %vm2226
  %v2228 = vsel %vm2227, %v2220, %v2224
  %v2229 = vand.u32 2147483647, %v2218
  %vm2230 = vcmp.eq.f32.partialorder %v2229, 8.507059e+37
  %v2231 = vand.u32 %v2218, 2147483648
  %v2232 = vor.u32 1.1754944e-38, %v2231
  %v2233 = vsel %vm2230, %v2232, %v2228
  %v2234 = vmul.f32 1.0, %v2233
  %v2235 = vsub.f32 %v755, %v2026
  %v2236 = vmul.f32 %v2235, %v2234
  %v2237 = vld [vmem:[%s5] sm:$0xff]
  %v2238 = vld [vmem:[%s5 + $0x8] sm:$0xff]
  %v2239 = vld [vmem:[%s5 + $0x10] sm:$0xff]
  %v2240 = vld [vmem:[%s5 + $0x18] sm:$0xff]
  %v2241 = vld [vmem:[%s6] sm:$0x1]
  %v2243 = vperm.slane %v2241, 0
  %v2246 = vsel %vm756, %v2236, 0
  %2248 = vmatpush.msra.mxu0 0.0
  %2249 = vmatpush.msra.mxu0 0.0
  %2250 = vmatpush.msra.mxu0 0.0
  %2251 = vmatpush.msra.mxu0 0.0
  %2252 = vmatpush.msra.mxu0 0.0
  %2253 = vmatpush.msra.mxu0 0.0
  %2254 = vmatpush.msra.mxu0 0.0
  %2255 = vmatpush.msra.mxu0 0.0
  %2256 = vmatpush.msra.mxu0 0.0
  %2257 = vmatpush.msra.mxu0 0.0
  %2258 = vmatpush.msra.mxu0 0.0
  %2259 = vmatpush.msra.mxu0 0.0
  %v2260 = vand.u32 %v2240, 4294901760
  %2261 = vmatpush.msra.mxu0 %v2260
  %v2262 = vand.u32 %v2239, 4294901760
  %2263 = vmatpush.msra.mxu0 %v2262
  %v2264 = vand.u32 %v2238, 4294901760
  %2265 = vmatpush.msra.mxu0 %v2264
  %v2266 = vand.u32 %v2237, 4294901760
  %2267 = vmatpush.msra.mxu0 %v2266
  %v2268 = vand.u32 %v2246, 4294901760
  %v2269 = vsub.f32 %v2246, %v2268
  %v2270 = vand.u32 %v2269, 4294901760
  %v2271 = vsub.f32 %v2269, %v2270
  %v2272 = vand.u32 %v2271, 4294901760
  %2273 = vmatmul.f32.gmra.mxu0 %v2272
  %v2274 = vpop.f32.mrf.mxu0
  %v2275 = vadd.f32 %v2243, %v2274
  %2276 = vdwg.mxu0
  %2277 = vmatpush.msra.mxu0 0.0
  %2278 = vmatpush.msra.mxu0 0.0
  %2279 = vmatpush.msra.mxu0 0.0
  %2280 = vmatpush.msra.mxu0 0.0
  %2281 = vmatpush.msra.mxu0 0.0
  %2282 = vmatpush.msra.mxu0 0.0
  %2283 = vmatpush.msra.mxu0 0.0
  %2284 = vmatpush.msra.mxu0 0.0
  %2285 = vmatpush.msra.mxu0 0.0
  %2286 = vmatpush.msra.mxu0 0.0
  %2287 = vmatpush.msra.mxu0 0.0
  %2288 = vmatpush.msra.mxu0 0.0
  %v2289 = vand.u32 %v2240, 4294901760
  %v2290 = vsub.f32 %v2240, %v2289
  %v2291 = vand.u32 %v2290, 4294901760
  %v2292 = vsub.f32 %v2290, %v2291
  %v2293 = vand.u32 %v2292, 4294901760
  %2294 = vmatpush.msra.mxu0 %v2293
  %v2295 = vand.u32 %v2239, 4294901760
  %v2296 = vsub.f32 %v2239, %v2295
  %v2297 = vand.u32 %v2296, 4294901760
  %v2298 = vsub.f32 %v2296, %v2297
  %v2299 = vand.u32 %v2298, 4294901760
  %2300 = vmatpush.msra.mxu0 %v2299
  %v2301 = vand.u32 %v2238, 4294901760
  %v2302 = vsub.f32 %v2238, %v2301
  %v2303 = vand.u32 %v2302, 4294901760
  %v2304 = vsub.f32 %v2302, %v2303
  %v2305 = vand.u32 %v2304, 4294901760
  %2306 = vmatpush.msra.mxu0 %v2305
  %v2307 = vand.u32 %v2237, 4294901760
  %v2308 = vsub.f32 %v2237, %v2307
  %v2309 = vand.u32 %v2308, 4294901760
  %v2310 = vsub.f32 %v2308, %v2309
  %v2311 = vand.u32 %v2310, 4294901760
  %2312 = vmatpush.msra.mxu0 %v2311
  %v2313 = vand.u32 %v2246, 4294901760
  %2314 = vmatmul.f32.gmra.mxu0 %v2313
  %v2315 = vpop.f32.mrf.mxu0
  %v2316 = vadd.f32 %v2275, %v2315
  %2317 = vdwg.mxu0
  %2318 = vmatpush.msra.mxu0 0.0
  %2319 = vmatpush.msra.mxu0 0.0
  %2320 = vmatpush.msra.mxu0 0.0
  %2321 = vmatpush.msra.mxu0 0.0
  %2322 = vmatpush.msra.mxu0 0.0
  %2323 = vmatpush.msra.mxu0 0.0
  %2324 = vmatpush.msra.mxu0 0.0
  %2325 = vmatpush.msra.mxu0 0.0
  %2326 = vmatpush.msra.mxu0 0.0
  %2327 = vmatpush.msra.mxu0 0.0
  %2328 = vmatpush.msra.mxu0 0.0
  %2329 = vmatpush.msra.mxu0 0.0
  %v2330 = vand.u32 %v2240, 4294901760
  %v2331 = vsub.f32 %v2240, %v2330
  %2332 = vmatpush.msra.mxu0 %v2331
  %v2333 = vand.u32 %v2239, 4294901760
  %v2334 = vsub.f32 %v2239, %v2333
  %2335 = vmatpush.msra.mxu0 %v2334
  %v2336 = vand.u32 %v2238, 4294901760
  %v2337 = vsub.f32 %v2238, %v2336
  %2338 = vmatpush.msra.mxu0 %v2337
  %v2339 = vand.u32 %v2237, 4294901760
  %v2340 = vsub.f32 %v2237, %v2339
  %2341 = vmatpush.msra.mxu0 %v2340
  %v2342 = vand.u32 %v2246, 4294901760
  %v2343 = vsub.f32 %v2246, %v2342
  %2344 = vmatmul.f32.gmra.mxu0 %v2343
  %v2345 = vpop.f32.mrf.mxu0
  %v2346 = vadd.f32 %v2316, %v2345
  %2347 = vdwg.mxu0
  %2348 = vmatpush.msra.mxu0 0.0
  %2349 = vmatpush.msra.mxu0 0.0
  %2350 = vmatpush.msra.mxu0 0.0
  %2351 = vmatpush.msra.mxu0 0.0
  %2352 = vmatpush.msra.mxu0 0.0
  %2353 = vmatpush.msra.mxu0 0.0
  %2354 = vmatpush.msra.mxu0 0.0
  %2355 = vmatpush.msra.mxu0 0.0
  %2356 = vmatpush.msra.mxu0 0.0
  %2357 = vmatpush.msra.mxu0 0.0
  %2358 = vmatpush.msra.mxu0 0.0
  %2359 = vmatpush.msra.mxu0 0.0
  %v2360 = vand.u32 %v2240, 4294901760
  %2361 = vmatpush.msra.mxu0 %v2360
  %v2362 = vand.u32 %v2239, 4294901760
  %2363 = vmatpush.msra.mxu0 %v2362
  %v2364 = vand.u32 %v2238, 4294901760
  %2365 = vmatpush.msra.mxu0 %v2364
  %v2366 = vand.u32 %v2237, 4294901760
  %2367 = vmatpush.msra.mxu0 %v2366
  %v2368 = vand.u32 %v2246, 4294901760
  %v2369 = vsub.f32 %v2246, %v2368
  %v2370 = vand.u32 %v2369, 4294901760
  %2371 = vmatmul.f32.gmra.mxu0 %v2370
  %v2372 = vpop.f32.mrf.mxu0
  %v2373 = vadd.f32 %v2346, %v2372
  %2374 = vdwg.mxu0
  %2375 = vmatpush.msra.mxu0 0.0
  %2376 = vmatpush.msra.mxu0 0.0
  %2377 = vmatpush.msra.mxu0 0.0
  %2378 = vmatpush.msra.mxu0 0.0
  %2379 = vmatpush.msra.mxu0 0.0
  %2380 = vmatpush.msra.mxu0 0.0
  %2381 = vmatpush.msra.mxu0 0.0
  %2382 = vmatpush.msra.mxu0 0.0
  %2383 = vmatpush.msra.mxu0 0.0
  %2384 = vmatpush.msra.mxu0 0.0
  %2385 = vmatpush.msra.mxu0 0.0
  %2386 = vmatpush.msra.mxu0 0.0
  %v2387 = vand.u32 %v2240, 4294901760
  %v2388 = vsub.f32 %v2240, %v2387
  %v2389 = vand.u32 %v2388, 4294901760
  %2390 = vmatpush.msra.mxu0 %v2389
  %v2391 = vand.u32 %v2239, 4294901760
  %v2392 = vsub.f32 %v2239, %v2391
  %v2393 = vand.u32 %v2392, 4294901760
  %2394 = vmatpush.msra.mxu0 %v2393
  %v2395 = vand.u32 %v2238, 4294901760
  %v2396 = vsub.f32 %v2238, %v2395
  %v2397 = vand.u32 %v2396, 4294901760
  %2398 = vmatpush.msra.mxu0 %v2397
  %v2399 = vand.u32 %v2237, 4294901760
  %v2400 = vsub.f32 %v2237, %v2399
  %v2401 = vand.u32 %v2400, 4294901760
  %2402 = vmatpush.msra.mxu0 %v2401
  %v2403 = vand.u32 %v2246, 4294901760
  %2404 = vmatmul.f32.gmra.mxu0 %v2403
  %v2405 = vpop.f32.mrf.mxu0
  %v2406 = vadd.f32 %v2373, %v2405
  %2407 = vdwg.mxu0
  %2408 = vmatpush.msra.mxu0 0.0
  %2409 = vmatpush.msra.mxu0 0.0
  %2410 = vmatpush.msra.mxu0 0.0
  %2411 = vmatpush.msra.mxu0 0.0
  %2412 = vmatpush.msra.mxu0 0.0
  %2413 = vmatpush.msra.mxu0 0.0
  %2414 = vmatpush.msra.mxu0 0.0
  %2415 = vmatpush.msra.mxu0 0.0
  %2416 = vmatpush.msra.mxu0 0.0
  %2417 = vmatpush.msra.mxu0 0.0
  %2418 = vmatpush.msra.mxu0 0.0
  %2419 = vmatpush.msra.mxu0 0.0
  %v2420 = vand.u32 %v2240, 4294901760
  %2421 = vmatpush.msra.mxu0 %v2420
  %v2422 = vand.u32 %v2239, 4294901760
  %2423 = vmatpush.msra.mxu0 %v2422
  %v2424 = vand.u32 %v2238, 4294901760
  %2425 = vmatpush.msra.mxu0 %v2424
  %v2426 = vand.u32 %v2237, 4294901760
  %2427 = vmatpush.msra.mxu0 %v2426
  %v2428 = vand.u32 %v2246, 4294901760
  %2429 = vmatmul.f32.gmra.mxu0 %v2428
  %v2430 = vpop.f32.mrf.mxu0
  %v2431 = vadd.f32 %v2406, %v2430
  %2432 = vdwg.mxu0
  %v2433 = vxor.u32 %v2431, 2147483648
  %v2434 = vmul.f32 %v2433, 1.442695
  %v2435 = vpow.pop %v2434
  %v2436 = vadd.f32 %v2435, 1.0
  %v2437 = vrcp.pop %v2436
  %v2438 = vmul.f32 %v2436, %v2437
  %v2439 = vsub.f32 1.0, %v2438
  %v2440 = vmul.f32 %v2437, %v2439
  %v2441 = vadd.f32 %v2437, %v2440
  %vm2442 = vweird.f32 %v2436
  %vm2443 = vweird.f32 %v2437
  %vm2444 = vmor %vm2442, %vm2443
  %v2445 = vsel %vm2444, %v2437, %v2441
  %v2446 = vand.u32 2147483647, %v2436
  %vm2447 = vcmp.eq.f32.partialorder %v2446, 8.507059e+37
  %v2448 = vand.u32 %v2436, 2147483648
  %v2449 = vor.u32 1.1754944e-38, %v2448
  %v2450 = vsel %vm2447, %v2449, %v2445
  %v2451 = vmul.f32 1.0, %v2450
  %v2452 = vmul.f32 %v2451, %v2234
  %v2454 = vsel %vm756, %v2452, 0
  %2456 = vmatpush.msra.mxu0 0.0
  %2457 = vmatpush.msra.mxu0 0.0
  %2458 = vmatpush.msra.mxu0 0.0
  %2459 = vmatpush.msra.mxu0 0.0
  %2460 = vmatpush.msra.mxu0 0.0
  %2461 = vmatpush.msra.mxu0 0.0
  %2462 = vmatpush.msra.mxu0 0.0
  %2463 = vmatpush.msra.mxu0 0.0
  %2464 = vmatpush.msra.mxu0 0.0
  %2465 = vmatpush.msra.mxu0 0.0
  %2466 = vmatpush.msra.mxu0 0.0
  %2467 = vmatpush.msra.mxu0 0.0
  %v2468 = vand.u32 %v65, 4294901760
  %2469 = vmatpush.msra.mxu0 %v2468
  %v2470 = vand.u32 %v63, 4294901760
  %2471 = vmatpush.msra.mxu0 %v2470
  %v2472 = vand.u32 %v61, 4294901760
  %2473 = vmatpush.msra.mxu0 %v2472
  %v2474 = vand.u32 %v59, 4294901760
  %2475 = vmatpush.msra.mxu0 %v2474
  %v2476 = vand.u32 %v2454, 4294901760
  %v2477 = vsub.f32 %v2454, %v2476
  %v2478 = vand.u32 %v2477, 4294901760
  %v2479 = vsub.f32 %v2477, %v2478
  %v2480 = vand.u32 %v2479, 4294901760
  %2481 = vmatmul.f32.gmra.mxu0 %v2480
  %v2482 = vpop.f32.mrf.mxu0
  %v2483 = vadd.f32 0.0, %v2482
  %2484 = vdwg.mxu0
  %2485 = vmatpush.msra.mxu0 0.0
  %2486 = vmatpush.msra.mxu0 0.0
  %2487 = vmatpush.msra.mxu0 0.0
  %2488 = vmatpush.msra.mxu0 0.0
  %2489 = vmatpush.msra.mxu0 0.0
  %2490 = vmatpush.msra.mxu0 0.0
  %2491 = vmatpush.msra.mxu0 0.0
  %2492 = vmatpush.msra.mxu0 0.0
  %2493 = vmatpush.msra.mxu0 0.0
  %2494 = vmatpush.msra.mxu0 0.0
  %2495 = vmatpush.msra.mxu0 0.0
  %2496 = vmatpush.msra.mxu0 0.0
  %v2497 = vand.u32 %v65, 4294901760
  %v2498 = vsub.f32 %v65, %v2497
  %v2499 = vand.u32 %v2498, 4294901760
  %v2500 = vsub.f32 %v2498, %v2499
  %v2501 = vand.u32 %v2500, 4294901760
  %2502 = vmatpush.msra.mxu0 %v2501
  %v2503 = vand.u32 %v63, 4294901760
  %v2504 = vsub.f32 %v63, %v2503
  %v2505 = vand.u32 %v2504, 4294901760
  %v2506 = vsub.f32 %v2504, %v2505
  %v2507 = vand.u32 %v2506, 4294901760
  %2508 = vmatpush.msra.mxu0 %v2507
  %v2509 = vand.u32 %v61, 4294901760
  %v2510 = vsub.f32 %v61, %v2509
  %v2511 = vand.u32 %v2510, 4294901760
  %v2512 = vsub.f32 %v2510, %v2511
  %v2513 = vand.u32 %v2512, 4294901760
  %2514 = vmatpush.msra.mxu0 %v2513
  %v2515 = vand.u32 %v59, 4294901760
  %v2516 = vsub.f32 %v59, %v2515
  %v2517 = vand.u32 %v2516, 4294901760
  %v2518 = vsub.f32 %v2516, %v2517
  %v2519 = vand.u32 %v2518, 4294901760
  %2520 = vmatpush.msra.mxu0 %v2519
  %v2521 = vand.u32 %v2454, 4294901760
  %2522 = vmatmul.f32.gmra.mxu0 %v2521
  %v2523 = vpop.f32.mrf.mxu0
  %v2524 = vadd.f32 %v2483, %v2523
  %2525 = vdwg.mxu0
  %2526 = vmatpush.msra.mxu0 0.0
  %2527 = vmatpush.msra.mxu0 0.0
  %2528 = vmatpush.msra.mxu0 0.0
  %2529 = vmatpush.msra.mxu0 0.0
  %2530 = vmatpush.msra.mxu0 0.0
  %2531 = vmatpush.msra.mxu0 0.0
  %2532 = vmatpush.msra.mxu0 0.0
  %2533 = vmatpush.msra.mxu0 0.0
  %2534 = vmatpush.msra.mxu0 0.0
  %2535 = vmatpush.msra.mxu0 0.0
  %2536 = vmatpush.msra.mxu0 0.0
  %2537 = vmatpush.msra.mxu0 0.0
  %v2538 = vand.u32 %v65, 4294901760
  %v2539 = vsub.f32 %v65, %v2538
  %2540 = vmatpush.msra.mxu0 %v2539
  %v2541 = vand.u32 %v63, 4294901760
  %v2542 = vsub.f32 %v63, %v2541
  %2543 = vmatpush.msra.mxu0 %v2542
  %v2544 = vand.u32 %v61, 4294901760
  %v2545 = vsub.f32 %v61, %v2544
  %2546 = vmatpush.msra.mxu0 %v2545
  %v2547 = vand.u32 %v59, 4294901760
  %v2548 = vsub.f32 %v59, %v2547
  %2549 = vmatpush.msra.mxu0 %v2548
  %v2550 = vand.u32 %v2454, 4294901760
  %v2551 = vsub.f32 %v2454, %v2550
  %2552 = vmatmul.f32.gmra.mxu0 %v2551
  %v2553 = vpop.f32.mrf.mxu0
  %v2554 = vadd.f32 %v2524, %v2553
  %2555 = vdwg.mxu0
  %2556 = vmatpush.msra.mxu0 0.0
  %2557 = vmatpush.msra.mxu0 0.0
  %2558 = vmatpush.msra.mxu0 0.0
  %2559 = vmatpush.msra.mxu0 0.0
  %2560 = vmatpush.msra.mxu0 0.0
  %2561 = vmatpush.msra.mxu0 0.0
  %2562 = vmatpush.msra.mxu0 0.0
  %2563 = vmatpush.msra.mxu0 0.0
  %2564 = vmatpush.msra.mxu0 0.0
  %2565 = vmatpush.msra.mxu0 0.0
  %2566 = vmatpush.msra.mxu0 0.0
  %2567 = vmatpush.msra.mxu0 0.0
  %v2568 = vand.u32 %v65, 4294901760
  %2569 = vmatpush.msra.mxu0 %v2568
  %v2570 = vand.u32 %v63, 4294901760
  %2571 = vmatpush.msra.mxu0 %v2570
  %v2572 = vand.u32 %v61, 4294901760
  %2573 = vmatpush.msra.mxu0 %v2572
  %v2574 = vand.u32 %v59, 4294901760
  %2575 = vmatpush.msra.mxu0 %v2574
  %v2576 = vand.u32 %v2454, 4294901760
  %v2577 = vsub.f32 %v2454, %v2576
  %v2578 = vand.u32 %v2577, 4294901760
  %2579 = vmatmul.f32.gmra.mxu0 %v2578
  %v2580 = vpop.f32.mrf.mxu0
  %v2581 = vadd.f32 %v2554, %v2580
  %2582 = vdwg.mxu0
  %2583 = vmatpush.msra.mxu0 0.0
  %2584 = vmatpush.msra.mxu0 0.0
  %2585 = vmatpush.msra.mxu0 0.0
  %2586 = vmatpush.msra.mxu0 0.0
  %2587 = vmatpush.msra.mxu0 0.0
  %2588 = vmatpush.msra.mxu0 0.0
  %2589 = vmatpush.msra.mxu0 0.0
  %2590 = vmatpush.msra.mxu0 0.0
  %2591 = vmatpush.msra.mxu0 0.0
  %2592 = vmatpush.msra.mxu0 0.0
  %2593 = vmatpush.msra.mxu0 0.0
  %2594 = vmatpush.msra.mxu0 0.0
  %v2595 = vand.u32 %v65, 4294901760
  %v2596 = vsub.f32 %v65, %v2595
  %v2597 = vand.u32 %v2596, 4294901760
  %2598 = vmatpush.msra.mxu0 %v2597
  %v2599 = vand.u32 %v63, 4294901760
  %v2600 = vsub.f32 %v63, %v2599
  %v2601 = vand.u32 %v2600, 4294901760
  %2602 = vmatpush.msra.mxu0 %v2601
  %v2603 = vand.u32 %v61, 4294901760
  %v2604 = vsub.f32 %v61, %v2603
  %v2605 = vand.u32 %v2604, 4294901760
  %2606 = vmatpush.msra.mxu0 %v2605
  %v2607 = vand.u32 %v59, 4294901760
  %v2608 = vsub.f32 %v59, %v2607
  %v2609 = vand.u32 %v2608, 4294901760
  %2610 = vmatpush.msra.mxu0 %v2609
  %v2611 = vand.u32 %v2454, 4294901760
  %2612 = vmatmul.f32.gmra.mxu0 %v2611
  %v2613 = vpop.f32.mrf.mxu0
  %v2614 = vadd.f32 %v2581, %v2613
  %2615 = vdwg.mxu0
  %2616 = vmatpush.msra.mxu0 0.0
  %2617 = vmatpush.msra.mxu0 0.0
  %2618 = vmatpush.msra.mxu0 0.0
  %2619 = vmatpush.msra.mxu0 0.0
  %2620 = vmatpush.msra.mxu0 0.0
  %2621 = vmatpush.msra.mxu0 0.0
  %2622 = vmatpush.msra.mxu0 0.0
  %2623 = vmatpush.msra.mxu0 0.0
  %2624 = vmatpush.msra.mxu0 0.0
  %2625 = vmatpush.msra.mxu0 0.0
  %2626 = vmatpush.msra.mxu0 0.0
  %2627 = vmatpush.msra.mxu0 0.0
  %v2628 = vand.u32 %v65, 4294901760
  %2629 = vmatpush.msra.mxu0 %v2628
  %v2630 = vand.u32 %v63, 4294901760
  %2631 = vmatpush.msra.mxu0 %v2630
  %v2632 = vand.u32 %v61, 4294901760
  %2633 = vmatpush.msra.mxu0 %v2632
  %v2634 = vand.u32 %v59, 4294901760
  %2635 = vmatpush.msra.mxu0 %v2634
  %v2636 = vand.u32 %v2454, 4294901760
  %2637 = vmatmul.f32.gmra.mxu0 %v2636
  %v2638 = vpop.f32.mrf.mxu0
  %v2639 = vadd.f32 %v2614, %v2638
  %2640 = vdwg.mxu0
  %2641 = vmatpush.msra.mxu0 0.0
  %2642 = vmatpush.msra.mxu0 0.0
  %2643 = vmatpush.msra.mxu0 0.0
  %2644 = vmatpush.msra.mxu0 0.0
  %2645 = vmatpush.msra.mxu0 0.0
  %2646 = vmatpush.msra.mxu0 0.0
  %2647 = vmatpush.msra.mxu0 0.0
  %2648 = vmatpush.msra.mxu0 0.0
  %2649 = vmatpush.msra.mxu0 0.0
  %2650 = vmatpush.msra.mxu0 0.0
  %2651 = vmatpush.msra.mxu0 0.0
  %2652 = vmatpush.msra.mxu0 0.0
  %v2653 = vand.u32 %v66, 4294901760
  %2654 = vmatpush.msra.mxu0 %v2653
  %v2655 = vand.u32 %v64, 4294901760
  %2656 = vmatpush.msra.mxu0 %v2655
  %v2657 = vand.u32 %v62, 4294901760
  %2658 = vmatpush.msra.mxu0 %v2657
  %v2659 = vand.u32 %v60, 4294901760
  %2660 = vmatpush.msra.mxu0 %v2659
  %v2661 = vand.u32 %v2454, 4294901760
  %v2662 = vsub.f32 %v2454, %v2661
  %v2663 = vand.u32 %v2662, 4294901760
  %v2664 = vsub.f32 %v2662, %v2663
  %v2665 = vand.u32 %v2664, 4294901760
  %2666 = vmatmul.f32.gmra.mxu0 %v2665
  %v2667 = vpop.f32.mrf.mxu0
  %v2668 = vadd.f32 0.0, %v2667
  %2669 = vdwg.mxu0
  %2670 = vmatpush.msra.mxu0 0.0
  %2671 = vmatpush.msra.mxu0 0.0
  %2672 = vmatpush.msra.mxu0 0.0
  %2673 = vmatpush.msra.mxu0 0.0
  %2674 = vmatpush.msra.mxu0 0.0
  %2675 = vmatpush.msra.mxu0 0.0
  %2676 = vmatpush.msra.mxu0 0.0
  %2677 = vmatpush.msra.mxu0 0.0
  %2678 = vmatpush.msra.mxu0 0.0
  %2679 = vmatpush.msra.mxu0 0.0
  %2680 = vmatpush.msra.mxu0 0.0
  %2681 = vmatpush.msra.mxu0 0.0
  %v2682 = vand.u32 %v66, 4294901760
  %v2683 = vsub.f32 %v66, %v2682
  %v2684 = vand.u32 %v2683, 4294901760
  %v2685 = vsub.f32 %v2683, %v2684
  %v2686 = vand.u32 %v2685, 4294901760
  %2687 = vmatpush.msra.mxu0 %v2686
  %v2688 = vand.u32 %v64, 4294901760
  %v2689 = vsub.f32 %v64, %v2688
  %v2690 = vand.u32 %v2689, 4294901760
  %v2691 = vsub.f32 %v2689, %v2690
  %v2692 = vand.u32 %v2691, 4294901760
  %2693 = vmatpush.msra.mxu0 %v2692
  %v2694 = vand.u32 %v62, 4294901760
  %v2695 = vsub.f32 %v62, %v2694
  %v2696 = vand.u32 %v2695, 4294901760
  %v2697 = vsub.f32 %v2695, %v2696
  %v2698 = vand.u32 %v2697, 4294901760
  %2699 = vmatpush.msra.mxu0 %v2698
  %v2700 = vand.u32 %v60, 4294901760
  %v2701 = vsub.f32 %v60, %v2700
  %v2702 = vand.u32 %v2701, 4294901760
  %v2703 = vsub.f32 %v2701, %v2702
  %v2704 = vand.u32 %v2703, 4294901760
  %2705 = vmatpush.msra.mxu0 %v2704
  %v2706 = vand.u32 %v2454, 4294901760
  %2707 = vmatmul.f32.gmra.mxu0 %v2706
  %v2708 = vpop.f32.mrf.mxu0
  %v2709 = vadd.f32 %v2668, %v2708
  %2710 = vdwg.mxu0
  %2711 = vmatpush.msra.mxu0 0.0
  %2712 = vmatpush.msra.mxu0 0.0
  %2713 = vmatpush.msra.mxu0 0.0
  %2714 = vmatpush.msra.mxu0 0.0
  %2715 = vmatpush.msra.mxu0 0.0
  %2716 = vmatpush.msra.mxu0 0.0
  %2717 = vmatpush.msra.mxu0 0.0
  %2718 = vmatpush.msra.mxu0 0.0
  %2719 = vmatpush.msra.mxu0 0.0
  %2720 = vmatpush.msra.mxu0 0.0
  %2721 = vmatpush.msra.mxu0 0.0
  %2722 = vmatpush.msra.mxu0 0.0
  %v2723 = vand.u32 %v66, 4294901760
  %v2724 = vsub.f32 %v66, %v2723
  %2725 = vmatpush.msra.mxu0 %v2724
  %v2726 = vand.u32 %v64, 4294901760
  %v2727 = vsub.f32 %v64, %v2726
  %2728 = vmatpush.msra.mxu0 %v2727
  %v2729 = vand.u32 %v62, 4294901760
  %v2730 = vsub.f32 %v62, %v2729
  %2731 = vmatpush.msra.mxu0 %v2730
  %v2732 = vand.u32 %v60, 4294901760
  %v2733 = vsub.f32 %v60, %v2732
  %2734 = vmatpush.msra.mxu0 %v2733
  %v2735 = vand.u32 %v2454, 4294901760
  %v2736 = vsub.f32 %v2454, %v2735
  %2737 = vmatmul.f32.gmra.mxu0 %v2736
  %v2738 = vpop.f32.mrf.mxu0
  %v2739 = vadd.f32 %v2709, %v2738
  %2740 = vdwg.mxu0
  %2741 = vmatpush.msra.mxu0 0.0
  %2742 = vmatpush.msra.mxu0 0.0
  %2743 = vmatpush.msra.mxu0 0.0
  %2744 = vmatpush.msra.mxu0 0.0
  %2745 = vmatpush.msra.mxu0 0.0
  %2746 = vmatpush.msra.mxu0 0.0
  %2747 = vmatpush.msra.mxu0 0.0
  %2748 = vmatpush.msra.mxu0 0.0
  %2749 = vmatpush.msra.mxu0 0.0
  %2750 = vmatpush.msra.mxu0 0.0
  %2751 = vmatpush.msra.mxu0 0.0
  %2752 = vmatpush.msra.mxu0 0.0
  %v2753 = vand.u32 %v66, 4294901760
  %2754 = vmatpush.msra.mxu0 %v2753
  %v2755 = vand.u32 %v64, 4294901760
  %2756 = vmatpush.msra.mxu0 %v2755
  %v2757 = vand.u32 %v62, 4294901760
  %2758 = vmatpush.msra.mxu0 %v2757
  %v2759 = vand.u32 %v60, 4294901760
  %2760 = vmatpush.msra.mxu0 %v2759
  %v2761 = vand.u32 %v2454, 4294901760
  %v2762 = vsub.f32 %v2454, %v2761
  %v2763 = vand.u32 %v2762, 4294901760
  %2764 = vmatmul.f32.gmra.mxu0 %v2763
  %v2765 = vpop.f32.mrf.mxu0
  %v2766 = vadd.f32 %v2739, %v2765
  %2767 = vdwg.mxu0
  %2768 = vmatpush.msra.mxu0 0.0
  %2769 = vmatpush.msra.mxu0 0.0
  %2770 = vmatpush.msra.mxu0 0.0
  %2771 = vmatpush.msra.mxu0 0.0
  %2772 = vmatpush.msra.mxu0 0.0
  %2773 = vmatpush.msra.mxu0 0.0
  %2774 = vmatpush.msra.mxu0 0.0
  %2775 = vmatpush.msra.mxu0 0.0
  %2776 = vmatpush.msra.mxu0 0.0
  %2777 = vmatpush.msra.mxu0 0.0
  %2778 = vmatpush.msra.mxu0 0.0
  %2779 = vmatpush.msra.mxu0 0.0
  %v2780 = vand.u32 %v66, 4294901760
  %v2781 = vsub.f32 %v66, %v2780
  %v2782 = vand.u32 %v2781, 4294901760
  %2783 = vmatpush.msra.mxu0 %v2782
  %v2784 = vand.u32 %v64, 4294901760
  %v2785 = vsub.f32 %v64, %v2784
  %v2786 = vand.u32 %v2785, 4294901760
  %2787 = vmatpush.msra.mxu0 %v2786
  %v2788 = vand.u32 %v62, 4294901760
  %v2789 = vsub.f32 %v62, %v2788
  %v2790 = vand.u32 %v2789, 4294901760
  %2791 = vmatpush.msra.mxu0 %v2790
  %v2792 = vand.u32 %v60, 4294901760
  %v2793 = vsub.f32 %v60, %v2792
  %v2794 = vand.u32 %v2793, 4294901760
  %2795 = vmatpush.msra.mxu0 %v2794
  %v2796 = vand.u32 %v2454, 4294901760
  %2797 = vmatmul.f32.gmra.mxu0 %v2796
  %v2798 = vpop.f32.mrf.mxu0
  %v2799 = vadd.f32 %v2766, %v2798
  %2800 = vdwg.mxu0
  %2801 = vmatpush.msra.mxu0 0.0
  %2802 = vmatpush.msra.mxu0 0.0
  %2803 = vmatpush.msra.mxu0 0.0
  %2804 = vmatpush.msra.mxu0 0.0
  %2805 = vmatpush.msra.mxu0 0.0
  %2806 = vmatpush.msra.mxu0 0.0
  %2807 = vmatpush.msra.mxu0 0.0
  %2808 = vmatpush.msra.mxu0 0.0
  %2809 = vmatpush.msra.mxu0 0.0
  %2810 = vmatpush.msra.mxu0 0.0
  %2811 = vmatpush.msra.mxu0 0.0
  %2812 = vmatpush.msra.mxu0 0.0
  %v2813 = vand.u32 %v66, 4294901760
  %2814 = vmatpush.msra.mxu0 %v2813
  %v2815 = vand.u32 %v64, 4294901760
  %2816 = vmatpush.msra.mxu0 %v2815
  %v2817 = vand.u32 %v62, 4294901760
  %2818 = vmatpush.msra.mxu0 %v2817
  %v2819 = vand.u32 %v60, 4294901760
  %2820 = vmatpush.msra.mxu0 %v2819
  %v2821 = vand.u32 %v2454, 4294901760
  %2822 = vmatmul.f32.gmra.mxu0 %v2821
  %v2823 = vpop.f32.mrf.mxu0
  %v2824 = vadd.f32 %v2799, %v2823
  %2825 = vdwg.mxu0
  %v2826 = vsub.f32 %v2026, %v755
  %v2827 = vmul.f32 %v2826, %v2452
  %v2829 = vsel %vm756, %v2827, 0
  %2831 = vmatpush.msra.mxu0 0.0
  %2832 = vmatpush.msra.mxu0 0.0
  %2833 = vmatpush.msra.mxu0 0.0
  %2834 = vmatpush.msra.mxu0 0.0
  %2835 = vmatpush.msra.mxu0 0.0
  %2836 = vmatpush.msra.mxu0 0.0
  %2837 = vmatpush.msra.mxu0 0.0
  %2838 = vmatpush.msra.mxu0 0.0
  %2839 = vmatpush.msra.mxu0 0.0
  %2840 = vmatpush.msra.mxu0 0.0
  %2841 = vmatpush.msra.mxu0 0.0
  %2842 = vmatpush.msra.mxu0 0.0
  %v2843 = vand.u32 %v65, 4294901760
  %2844 = vmatpush.msra.mxu0 %v2843
  %v2845 = vand.u32 %v63, 4294901760
  %2846 = vmatpush.msra.mxu0 %v2845
  %v2847 = vand.u32 %v61, 4294901760
  %2848 = vmatpush.msra.mxu0 %v2847
  %v2849 = vand.u32 %v59, 4294901760
  %2850 = vmatpush.msra.mxu0 %v2849
  %v2851 = vand.u32 %v2829, 4294901760
  %v2852 = vsub.f32 %v2829, %v2851
  %v2853 = vand.u32 %v2852, 4294901760
  %v2854 = vsub.f32 %v2852, %v2853
  %v2855 = vand.u32 %v2854, 4294901760
  %2856 = vmatmul.f32.gmra.mxu0 %v2855
  %v2857 = vpop.f32.mrf.mxu0
  %v2858 = vadd.f32 0.0, %v2857
  %2859 = vdwg.mxu0
  %2860 = vmatpush.msra.mxu0 0.0
  %2861 = vmatpush.msra.mxu0 0.0
  %2862 = vmatpush.msra.mxu0 0.0
  %2863 = vmatpush.msra.mxu0 0.0
  %2864 = vmatpush.msra.mxu0 0.0
  %2865 = vmatpush.msra.mxu0 0.0
  %2866 = vmatpush.msra.mxu0 0.0
  %2867 = vmatpush.msra.mxu0 0.0
  %2868 = vmatpush.msra.mxu0 0.0
  %2869 = vmatpush.msra.mxu0 0.0
  %2870 = vmatpush.msra.mxu0 0.0
  %2871 = vmatpush.msra.mxu0 0.0
  %v2872 = vand.u32 %v65, 4294901760
  %v2873 = vsub.f32 %v65, %v2872
  %v2874 = vand.u32 %v2873, 4294901760
  %v2875 = vsub.f32 %v2873, %v2874
  %v2876 = vand.u32 %v2875, 4294901760
  %2877 = vmatpush.msra.mxu0 %v2876
  %v2878 = vand.u32 %v63, 4294901760
  %v2879 = vsub.f32 %v63, %v2878
  %v2880 = vand.u32 %v2879, 4294901760
  %v2881 = vsub.f32 %v2879, %v2880
  %v2882 = vand.u32 %v2881, 4294901760
  %2883 = vmatpush.msra.mxu0 %v2882
  %v2884 = vand.u32 %v61, 4294901760
  %v2885 = vsub.f32 %v61, %v2884
  %v2886 = vand.u32 %v2885, 4294901760
  %v2887 = vsub.f32 %v2885, %v2886
  %v2888 = vand.u32 %v2887, 4294901760
  %2889 = vmatpush.msra.mxu0 %v2888
  %v2890 = vand.u32 %v59, 4294901760
  %v2891 = vsub.f32 %v59, %v2890
  %v2892 = vand.u32 %v2891, 4294901760
  %v2893 = vsub.f32 %v2891, %v2892
  %v2894 = vand.u32 %v2893, 4294901760
  %2895 = vmatpush.msra.mxu0 %v2894
  %v2896 = vand.u32 %v2829, 4294901760
  %2897 = vmatmul.f32.gmra.mxu0 %v2896
  %v2898 = vpop.f32.mrf.mxu0
  %v2899 = vadd.f32 %v2858, %v2898
  %2900 = vdwg.mxu0
  %2901 = vmatpush.msra.mxu0 0.0
  %2902 = vmatpush.msra.mxu0 0.0
  %2903 = vmatpush.msra.mxu0 0.0
  %2904 = vmatpush.msra.mxu0 0.0
  %2905 = vmatpush.msra.mxu0 0.0
  %2906 = vmatpush.msra.mxu0 0.0
  %2907 = vmatpush.msra.mxu0 0.0
  %2908 = vmatpush.msra.mxu0 0.0
  %2909 = vmatpush.msra.mxu0 0.0
  %2910 = vmatpush.msra.mxu0 0.0
  %2911 = vmatpush.msra.mxu0 0.0
  %2912 = vmatpush.msra.mxu0 0.0
  %v2913 = vand.u32 %v65, 4294901760
  %v2914 = vsub.f32 %v65, %v2913
  %2915 = vmatpush.msra.mxu0 %v2914
  %v2916 = vand.u32 %v63, 4294901760
  %v2917 = vsub.f32 %v63, %v2916
  %2918 = vmatpush.msra.mxu0 %v2917
  %v2919 = vand.u32 %v61, 4294901760
  %v2920 = vsub.f32 %v61, %v2919
  %2921 = vmatpush.msra.mxu0 %v2920
  %v2922 = vand.u32 %v59, 4294901760
  %v2923 = vsub.f32 %v59, %v2922
  %2924 = vmatpush.msra.mxu0 %v2923
  %v2925 = vand.u32 %v2829, 4294901760
  %v2926 = vsub.f32 %v2829, %v2925
  %2927 = vmatmul.f32.gmra.mxu0 %v2926
  %v2928 = vpop.f32.mrf.mxu0
  %v2929 = vadd.f32 %v2899, %v2928
  %2930 = vdwg.mxu0
  %2931 = vmatpush.msra.mxu0 0.0
  %2932 = vmatpush.msra.mxu0 0.0
  %2933 = vmatpush.msra.mxu0 0.0
  %2934 = vmatpush.msra.mxu0 0.0
  %2935 = vmatpush.msra.mxu0 0.0
  %2936 = vmatpush.msra.mxu0 0.0
  %2937 = vmatpush.msra.mxu0 0.0
  %2938 = vmatpush.msra.mxu0 0.0
  %2939 = vmatpush.msra.mxu0 0.0
  %2940 = vmatpush.msra.mxu0 0.0
  %2941 = vmatpush.msra.mxu0 0.0
  %2942 = vmatpush.msra.mxu0 0.0
  %v2943 = vand.u32 %v65, 4294901760
  %2944 = vmatpush.msra.mxu0 %v2943
  %v2945 = vand.u32 %v63, 4294901760
  %2946 = vmatpush.msra.mxu0 %v2945
  %v2947 = vand.u32 %v61, 4294901760
  %2948 = vmatpush.msra.mxu0 %v2947
  %v2949 = vand.u32 %v59, 4294901760
  %2950 = vmatpush.msra.mxu0 %v2949
  %v2951 = vand.u32 %v2829, 4294901760
  %v2952 = vsub.f32 %v2829, %v2951
  %v2953 = vand.u32 %v2952, 4294901760
  %2954 = vmatmul.f32.gmra.mxu0 %v2953
  %v2955 = vpop.f32.mrf.mxu0
  %v2956 = vadd.f32 %v2929, %v2955
  %2957 = vdwg.mxu0
  %2958 = vmatpush.msra.mxu0 0.0
  %2959 = vmatpush.msra.mxu0 0.0
  %2960 = vmatpush.msra.mxu0 0.0
  %2961 = vmatpush.msra.mxu0 0.0
  %2962 = vmatpush.msra.mxu0 0.0
  %2963 = vmatpush.msra.mxu0 0.0
  %2964 = vmatpush.msra.mxu0 0.0
  %2965 = vmatpush.msra.mxu0 0.0
  %2966 = vmatpush.msra.mxu0 0.0
  %2967 = vmatpush.msra.mxu0 0.0
  %2968 = vmatpush.msra.mxu0 0.0
  %2969 = vmatpush.msra.mxu0 0.0
  %v2970 = vand.u32 %v65, 4294901760
  %v2971 = vsub.f32 %v65, %v2970
  %v2972 = vand.u32 %v2971, 4294901760
  %2973 = vmatpush.msra.mxu0 %v2972
  %v2974 = vand.u32 %v63, 4294901760
  %v2975 = vsub.f32 %v63, %v2974
  %v2976 = vand.u32 %v2975, 4294901760
  %2977 = vmatpush.msra.mxu0 %v2976
  %v2978 = vand.u32 %v61, 4294901760
  %v2979 = vsub.f32 %v61, %v2978
  %v2980 = vand.u32 %v2979, 4294901760
  %2981 = vmatpush.msra.mxu0 %v2980
  %v2982 = vand.u32 %v59, 4294901760
  %v2983 = vsub.f32 %v59, %v2982
  %v2984 = vand.u32 %v2983, 4294901760
  %2985 = vmatpush.msra.mxu0 %v2984
  %v2986 = vand.u32 %v2829, 4294901760
  %2987 = vmatmul.f32.gmra.mxu0 %v2986
  %v2988 = vpop.f32.mrf.mxu0
  %v2989 = vadd.f32 %v2956, %v2988
  %2990 = vdwg.mxu0
  %2991 = vmatpush.msra.mxu0 0.0
  %2992 = vmatpush.msra.mxu0 0.0
  %2993 = vmatpush.msra.mxu0 0.0
  %2994 = vmatpush.msra.mxu0 0.0
  %2995 = vmatpush.msra.mxu0 0.0
  %2996 = vmatpush.msra.mxu0 0.0
  %2997 = vmatpush.msra.mxu0 0.0
  %2998 = vmatpush.msra.mxu0 0.0
  %2999 = vmatpush.msra.mxu0 0.0
  %3000 = vmatpush.msra.mxu0 0.0
  %3001 = vmatpush.msra.mxu0 0.0
  %3002 = vmatpush.msra.mxu0 0.0
  %v3003 = vand.u32 %v65, 4294901760
  %3004 = vmatpush.msra.mxu0 %v3003
  %v3005 = vand.u32 %v63, 4294901760
  %3006 = vmatpush.msra.mxu0 %v3005
  %v3007 = vand.u32 %v61, 4294901760
  %3008 = vmatpush.msra.mxu0 %v3007
  %v3009 = vand.u32 %v59, 4294901760
  %3010 = vmatpush.msra.mxu0 %v3009
  %v3011 = vand.u32 %v2829, 4294901760
  %3012 = vmatmul.f32.gmra.mxu0 %v3011
  %v3013 = vpop.f32.mrf.mxu0
  %v3014 = vadd.f32 %v2989, %v3013
  %3015 = vdwg.mxu0
  %3016 = vmatpush.msra.mxu0 0.0
  %3017 = vmatpush.msra.mxu0 0.0
  %3018 = vmatpush.msra.mxu0 0.0
  %3019 = vmatpush.msra.mxu0 0.0
  %3020 = vmatpush.msra.mxu0 0.0
  %3021 = vmatpush.msra.mxu0 0.0
  %3022 = vmatpush.msra.mxu0 0.0
  %3023 = vmatpush.msra.mxu0 0.0
  %3024 = vmatpush.msra.mxu0 0.0
  %3025 = vmatpush.msra.mxu0 0.0
  %3026 = vmatpush.msra.mxu0 0.0
  %3027 = vmatpush.msra.mxu0 0.0
  %v3028 = vand.u32 %v66, 4294901760
  %3029 = vmatpush.msra.mxu0 %v3028
  %v3030 = vand.u32 %v64, 4294901760
  %3031 = vmatpush.msra.mxu0 %v3030
  %v3032 = vand.u32 %v62, 4294901760
  %3033 = vmatpush.msra.mxu0 %v3032
  %v3034 = vand.u32 %v60, 4294901760
  %3035 = vmatpush.msra.mxu0 %v3034
  %v3036 = vand.u32 %v2829, 4294901760
  %v3037 = vsub.f32 %v2829, %v3036
  %v3038 = vand.u32 %v3037, 4294901760
  %v3039 = vsub.f32 %v3037, %v3038
  %v3040 = vand.u32 %v3039, 4294901760
  %3041 = vmatmul.f32.gmra.mxu0 %v3040
  %v3042 = vpop.f32.mrf.mxu0
  %v3043 = vadd.f32 0.0, %v3042
  %3044 = vdwg.mxu0
  %3045 = vmatpush.msra.mxu0 0.0
  %3046 = vmatpush.msra.mxu0 0.0
  %3047 = vmatpush.msra.mxu0 0.0
  %3048 = vmatpush.msra.mxu0 0.0
  %3049 = vmatpush.msra.mxu0 0.0
  %3050 = vmatpush.msra.mxu0 0.0
  %3051 = vmatpush.msra.mxu0 0.0
  %3052 = vmatpush.msra.mxu0 0.0
  %3053 = vmatpush.msra.mxu0 0.0
  %3054 = vmatpush.msra.mxu0 0.0
  %3055 = vmatpush.msra.mxu0 0.0
  %3056 = vmatpush.msra.mxu0 0.0
  %v3057 = vand.u32 %v66, 4294901760
  %v3058 = vsub.f32 %v66, %v3057
  %v3059 = vand.u32 %v3058, 4294901760
  %v3060 = vsub.f32 %v3058, %v3059
  %v3061 = vand.u32 %v3060, 4294901760
  %3062 = vmatpush.msra.mxu0 %v3061
  %v3063 = vand.u32 %v64, 4294901760
  %v3064 = vsub.f32 %v64, %v3063
  %v3065 = vand.u32 %v3064, 4294901760
  %v3066 = vsub.f32 %v3064, %v3065
  %v3067 = vand.u32 %v3066, 4294901760
  %3068 = vmatpush.msra.mxu0 %v3067
  %v3069 = vand.u32 %v62, 4294901760
  %v3070 = vsub.f32 %v62, %v3069
  %v3071 = vand.u32 %v3070, 4294901760
  %v3072 = vsub.f32 %v3070, %v3071
  %v3073 = vand.u32 %v3072, 4294901760
  %3074 = vmatpush.msra.mxu0 %v3073
  %v3075 = vand.u32 %v60, 4294901760
  %v3076 = vsub.f32 %v60, %v3075
  %v3077 = vand.u32 %v3076, 4294901760
  %v3078 = vsub.f32 %v3076, %v3077
  %v3079 = vand.u32 %v3078, 4294901760
  %3080 = vmatpush.msra.mxu0 %v3079
  %v3081 = vand.u32 %v2829, 4294901760
  %3082 = vmatmul.f32.gmra.mxu0 %v3081
  %v3083 = vpop.f32.mrf.mxu0
  %v3084 = vadd.f32 %v3043, %v3083
  %3085 = vdwg.mxu0
  %3086 = vmatpush.msra.mxu0 0.0
  %3087 = vmatpush.msra.mxu0 0.0
  %3088 = vmatpush.msra.mxu0 0.0
  %3089 = vmatpush.msra.mxu0 0.0
  %3090 = vmatpush.msra.mxu0 0.0
  %3091 = vmatpush.msra.mxu0 0.0
  %3092 = vmatpush.msra.mxu0 0.0
  %3093 = vmatpush.msra.mxu0 0.0
  %3094 = vmatpush.msra.mxu0 0.0
  %3095 = vmatpush.msra.mxu0 0.0
  %3096 = vmatpush.msra.mxu0 0.0
  %3097 = vmatpush.msra.mxu0 0.0
  %v3098 = vand.u32 %v66, 4294901760
  %v3099 = vsub.f32 %v66, %v3098
  %3100 = vmatpush.msra.mxu0 %v3099
  %v3101 = vand.u32 %v64, 4294901760
  %v3102 = vsub.f32 %v64, %v3101
  %3103 = vmatpush.msra.mxu0 %v3102
  %v3104 = vand.u32 %v62, 4294901760
  %v3105 = vsub.f32 %v62, %v3104
  %3106 = vmatpush.msra.mxu0 %v3105
  %v3107 = vand.u32 %v60, 4294901760
  %v3108 = vsub.f32 %v60, %v3107
  %3109 = vmatpush.msra.mxu0 %v3108
  %v3110 = vand.u32 %v2829, 4294901760
  %v3111 = vsub.f32 %v2829, %v3110
  %3112 = vmatmul.f32.gmra.mxu0 %v3111
  %v3113 = vpop.f32.mrf.mxu0
  %v3114 = vadd.f32 %v3084, %v3113
  %3115 = vdwg.mxu0
  %3116 = vmatpush.msra.mxu0 0.0
  %3117 = vmatpush.msra.mxu0 0.0
  %3118 = vmatpush.msra.mxu0 0.0
  %3119 = vmatpush.msra.mxu0 0.0
  %3120 = vmatpush.msra.mxu0 0.0
  %3121 = vmatpush.msra.mxu0 0.0
  %3122 = vmatpush.msra.mxu0 0.0
  %3123 = vmatpush.msra.mxu0 0.0
  %3124 = vmatpush.msra.mxu0 0.0
  %3125 = vmatpush.msra.mxu0 0.0
  %3126 = vmatpush.msra.mxu0 0.0
  %3127 = vmatpush.msra.mxu0 0.0
  %v3128 = vand.u32 %v66, 4294901760
  %3129 = vmatpush.msra.mxu0 %v3128
  %v3130 = vand.u32 %v64, 4294901760
  %3131 = vmatpush.msra.mxu0 %v3130
  %v3132 = vand.u32 %v62, 4294901760
  %3133 = vmatpush.msra.mxu0 %v3132
  %v3134 = vand.u32 %v60, 4294901760
  %3135 = vmatpush.msra.mxu0 %v3134
  %v3136 = vand.u32 %v2829, 4294901760
  %v3137 = vsub.f32 %v2829, %v3136
  %v3138 = vand.u32 %v3137, 4294901760
  %3139 = vmatmul.f32.gmra.mxu0 %v3138
  %v3140 = vpop.f32.mrf.mxu0
  %v3141 = vadd.f32 %v3114, %v3140
  %3142 = vdwg.mxu0
  %3143 = vmatpush.msra.mxu0 0.0
  %3144 = vmatpush.msra.mxu0 0.0
  %3145 = vmatpush.msra.mxu0 0.0
  %3146 = vmatpush.msra.mxu0 0.0
  %3147 = vmatpush.msra.mxu0 0.0
  %3148 = vmatpush.msra.mxu0 0.0
  %3149 = vmatpush.msra.mxu0 0.0
  %3150 = vmatpush.msra.mxu0 0.0
  %3151 = vmatpush.msra.mxu0 0.0
  %3152 = vmatpush.msra.mxu0 0.0
  %3153 = vmatpush.msra.mxu0 0.0
  %3154 = vmatpush.msra.mxu0 0.0
  %v3155 = vand.u32 %v66, 4294901760
  %v3156 = vsub.f32 %v66, %v3155
  %v3157 = vand.u32 %v3156, 4294901760
  %3158 = vmatpush.msra.mxu0 %v3157
  %v3159 = vand.u32 %v64, 4294901760
  %v3160 = vsub.f32 %v64, %v3159
  %v3161 = vand.u32 %v3160, 4294901760
  %3162 = vmatpush.msra.mxu0 %v3161
  %v3163 = vand.u32 %v62, 4294901760
  %v3164 = vsub.f32 %v62, %v3163
  %v3165 = vand.u32 %v3164, 4294901760
  %3166 = vmatpush.msra.mxu0 %v3165
  %v3167 = vand.u32 %v60, 4294901760
  %v3168 = vsub.f32 %v60, %v3167
  %v3169 = vand.u32 %v3168, 4294901760
  %3170 = vmatpush.msra.mxu0 %v3169
  %v3171 = vand.u32 %v2829, 4294901760
  %3172 = vmatmul.f32.gmra.mxu0 %v3171
  %v3173 = vpop.f32.mrf.mxu0
  %v3174 = vadd.f32 %v3141, %v3173
  %3175 = vdwg.mxu0
  %3176 = vmatpush.msra.mxu0 0.0
  %3177 = vmatpush.msra.mxu0 0.0
  %3178 = vmatpush.msra.mxu0 0.0
  %3179 = vmatpush.msra.mxu0 0.0
  %3180 = vmatpush.msra.mxu0 0.0
  %3181 = vmatpush.msra.mxu0 0.0
  %3182 = vmatpush.msra.mxu0 0.0
  %3183 = vmatpush.msra.mxu0 0.0
  %3184 = vmatpush.msra.mxu0 0.0
  %3185 = vmatpush.msra.mxu0 0.0
  %3186 = vmatpush.msra.mxu0 0.0
  %3187 = vmatpush.msra.mxu0 0.0
  %v3188 = vand.u32 %v66, 4294901760
  %3189 = vmatpush.msra.mxu0 %v3188
  %v3190 = vand.u32 %v64, 4294901760
  %3191 = vmatpush.msra.mxu0 %v3190
  %v3192 = vand.u32 %v62, 4294901760
  %3193 = vmatpush.msra.mxu0 %v3192
  %v3194 = vand.u32 %v60, 4294901760
  %3195 = vmatpush.msra.mxu0 %v3194
  %v3196 = vand.u32 %v2829, 4294901760
  %3197 = vmatmul.f32.gmra.mxu0 %v3196
  %v3198 = vpop.f32.mrf.mxu0
  %v3199 = vadd.f32 %v3174, %v3198
  %3200 = vdwg.mxu0
  %v3203 = vrot.slane %v2824, 6
  %v3204 = vsel %vm1133, %v2639, %v3203
  %v3206 = vmul.f32 %v1136, %v3204
  %v3209 = vrot.slane %v3199, 6
  %v3210 = vsel %vm1133, %v3014, %v3209
  %v3212 = vsub.f32 %v3206, %v3210
  %3213 = vst [vmem:[%s7] sm:$0xf] %v3212
  // Predicated region
  $region30: #{dain_full.1} parent=0 // pred_check
    _
  $region31: #{dain_full.1} parent=0 // pred_check_branch
    %3215 = sbr.rel (0) target = $region33
  $region32: #{dain_full.1} parent=0 // pred_region
    _
  $region33: #{dain_full.1} parent=0 // pred_fallthru
    _
  // Predicated region
  $region34: #{dain_full.1} parent=0 // pred_check
    _
  $region35: #{dain_full.1} parent=0 // pred_check_branch
    %3217 = sbr.rel (0) target = $region37
  $region36: #{dain_full.1} parent=0 // pred_region
    _
  $region37: #{dain_full.1} parent=0 // pred_fallthru
    _

</llo_original>
